<compile_context>
chip_gen: v7x
topology: tpu7x:2x2x1
jax: 0.10.0
libtpu: 0.0.40
codegen_flags: <defaults>
</compile_context>

<pallas_src>
import math
import functools

import jax
import jax.numpy as jnp
from jax.experimental import pallas as pl
from jax.experimental.pallas import tpu as pltpu

NEG_INF = -1e30  # finite stand-in for float('-inf') in the causal mask (same softmax result)

# Version-robust aliases (reference API names, with fallback for older releases).
_MEMSPACE = getattr(pltpu, "MemorySpace", None) or getattr(pltpu, "TPUMemorySpace", None)
_VMEM_SPACE = _MEMSPACE.VMEM
_CompilerParams = getattr(pltpu, "CompilerParams", None) or getattr(pltpu, "TPUCompilerParams", None)


def _layernorm(y, g, b, eps=1e-5):
    mu = jnp.mean(y, axis=-1, keepdims=True)
    var = jnp.mean((y - mu) ** 2, axis=-1, keepdims=True)
    return (y - mu) * jax.lax.rsqrt(var + eps) * g + b


# ----------------------------------------------------------------------------
# Fused kernel: input prep + all encoder layers + merged output head.
# One grid step processes one batch element (grid=(B,), "parallel" -> v7x megacore).
# ----------------------------------------------------------------------------
def fused_kernel(pooled_ref, act_ref, bias_ref,
                 proj_w_ref, act_w_ref,
                 wq_ref, bq_ref, wk_ref, bk_ref, wv_ref, bv_ref,
                 wo_ref, bo_ref, w1_ref, b1_ref, w2_ref, b2_ref,
                 g1_ref, be1_ref, g2_ref, be2_ref,
                 head_w_ref, head_b_ref,
                 out_ref, *, num_heads):
    _, S, Dv = pooled_ref.shape
    A = act_ref.shape[-1]
    E = proj_w_ref.shape[1]
    L = wq_ref.shape[0]
    H = num_heads
    dh = E // H
    scale = 1.0 / math.sqrt(dh)
    bf16 = jnp.bfloat16
    f32 = jnp.float32

    # ---- input prep: pooled-state projection + action embedding + (pe + biases) ----
    # (pool-then-project is exact: affine map commutes with the mean over grid tokens)
    pooled = pooled_ref[...].reshape(S, Dv).astype(bf16)
    act = act_ref[...].reshape(S, A).astype(bf16)
    x = (jnp.dot(pooled, proj_w_ref[...], preferred_element_type=f32)
         + jnp.dot(act, act_w_ref[...], preferred_element_type=f32)
         + bias_ref[...])                                      # [S, E] f32 residual stream

    # ---- causal mask built in-kernel (no [S,S] input DMA), kept in f32 ----
    row = jax.lax.broadcasted_iota(jnp.int32, (S, S), 0)
    col = jax.lax.broadcasted_iota(jnp.int32, (S, S), 1)
    mask = jnp.where(col <= row, 0.0, NEG_INF).astype(f32)[None, :, :]   # [1, S, S]

    # ---- encoder layers (post-norm, ReLU FF); statically unrolled (small L) ----
    for l in range(L):
        xb = x.astype(bf16)
        # dense per-layer projections; head split is just a reshape of the output
        q = (jnp.dot(xb, wq_ref[l], preferred_element_type=f32) + bq_ref[l]).reshape(S, H, dh)
        k = (jnp.dot(xb, wk_ref[l], preferred_element_type=f32) + bk_ref[l]).reshape(S, H, dh)
        v = (jnp.dot(xb, wv_ref[l], preferred_element_type=f32) + bv_ref[l]).reshape(S, H, dh)
        qh = jnp.swapaxes(q, 0, 1).astype(bf16)                # [H, S, dh]
        kh = jnp.swapaxes(k, 0, 1).astype(bf16)
        vh = jnp.swapaxes(v, 0, 1).astype(bf16)

        s = jnp.einsum('hqd,hkd->hqk', qh, kh,
                       preferred_element_type=f32) * scale + mask       # f32 scores
        s = s - jnp.max(s, axis=-1, keepdims=True)
        p = jnp.exp(s)
        p = p * pl.reciprocal(jnp.sum(p, axis=-1, keepdims=True), approx=True)
        o = jnp.einsum('hqk,hkd->hqd', p.astype(bf16), vh,
                       preferred_element_type=f32)
        o = jnp.swapaxes(o, 0, 1).reshape(S, E)                # head merge: reshape only
        attn = jnp.dot(o.astype(bf16), wo_ref[l], preferred_element_type=f32) + bo_ref[l]

        x1 = _layernorm(x + attn, g1_ref[l], be1_ref[l])       # norm1(x + sa(x))
        h1 = jnp.maximum(
            jnp.dot(x1.astype(bf16), w1_ref[l], preferred_element_type=f32) + b1_ref[l], 0.0)
        ff = jnp.dot(h1.astype(bf16), w2_ref[l], preferred_element_type=f32) + b2_ref[l]
        x = _layernorm(x1 + ff, g2_ref[l], be2_ref[l])         # norm2(x1 + ff(x1))

    # ---- merged output head: [latent logits | reward | done | zero pad], lane-dense store ----
    out_ref[...] = (jnp.dot(x.astype(bf16), head_w_ref[...], preferred_element_type=f32)
                    + head_b_ref[...])


# ----------------------------------------------------------------------------
# pallas_call wrapper
# ----------------------------------------------------------------------------
def run_world_model(pooled, action, prep_bias, params, *, num_heads):
    B, S, Dv = pooled.shape
    A = action.shape[-1]
    HEAD_OUT = params['head_w'].shape[1]
    lay = params['layers']

    args = (pooled, action, prep_bias,
            params['proj_w'], params['act_w'],
            lay['wq'], lay['bq'], lay['wk'], lay['bk'], lay['wv'], lay['bv'],
            lay['wo'], lay['bo'], lay['w1'], lay['b1'], lay['w2'], lay['b2'],
            lay['ln1_g'], lay['ln1_b'], lay['ln2_g'], lay['ln2_b'],
            params['head_w'], params['head_b'])

    # grid-invariant operands: whole-array VMEM residents, no double-buffering
    resident = pl.BlockSpec(memory_space=_VMEM_SPACE)
    in_specs = ([pl.BlockSpec((1, S, Dv), lambda b: (b, 0, 0)),   # pooled state, per batch elem
                 pl.BlockSpec((1, S, A), lambda b: (b, 0, 0))]    # action, per batch elem
                + [resident] * (len(args) - 2))

    kernel = functools.partial(fused_kernel, num_heads=num_heads)

    return pl.pallas_call(
        kernel,
        grid=(B,),
        in_specs=in_specs,
        out_specs=pl.BlockSpec((S, HEAD_OUT), lambda b: (b, 0)),
        out_shape=jax.ShapeDtypeStruct((B * S, HEAD_OUT), jnp.float32),
        compiler_params=_CompilerParams(
            dimension_semantics=("parallel",),
            vmem_limit_bytes=32 * 1024 * 1024),
    )(*args)


# ----------------------------------------------------------------------------
# Parameters & positional encoding
# ----------------------------------------------------------------------------
def positional_encoding(d_model, max_len):
    position = jnp.arange(max_len, dtype=jnp.float32)[:, None]
    div_term = jnp.exp(jnp.arange(0, d_model, 2, dtype=jnp.float32)
                       * (-math.log(10000.0) / d_model))
    pe = jnp.zeros((max_len, d_model), jnp.float32)
    pe = pe.at[:, 0::2].set(jnp.sin(position * div_term))
    pe = pe.at[:, 1::2].set(jnp.cos(position * div_term))
    return pe


def init_params(key, *, codebook_size, vqvae_embed_dim, embed_dim, action_dim,
                num_heads, num_layers, ff_dim, num_tokens, max_seq_len):
    # All weights stored [in_features, out_features] (y = x @ W + b, MXU-friendly).
    # Matmul weights kept in bf16 (MXU-native); biases / LayerNorm params / pe in f32.
    # NOTE: assumes vqvae_embed_dim != embed_dim (the Identity projection case of the torch
    # module can be realized with proj_w = I, proj_b = 0).
    del num_heads  # head split lives only in the kernel reshape, not the weight layout
    E, FF, L = embed_dim, ff_dim, num_layers
    TC = num_tokens * codebook_size
    HEAD_OUT = ((TC + 2 + 127) // 128) * 128        # lane-dense merged head width
    bf16 = jnp.bfloat16

    def nrm(k, shape, scale=0.02):
        return (scale * jax.random.normal(k, shape)).astype(jnp.float32)

    ks = iter(jax.random.split(key, 32))

    # merged output head: cols [0:TC] = latent logits, TC = reward, TC+1 = done, rest zero pad
    latent_w = nrm(next(ks), (E, TC))
    latent_b = nrm(next(ks), (1, TC))
    rd_w = nrm(next(ks), (E, 2))
    rd_b = nrm(next(ks), (1, 2))
    head_w = jnp.zeros((E, HEAD_OUT), jnp.float32)
    head_w = head_w.at[:, :TC].set(latent_w).at[:, TC:TC + 2].set(rd_w)
    head_b = jnp.zeros((1, HEAD_OUT), jnp.float32)
    head_b = head_b.at[:, :TC].set(latent_b).at[:, TC:TC + 2].set(rd_b)

    params = {
        'token_embedding': nrm(next(ks), (codebook_size, vqvae_embed_dim)),
        'proj_w': nrm(next(ks), (vqvae_embed_dim, E)).astype(bf16),
        'proj_b': nrm(next(ks), (1, E)),
        'act_w': nrm(next(ks), (action_dim, E)).astype(bf16),
        'act_b': nrm(next(ks), (1, E)),
        'head_w': head_w.astype(bf16),
        'head_b': head_b,
        'pe': positional_encoding(E, max_seq_len),
        'layers': {
            'wq': nrm(next(ks), (L, E, E)).astype(bf16),
            'bq': nrm(next(ks), (L, 1, E)),
            'wk': nrm(next(ks), (L, E, E)).astype(bf16),
            'bk': nrm(next(ks), (L, 1, E)),
            'wv': nrm(next(ks), (L, E, E)).astype(bf16),
            'bv': nrm(next(ks), (L, 1, E)),
            'wo': nrm(next(ks), (L, E, E)).astype(bf16),
            'bo': nrm(next(ks), (L, 1, E)),
            'w1': nrm(next(ks), (L, E, FF)).astype(bf16),
            'b1': nrm(next(ks), (L, 1, FF)),
            'w2': nrm(next(ks), (L, FF, E)).astype(bf16),
            'b2': nrm(next(ks), (L, 1, E)),
            'ln1_g': jnp.ones((L, 1, E), jnp.float32),
            'ln1_b': jnp.zeros((L, 1, E), jnp.float32),
            'ln2_g': jnp.ones((L, 1, E), jnp.float32),
            'ln2_b': jnp.zeros((L, 1, E), jnp.float32),
        },
    }
    return params


# ----------------------------------------------------------------------------
# Full forward (glue: embedding gather + mean pool, output split, argmax in plain JAX)
# ----------------------------------------------------------------------------
def world_model_forward(params, action, prev_latent_tokens, *,
                        grid_size, codebook_size, num_heads):
    B, S = action.shape[0], action.shape[1]
    T = grid_size * grid_size
    TC = T * codebook_size

    tokens_flat = prev_latent_tokens.reshape(B, S, T)
    emb = jnp.take(params['token_embedding'], tokens_flat, axis=0)   # [B, S, T, Dv]
    pooled = jnp.mean(emb, axis=2)                                   # [B, S, Dv] (host pool)
    # pre-summed additive term: positional encoding + input-projection bias + action bias
    prep_bias = params['pe'][:S, :] + params['proj_b'] + params['act_b']   # [S, E]

    out = run_world_model(pooled, action, prep_bias, params, num_heads=num_heads)
    out = out.reshape(B, S, -1)                                      # [B, S, HEAD_OUT]

    logits = out[..., :TC].reshape(B, S, grid_size, grid_size, codebook_size)
    reward = out[..., TC:TC + 1]
    done = out[..., TC + 1:TC + 2]
    # glue: argmax + flatten (torch returns int64; int32 here)
    gen_tokens = jnp.argmax(logits, axis=-1).reshape(B, S, T)
    return logits, reward, done, None, gen_tokens


# ----------------------------------------------------------------------------
if __name__ == "__main__":
    # Small, module-consistent config
    B, S = 2, 8
    ACTION_DIM = 4
    VQVAE_EMBED_DIM = 16
    EMBED_DIM = 32
    NUM_HEADS = 4
    NUM_LAYERS = 2
    FF_DIM = 64
    GRID_SIZE = 4
    CODEBOOK_SIZE = 32
    MAX_SEQ_LEN = 128
    NUM_TOKENS = GRID_SIZE * GRID_SIZE

    key = jax.random.PRNGKey(0)
    kp, ka, kt = jax.random.split(key, 3)

    params = init_params(kp,
                         codebook_size=CODEBOOK_SIZE,
                         vqvae_embed_dim=VQVAE_EMBED_DIM,
                         embed_dim=EMBED_DIM,
                         action_dim=ACTION_DIM,
                         num_heads=NUM_HEADS,
                         num_layers=NUM_LAYERS,
                         ff_dim=FF_DIM,
                         num_tokens=NUM_TOKENS,
                         max_seq_len=MAX_SEQ_LEN)

    action = jax.random.normal(ka, (B, S, ACTION_DIM), dtype=jnp.float32)
    prev_latent_tokens = jax.random.randint(kt, (B, S, GRID_SIZE, GRID_SIZE),
                                            0, CODEBOOK_SIZE, dtype=jnp.int32)

    fwd = jax.jit(functools.partial(world_model_forward,
                                    grid_size=GRID_SIZE,
                                    codebook_size=CODEBOOK_SIZE,
                                    num_heads=NUM_HEADS))

    logits, reward, done, _, gen = fwd(params, action, prev_latent_tokens)
    jax.block_until_ready((logits, reward, done, gen))

    assert logits.shape == (B, S, GRID_SIZE, GRID_SIZE, CODEBOOK_SIZE)
    assert reward.shape == (B, S, 1)
    assert done.shape == (B, S, 1)
    assert gen.shape == (B, S, NUM_TOKENS)
    assert bool(jnp.all(jnp.isfinite(logits)))
    assert bool(jnp.all(jnp.isfinite(reward)))
    assert bool(jnp.all(jnp.isfinite(done)))

    print("KERNEL_OK")
</pallas_src>

<mosaic_0001>
module attributes {stable_mosaic.version = 11 : i64} {
  func.func @fused_kernel(%arg0: i32, %arg1: memref<1x8x16xf32, #tpu.memory_space<vmem>>, %arg2: memref<1x8x4xf32, #tpu.memory_space<vmem>>, %arg3: memref<8x32xf32, #tpu.memory_space<vmem>>, %arg4: memref<16x32xbf16, #tpu.memory_space<vmem>>, %arg5: memref<4x32xbf16, #tpu.memory_space<vmem>>, %arg6: memref<2x32x32xbf16, #tpu.memory_space<vmem>>, %arg7: memref<2x1x32xf32, #tpu.memory_space<vmem>>, %arg8: memref<2x32x32xbf16, #tpu.memory_space<vmem>>, %arg9: memref<2x1x32xf32, #tpu.memory_space<vmem>>, %arg10: memref<2x32x32xbf16, #tpu.memory_space<vmem>>, %arg11: memref<2x1x32xf32, #tpu.memory_space<vmem>>, %arg12: memref<2x32x32xbf16, #tpu.memory_space<vmem>>, %arg13: memref<2x1x32xf32, #tpu.memory_space<vmem>>, %arg14: memref<2x32x64xbf16, #tpu.memory_space<vmem>>, %arg15: memref<2x1x64xf32, #tpu.memory_space<vmem>>, %arg16: memref<2x64x32xbf16, #tpu.memory_space<vmem>>, %arg17: memref<2x1x32xf32, #tpu.memory_space<vmem>>, %arg18: memref<2x1x32xf32, #tpu.memory_space<vmem>>, %arg19: memref<2x1x32xf32, #tpu.memory_space<vmem>>, %arg20: memref<2x1x32xf32, #tpu.memory_space<vmem>>, %arg21: memref<2x1x32xf32, #tpu.memory_space<vmem>>, %arg22: memref<32x640xbf16, #tpu.memory_space<vmem>>, %arg23: memref<1x640xf32, #tpu.memory_space<vmem>>, %arg24: memref<8x640xf32, #tpu.memory_space<vmem>>) attributes {dimension_semantics = [#tpu.dimension_semantics<parallel>], iteration_bounds = array<i64: 2>, scalar_prefetch = 0 : i64, scratch_operands = 0 : i64, tpu.core_type = #tpu.core_type<tc>, window_params = [{transform_indices = @transform_0, window_bounds = array<i64: 1, 8, 16>}, {transform_indices = @transform_1, window_bounds = array<i64: 1, 8, 4>}, {pipeline_mode = #tpu.pipeline_mode<synchronous>, transform_indices = @transform_2, window_bounds = array<i64: 8, 32>}, {pipeline_mode = #tpu.pipeline_mode<synchronous>, transform_indices = @transform_3, window_bounds = array<i64: 16, 32>}, {pipeline_mode = #tpu.pipeline_mode<synchronous>, transform_indices = @transform_4, window_bounds = array<i64: 4, 32>}, {pipeline_mode = #tpu.pipeline_mode<synchronous>, transform_indices = @transform_5, window_bounds = array<i64: 2, 32, 32>}, {pipeline_mode = #tpu.pipeline_mode<synchronous>, transform_indices = @transform_6, window_bounds = array<i64: 2, 1, 32>}, {pipeline_mode = #tpu.pipeline_mode<synchronous>, transform_indices = @transform_7, window_bounds = array<i64: 2, 32, 32>}, {pipeline_mode = #tpu.pipeline_mode<synchronous>, transform_indices = @transform_8, window_bounds = array<i64: 2, 1, 32>}, {pipeline_mode = #tpu.pipeline_mode<synchronous>, transform_indices = @transform_9, window_bounds = array<i64: 2, 32, 32>}, {pipeline_mode = #tpu.pipeline_mode<synchronous>, transform_indices = @transform_10, window_bounds = array<i64: 2, 1, 32>}, {pipeline_mode = #tpu.pipeline_mode<synchronous>, transform_indices = @transform_11, window_bounds = array<i64: 2, 32, 32>}, {pipeline_mode = #tpu.pipeline_mode<synchronous>, transform_indices = @transform_12, window_bounds = array<i64: 2, 1, 32>}, {pipeline_mode = #tpu.pipeline_mode<synchronous>, transform_indices = @transform_13, window_bounds = array<i64: 2, 32, 64>}, {pipeline_mode = #tpu.pipeline_mode<synchronous>, transform_indices = @transform_14, window_bounds = array<i64: 2, 1, 64>}, {pipeline_mode = #tpu.pipeline_mode<synchronous>, transform_indices = @transform_15, window_bounds = array<i64: 2, 64, 32>}, {pipeline_mode = #tpu.pipeline_mode<synchronous>, transform_indices = @transform_16, window_bounds = array<i64: 2, 1, 32>}, {pipeline_mode = #tpu.pipeline_mode<synchronous>, transform_indices = @transform_17, window_bounds = array<i64: 2, 1, 32>}, {pipeline_mode = #tpu.pipeline_mode<synchronous>, transform_indices = @transform_18, window_bounds = array<i64: 2, 1, 32>}, {pipeline_mode = #tpu.pipeline_mode<synchronous>, transform_indices = @transform_19, window_bounds = array<i64: 2, 1, 32>}, {pipeline_mode = #tpu.pipeline_mode<synchronous>, transform_indices = @transform_20, window_bounds = array<i64: 2, 1, 32>}, {pipeline_mode = #tpu.pipeline_mode<synchronous>, transform_indices = @transform_21, window_bounds = array<i64: 32, 640>}, {pipeline_mode = #tpu.pipeline_mode<synchronous>, transform_indices = @transform_22, window_bounds = array<i64: 1, 640>}, {transform_indices = @transform_23, window_bounds = array<i64: 8, 640>}]} {
    %c0 = arith.constant 0 : index
    %c0_0 = arith.constant 0 : index
    %c0_1 = arith.constant 0 : index
    %0 = vector.load %arg1[%c0, %c0_0, %c0_1] : memref<1x8x16xf32, #tpu.memory_space<vmem>>, vector<1x8x16xf32>
    %1 = vector.shape_cast %0 : vector<1x8x16xf32> to vector<8x16xf32>
    %2 = arith.truncf %1 : vector<8x16xf32> to vector<8x16xbf16>
    %c0_2 = arith.constant 0 : index
    %c0_3 = arith.constant 0 : index
    %c0_4 = arith.constant 0 : index
    %3 = vector.load %arg2[%c0_2, %c0_3, %c0_4] : memref<1x8x4xf32, #tpu.memory_space<vmem>>, vector<1x8x4xf32>
    %4 = vector.shape_cast %3 : vector<1x8x4xf32> to vector<8x4xf32>
    %5 = arith.truncf %4 : vector<8x4xf32> to vector<8x4xbf16>
    %c0_5 = arith.constant 0 : index
    %c0_6 = arith.constant 0 : index
    %6 = vector.load %arg4[%c0_5, %c0_6] : memref<16x32xbf16, #tpu.memory_space<vmem>>, vector<16x32xbf16>
    %cst = arith.constant dense<0.000000e+00> : vector<8x32xf32>
    %7 = tpu.matmul %2, %6, %cst {dimension_numbers = #tpu.dot_dimension_numbers<[1], [0], [0], [1], [0, 0, 1, 1], [], []>} : vector<8x16xbf16>, vector<16x32xbf16>, vector<8x32xf32> -> vector<8x32xf32>
    %c0_7 = arith.constant 0 : index
    %c0_8 = arith.constant 0 : index
    %8 = vector.load %arg5[%c0_7, %c0_8] : memref<4x32xbf16, #tpu.memory_space<vmem>>, vector<4x32xbf16>
    %cst_9 = arith.constant dense<0.000000e+00> : vector<8x32xf32>
    %9 = tpu.matmul %5, %8, %cst_9 {dimension_numbers = #tpu.dot_dimension_numbers<[1], [0], [0], [1], [0, 0, 1, 1], [], []>} : vector<8x4xbf16>, vector<4x32xbf16>, vector<8x32xf32> -> vector<8x32xf32>
    %10 = arith.addf %7, %9 : vector<8x32xf32>
    %c0_10 = arith.constant 0 : index
    %c0_11 = arith.constant 0 : index
    %11 = vector.load %arg3[%c0_10, %c0_11] : memref<8x32xf32, #tpu.memory_space<vmem>>, vector<8x32xf32>
    %12 = arith.addf %10, %11 : vector<8x32xf32>
    %13 = tpu.iota {dimensions = array<i32: 0>} : vector<8x8xi32>
    %14 = tpu.iota {dimensions = array<i32: 1>} : vector<8x8xi32>
    %15 = arith.cmpi sle, %14, %13 : vector<8x8xi32>
    %cst_12 = arith.constant 0.000000e+00 : f32
    %cst_13 = arith.constant -1.000000e+30 : f32
    %16 = vector.broadcast %cst_12 : f32 to vector<8x8xf32>
    %17 = vector.broadcast %cst_13 : f32 to vector<8x8xf32>
    %18 = arith.select %15, %16, %17 : vector<8x8xi1>, vector<8x8xf32>
    %19 = vector.shape_cast %18 : vector<8x8xf32> to vector<1x8x8xf32>
    %20 = arith.truncf %12 : vector<8x32xf32> to vector<8x32xbf16>
    %c0_14 = arith.constant 0 : index
    %c0_15 = arith.constant 0 : index
    %c0_16 = arith.constant 0 : index
    %21 = vector.load %arg6[%c0_14, %c0_15, %c0_16] : memref<2x32x32xbf16, #tpu.memory_space<vmem>>, vector<1x32x32xbf16>
    %22 = vector.shape_cast %21 : vector<1x32x32xbf16> to vector<32x32xbf16>
    %cst_17 = arith.constant dense<0.000000e+00> : vector<8x32xf32>
    %23 = tpu.matmul %20, %22, %cst_17 {dimension_numbers = #tpu.dot_dimension_numbers<[1], [0], [0], [1], [0, 0, 1, 1], [], []>} : vector<8x32xbf16>, vector<32x32xbf16>, vector<8x32xf32> -> vector<8x32xf32>
    %c0_18 = arith.constant 0 : index
    %c0_19 = arith.constant 0 : index
    %c0_20 = arith.constant 0 : index
    %24 = vector.load %arg7[%c0_18, %c0_19, %c0_20] : memref<2x1x32xf32, #tpu.memory_space<vmem>>, vector<1x1x32xf32>
    %25 = vector.shape_cast %24 : vector<1x1x32xf32> to vector<1x32xf32>
    %26 = vector.broadcast %25 : vector<1x32xf32> to vector<8x32xf32>
    %27 = arith.addf %23, %26 : vector<8x32xf32>
    %28 = vector.shape_cast %27 : vector<8x32xf32> to vector<8x4x8xf32>
    %c0_21 = arith.constant 0 : index
    %c0_22 = arith.constant 0 : index
    %c0_23 = arith.constant 0 : index
    %29 = vector.load %arg8[%c0_21, %c0_22, %c0_23] : memref<2x32x32xbf16, #tpu.memory_space<vmem>>, vector<1x32x32xbf16>
    %30 = vector.shape_cast %29 : vector<1x32x32xbf16> to vector<32x32xbf16>
    %cst_24 = arith.constant dense<0.000000e+00> : vector<8x32xf32>
    %31 = tpu.matmul %20, %30, %cst_24 {dimension_numbers = #tpu.dot_dimension_numbers<[1], [0], [0], [1], [0, 0, 1, 1], [], []>} : vector<8x32xbf16>, vector<32x32xbf16>, vector<8x32xf32> -> vector<8x32xf32>
    %c0_25 = arith.constant 0 : index
    %c0_26 = arith.constant 0 : index
    %c0_27 = arith.constant 0 : index
    %32 = vector.load %arg9[%c0_25, %c0_26, %c0_27] : memref<2x1x32xf32, #tpu.memory_space<vmem>>, vector<1x1x32xf32>
    %33 = vector.shape_cast %32 : vector<1x1x32xf32> to vector<1x32xf32>
    %34 = vector.broadcast %33 : vector<1x32xf32> to vector<8x32xf32>
    %35 = arith.addf %31, %34 : vector<8x32xf32>
    %36 = vector.shape_cast %35 : vector<8x32xf32> to vector<8x4x8xf32>
    %c0_28 = arith.constant 0 : index
    %c0_29 = arith.constant 0 : index
    %c0_30 = arith.constant 0 : index
    %37 = vector.load %arg10[%c0_28, %c0_29, %c0_30] : memref<2x32x32xbf16, #tpu.memory_space<vmem>>, vector<1x32x32xbf16>
    %38 = vector.shape_cast %37 : vector<1x32x32xbf16> to vector<32x32xbf16>
    %cst_31 = arith.constant dense<0.000000e+00> : vector<8x32xf32>
    %39 = tpu.matmul %20, %38, %cst_31 {dimension_numbers = #tpu.dot_dimension_numbers<[1], [0], [0], [1], [0, 0, 1, 1], [], []>} : vector<8x32xbf16>, vector<32x32xbf16>, vector<8x32xf32> -> vector<8x32xf32>
    %c0_32 = arith.constant 0 : index
    %c0_33 = arith.constant 0 : index
    %c0_34 = arith.constant 0 : index
    %40 = vector.load %arg11[%c0_32, %c0_33, %c0_34] : memref<2x1x32xf32, #tpu.memory_space<vmem>>, vector<1x1x32xf32>
    %41 = vector.shape_cast %40 : vector<1x1x32xf32> to vector<1x32xf32>
    %42 = vector.broadcast %41 : vector<1x32xf32> to vector<8x32xf32>
    %43 = arith.addf %39, %42 : vector<8x32xf32>
    %44 = vector.shape_cast %43 : vector<8x32xf32> to vector<8x4x8xf32>
    %45 = tpu.transpose %28, [1, 0, 2] : vector<8x4x8xf32> -> vector<4x8x8xf32>
    %46 = arith.truncf %45 : vector<4x8x8xf32> to vector<4x8x8xbf16>
    %47 = tpu.transpose %36, [1, 0, 2] : vector<8x4x8xf32> -> vector<4x8x8xf32>
    %48 = arith.truncf %47 : vector<4x8x8xf32> to vector<4x8x8xbf16>
    %49 = tpu.transpose %44, [1, 0, 2] : vector<8x4x8xf32> -> vector<4x8x8xf32>
    %50 = arith.truncf %49 : vector<4x8x8xf32> to vector<4x8x8xbf16>
    "tpu.trace_start"() <{level = 10 : i32, message = "hqd,hkd->hqk"}> : () -> ()
    %cst_35 = arith.constant dense<0.000000e+00> : vector<4x8x8xf32>
    %51 = tpu.matmul %46, %48, %cst_35 {dimension_numbers = #tpu.dot_dimension_numbers<[2], [2], [1], [1], [0, 0, 0, 1, 1, 1], [0], [0]>} : vector<4x8x8xbf16>, vector<4x8x8xbf16>, vector<4x8x8xf32> -> vector<4x8x8xf32>
    "tpu.trace_stop"() : () -> ()
    %cst_36 = arith.constant 0.353553385 : f32
    %52 = vector.broadcast %cst_36 : f32 to vector<4x8x8xf32>
    %53 = arith.mulf %51, %52 : vector<4x8x8xf32>
    %54 = vector.broadcast %19 : vector<1x8x8xf32> to vector<4x8x8xf32>
    %55 = arith.addf %53, %54 : vector<4x8x8xf32>
    %cst_37 = arith.constant dense<0xFF800000> : vector<4x8xf32>
    %56 = vector.multi_reduction <maximumf>, %55, %cst_37 [2] : vector<4x8x8xf32> to vector<4x8xf32>
    %57 = vector.shape_cast %56 : vector<4x8xf32> to vector<4x8x1xf32>
    %58 = vector.broadcast %57 : vector<4x8x1xf32> to vector<4x8x8xf32>
    %59 = arith.subf %55, %58 : vector<4x8x8xf32>
    %60 = math.exp %59 : vector<4x8x8xf32>
    %cst_38 = arith.constant dense<0.000000e+00> : vector<4x8xf32>
    %61 = vector.multi_reduction <add>, %60, %cst_38 [2] : vector<4x8x8xf32> to vector<4x8xf32>
    %62 = vector.shape_cast %61 : vector<4x8xf32> to vector<4x8x1xf32>
    %63 = tpu.reciprocal %62 {approx = true} : vector<4x8x1xf32> -> vector<4x8x1xf32>
    %64 = vector.broadcast %63 : vector<4x8x1xf32> to vector<4x8x8xf32>
    %65 = arith.mulf %60, %64 : vector<4x8x8xf32>
    %66 = arith.truncf %65 : vector<4x8x8xf32> to vector<4x8x8xbf16>
    "tpu.trace_start"() <{level = 10 : i32, message = "hqk,hkd->hqd"}> : () -> ()
    %cst_39 = arith.constant dense<0.000000e+00> : vector<4x8x8xf32>
    %67 = tpu.matmul %66, %50, %cst_39 {dimension_numbers = #tpu.dot_dimension_numbers<[2], [1], [1], [2], [0, 0, 0, 1, 1, 2], [0], [0]>} : vector<4x8x8xbf16>, vector<4x8x8xbf16>, vector<4x8x8xf32> -> vector<4x8x8xf32>
    "tpu.trace_stop"() : () -> ()
    %68 = tpu.transpose %67, [1, 0, 2] : vector<4x8x8xf32> -> vector<8x4x8xf32>
    %69 = vector.shape_cast %68 : vector<8x4x8xf32> to vector<8x32xf32>
    %70 = arith.truncf %69 : vector<8x32xf32> to vector<8x32xbf16>
    %c0_40 = arith.constant 0 : index
    %c0_41 = arith.constant 0 : index
    %c0_42 = arith.constant 0 : index
    %71 = vector.load %arg12[%c0_40, %c0_41, %c0_42] : memref<2x32x32xbf16, #tpu.memory_space<vmem>>, vector<1x32x32xbf16>
    %72 = vector.shape_cast %71 : vector<1x32x32xbf16> to vector<32x32xbf16>
    %cst_43 = arith.constant dense<0.000000e+00> : vector<8x32xf32>
    %73 = tpu.matmul %70, %72, %cst_43 {dimension_numbers = #tpu.dot_dimension_numbers<[1], [0], [0], [1], [0, 0, 1, 1], [], []>} : vector<8x32xbf16>, vector<32x32xbf16>, vector<8x32xf32> -> vector<8x32xf32>
    %c0_44 = arith.constant 0 : index
    %c0_45 = arith.constant 0 : index
    %c0_46 = arith.constant 0 : index
    %74 = vector.load %arg13[%c0_44, %c0_45, %c0_46] : memref<2x1x32xf32, #tpu.memory_space<vmem>>, vector<1x1x32xf32>
    %75 = vector.shape_cast %74 : vector<1x1x32xf32> to vector<1x32xf32>
    %76 = vector.broadcast %75 : vector<1x32xf32> to vector<8x32xf32>
    %77 = arith.addf %73, %76 : vector<8x32xf32>
    %78 = arith.addf %12, %77 : vector<8x32xf32>
    %c0_47 = arith.constant 0 : index
    %c0_48 = arith.constant 0 : index
    %c0_49 = arith.constant 0 : index
    %79 = vector.load %arg18[%c0_47, %c0_48, %c0_49] : memref<2x1x32xf32, #tpu.memory_space<vmem>>, vector<1x1x32xf32>
    %80 = vector.shape_cast %79 : vector<1x1x32xf32> to vector<1x32xf32>
    %c0_50 = arith.constant 0 : index
    %c0_51 = arith.constant 0 : index
    %c0_52 = arith.constant 0 : index
    %81 = vector.load %arg19[%c0_50, %c0_51, %c0_52] : memref<2x1x32xf32, #tpu.memory_space<vmem>>, vector<1x1x32xf32>
    %82 = vector.shape_cast %81 : vector<1x1x32xf32> to vector<1x32xf32>
    %cst_53 = arith.constant dense<0.000000e+00> : vector<8xf32>
    %83 = vector.multi_reduction <add>, %78, %cst_53 [1] : vector<8x32xf32> to vector<8xf32>
    %84 = vector.shape_cast %83 : vector<8xf32> to vector<8x1xf32>
    %cst_54 = arith.constant 3.200000e+01 : f32
    %85 = vector.broadcast %cst_54 : f32 to vector<8x1xf32>
    %86 = arith.divf %84, %85 : vector<8x1xf32>
    %87 = vector.broadcast %86 : vector<8x1xf32> to vector<8x32xf32>
    %88 = arith.subf %78, %87 : vector<8x32xf32>
    %89 = arith.mulf %88, %88 : vector<8x32xf32>
    %cst_55 = arith.constant dense<0.000000e+00> : vector<8xf32>
    %90 = vector.multi_reduction <add>, %89, %cst_55 [1] : vector<8x32xf32> to vector<8xf32>
    %91 = vector.shape_cast %90 : vector<8xf32> to vector<8x1xf32>
    %cst_56 = arith.constant 3.200000e+01 : f32
    %92 = vector.broadcast %cst_56 : f32 to vector<8x1xf32>
    %93 = arith.divf %91, %92 : vector<8x1xf32>
    %94 = vector.broadcast %86 : vector<8x1xf32> to vector<8x32xf32>
    %95 = arith.subf %78, %94 : vector<8x32xf32>
    %cst_57 = arith.constant 9.99999974E-6 : f32
    %96 = vector.broadcast %cst_57 : f32 to vector<8x1xf32>
    %97 = arith.addf %93, %96 : vector<8x1xf32>
    %98 = math.rsqrt %97 : vector<8x1xf32>
    %99 = vector.broadcast %98 : vector<8x1xf32> to vector<8x32xf32>
    %100 = arith.mulf %95, %99 : vector<8x32xf32>
    %101 = vector.broadcast %80 : vector<1x32xf32> to vector<8x32xf32>
    %102 = arith.mulf %100, %101 : vector<8x32xf32>
    %103 = vector.broadcast %82 : vector<1x32xf32> to vector<8x32xf32>
    %104 = arith.addf %102, %103 : vector<8x32xf32>
    %105 = arith.truncf %104 : vector<8x32xf32> to vector<8x32xbf16>
    %c0_58 = arith.constant 0 : index
    %c0_59 = arith.constant 0 : index
    %c0_60 = arith.constant 0 : index
    %106 = vector.load %arg14[%c0_58, %c0_59, %c0_60] : memref<2x32x64xbf16, #tpu.memory_space<vmem>>, vector<1x32x64xbf16>
    %107 = vector.shape_cast %106 : vector<1x32x64xbf16> to vector<32x64xbf16>
    %cst_61 = arith.constant dense<0.000000e+00> : vector<8x64xf32>
    %108 = tpu.matmul %105, %107, %cst_61 {dimension_numbers = #tpu.dot_dimension_numbers<[1], [0], [0], [1], [0, 0, 1, 1], [], []>} : vector<8x32xbf16>, vector<32x64xbf16>, vector<8x64xf32> -> vector<8x64xf32>
    %c0_62 = arith.constant 0 : index
    %c0_63 = arith.constant 0 : index
    %c0_64 = arith.constant 0 : index
    %109 = vector.load %arg15[%c0_62, %c0_63, %c0_64] : memref<2x1x64xf32, #tpu.memory_space<vmem>>, vector<1x1x64xf32>
    %110 = vector.shape_cast %109 : vector<1x1x64xf32> to vector<1x64xf32>
    %111 = vector.broadcast %110 : vector<1x64xf32> to vector<8x64xf32>
    %112 = arith.addf %108, %111 : vector<8x64xf32>
    %cst_65 = arith.constant 0.000000e+00 : f32
    %113 = vector.broadcast %cst_65 : f32 to vector<8x64xf32>
    %114 = arith.maximumf %112, %113 : vector<8x64xf32>
    %115 = arith.truncf %114 : vector<8x64xf32> to vector<8x64xbf16>
    %c0_66 = arith.constant 0 : index
    %c0_67 = arith.constant 0 : index
    %c0_68 = arith.constant 0 : index
    %116 = vector.load %arg16[%c0_66, %c0_67, %c0_68] : memref<2x64x32xbf16, #tpu.memory_space<vmem>>, vector<1x64x32xbf16>
    %117 = vector.shape_cast %116 : vector<1x64x32xbf16> to vector<64x32xbf16>
    %cst_69 = arith.constant dense<0.000000e+00> : vector<8x32xf32>
    %118 = tpu.matmul %115, %117, %cst_69 {dimension_numbers = #tpu.dot_dimension_numbers<[1], [0], [0], [1], [0, 0, 1, 1], [], []>} : vector<8x64xbf16>, vector<64x32xbf16>, vector<8x32xf32> -> vector<8x32xf32>
    %c0_70 = arith.constant 0 : index
    %c0_71 = arith.constant 0 : index
    %c0_72 = arith.constant 0 : index
    %119 = vector.load %arg17[%c0_70, %c0_71, %c0_72] : memref<2x1x32xf32, #tpu.memory_space<vmem>>, vector<1x1x32xf32>
    %120 = vector.shape_cast %119 : vector<1x1x32xf32> to vector<1x32xf32>
    %121 = vector.broadcast %120 : vector<1x32xf32> to vector<8x32xf32>
    %122 = arith.addf %118, %121 : vector<8x32xf32>
    %123 = arith.addf %104, %122 : vector<8x32xf32>
    %c0_73 = arith.constant 0 : index
    %c0_74 = arith.constant 0 : index
    %c0_75 = arith.constant 0 : index
    %124 = vector.load %arg20[%c0_73, %c0_74, %c0_75] : memref<2x1x32xf32, #tpu.memory_space<vmem>>, vector<1x1x32xf32>
    %125 = vector.shape_cast %124 : vector<1x1x32xf32> to vector<1x32xf32>
    %c0_76 = arith.constant 0 : index
    %c0_77 = arith.constant 0 : index
    %c0_78 = arith.constant 0 : index
    %126 = vector.load %arg21[%c0_76, %c0_77, %c0_78] : memref<2x1x32xf32, #tpu.memory_space<vmem>>, vector<1x1x32xf32>
    %127 = vector.shape_cast %126 : vector<1x1x32xf32> to vector<1x32xf32>
    %cst_79 = arith.constant dense<0.000000e+00> : vector<8xf32>
    %128 = vector.multi_reduction <add>, %123, %cst_79 [1] : vector<8x32xf32> to vector<8xf32>
    %129 = vector.shape_cast %128 : vector<8xf32> to vector<8x1xf32>
    %cst_80 = arith.constant 3.200000e+01 : f32
    %130 = vector.broadcast %cst_80 : f32 to vector<8x1xf32>
    %131 = arith.divf %129, %130 : vector<8x1xf32>
    %132 = vector.broadcast %131 : vector<8x1xf32> to vector<8x32xf32>
    %133 = arith.subf %123, %132 : vector<8x32xf32>
    %134 = arith.mulf %133, %133 : vector<8x32xf32>
    %cst_81 = arith.constant dense<0.000000e+00> : vector<8xf32>
    %135 = vector.multi_reduction <add>, %134, %cst_81 [1] : vector<8x32xf32> to vector<8xf32>
    %136 = vector.shape_cast %135 : vector<8xf32> to vector<8x1xf32>
    %cst_82 = arith.constant 3.200000e+01 : f32
    %137 = vector.broadcast %cst_82 : f32 to vector<8x1xf32>
    %138 = arith.divf %136, %137 : vector<8x1xf32>
    %139 = vector.broadcast %131 : vector<8x1xf32> to vector<8x32xf32>
    %140 = arith.subf %123, %139 : vector<8x32xf32>
    %cst_83 = arith.constant 9.99999974E-6 : f32
    %141 = vector.broadcast %cst_83 : f32 to vector<8x1xf32>
    %142 = arith.addf %138, %141 : vector<8x1xf32>
    %143 = math.rsqrt %142 : vector<8x1xf32>
    %144 = vector.broadcast %143 : vector<8x1xf32> to vector<8x32xf32>
    %145 = arith.mulf %140, %144 : vector<8x32xf32>
    %146 = vector.broadcast %125 : vector<1x32xf32> to vector<8x32xf32>
    %147 = arith.mulf %145, %146 : vector<8x32xf32>
    %148 = vector.broadcast %127 : vector<1x32xf32> to vector<8x32xf32>
    %149 = arith.addf %147, %148 : vector<8x32xf32>
    %150 = arith.truncf %149 : vector<8x32xf32> to vector<8x32xbf16>
    %c1 = arith.constant 1 : index
    %c0_84 = arith.constant 0 : index
    %c0_85 = arith.constant 0 : index
    %151 = vector.load %arg6[%c1, %c0_84, %c0_85] : memref<2x32x32xbf16, #tpu.memory_space<vmem>>, vector<1x32x32xbf16>
    %152 = vector.shape_cast %151 : vector<1x32x32xbf16> to vector<32x32xbf16>
    %cst_86 = arith.constant dense<0.000000e+00> : vector<8x32xf32>
    %153 = tpu.matmul %150, %152, %cst_86 {dimension_numbers = #tpu.dot_dimension_numbers<[1], [0], [0], [1], [0, 0, 1, 1], [], []>} : vector<8x32xbf16>, vector<32x32xbf16>, vector<8x32xf32> -> vector<8x32xf32>
    %c1_87 = arith.constant 1 : index
    %c0_88 = arith.constant 0 : index
    %c0_89 = arith.constant 0 : index
    %154 = vector.load %arg7[%c1_87, %c0_88, %c0_89] : memref<2x1x32xf32, #tpu.memory_space<vmem>>, vector<1x1x32xf32>
    %155 = vector.shape_cast %154 : vector<1x1x32xf32> to vector<1x32xf32>
    %156 = vector.broadcast %155 : vector<1x32xf32> to vector<8x32xf32>
    %157 = arith.addf %153, %156 : vector<8x32xf32>
    %158 = vector.shape_cast %157 : vector<8x32xf32> to vector<8x4x8xf32>
    %c1_90 = arith.constant 1 : index
    %c0_91 = arith.constant 0 : index
    %c0_92 = arith.constant 0 : index
    %159 = vector.load %arg8[%c1_90, %c0_91, %c0_92] : memref<2x32x32xbf16, #tpu.memory_space<vmem>>, vector<1x32x32xbf16>
    %160 = vector.shape_cast %159 : vector<1x32x32xbf16> to vector<32x32xbf16>
    %cst_93 = arith.constant dense<0.000000e+00> : vector<8x32xf32>
    %161 = tpu.matmul %150, %160, %cst_93 {dimension_numbers = #tpu.dot_dimension_numbers<[1], [0], [0], [1], [0, 0, 1, 1], [], []>} : vector<8x32xbf16>, vector<32x32xbf16>, vector<8x32xf32> -> vector<8x32xf32>
    %c1_94 = arith.constant 1 : index
    %c0_95 = arith.constant 0 : index
    %c0_96 = arith.constant 0 : index
    %162 = vector.load %arg9[%c1_94, %c0_95, %c0_96] : memref<2x1x32xf32, #tpu.memory_space<vmem>>, vector<1x1x32xf32>
    %163 = vector.shape_cast %162 : vector<1x1x32xf32> to vector<1x32xf32>
    %164 = vector.broadcast %163 : vector<1x32xf32> to vector<8x32xf32>
    %165 = arith.addf %161, %164 : vector<8x32xf32>
    %166 = vector.shape_cast %165 : vector<8x32xf32> to vector<8x4x8xf32>
    %c1_97 = arith.constant 1 : index
    %c0_98 = arith.constant 0 : index
    %c0_99 = arith.constant 0 : index
    %167 = vector.load %arg10[%c1_97, %c0_98, %c0_99] : memref<2x32x32xbf16, #tpu.memory_space<vmem>>, vector<1x32x32xbf16>
    %168 = vector.shape_cast %167 : vector<1x32x32xbf16> to vector<32x32xbf16>
    %cst_100 = arith.constant dense<0.000000e+00> : vector<8x32xf32>
    %169 = tpu.matmul %150, %168, %cst_100 {dimension_numbers = #tpu.dot_dimension_numbers<[1], [0], [0], [1], [0, 0, 1, 1], [], []>} : vector<8x32xbf16>, vector<32x32xbf16>, vector<8x32xf32> -> vector<8x32xf32>
    %c1_101 = arith.constant 1 : index
    %c0_102 = arith.constant 0 : index
    %c0_103 = arith.constant 0 : index
    %170 = vector.load %arg11[%c1_101, %c0_102, %c0_103] : memref<2x1x32xf32, #tpu.memory_space<vmem>>, vector<1x1x32xf32>
    %171 = vector.shape_cast %170 : vector<1x1x32xf32> to vector<1x32xf32>
    %172 = vector.broadcast %171 : vector<1x32xf32> to vector<8x32xf32>
    %173 = arith.addf %169, %172 : vector<8x32xf32>
    %174 = vector.shape_cast %173 : vector<8x32xf32> to vector<8x4x8xf32>
    %175 = tpu.transpose %158, [1, 0, 2] : vector<8x4x8xf32> -> vector<4x8x8xf32>
    %176 = arith.truncf %175 : vector<4x8x8xf32> to vector<4x8x8xbf16>
    %177 = tpu.transpose %166, [1, 0, 2] : vector<8x4x8xf32> -> vector<4x8x8xf32>
    %178 = arith.truncf %177 : vector<4x8x8xf32> to vector<4x8x8xbf16>
    %179 = tpu.transpose %174, [1, 0, 2] : vector<8x4x8xf32> -> vector<4x8x8xf32>
    %180 = arith.truncf %179 : vector<4x8x8xf32> to vector<4x8x8xbf16>
    "tpu.trace_start"() <{level = 10 : i32, message = "hqd,hkd->hqk"}> : () -> ()
    %cst_104 = arith.constant dense<0.000000e+00> : vector<4x8x8xf32>
    %181 = tpu.matmul %176, %178, %cst_104 {dimension_numbers = #tpu.dot_dimension_numbers<[2], [2], [1], [1], [0, 0, 0, 1, 1, 1], [0], [0]>} : vector<4x8x8xbf16>, vector<4x8x8xbf16>, vector<4x8x8xf32> -> vector<4x8x8xf32>
    "tpu.trace_stop"() : () -> ()
    %cst_105 = arith.constant 0.353553385 : f32
    %182 = vector.broadcast %cst_105 : f32 to vector<4x8x8xf32>
    %183 = arith.mulf %181, %182 : vector<4x8x8xf32>
    %184 = vector.broadcast %19 : vector<1x8x8xf32> to vector<4x8x8xf32>
    %185 = arith.addf %183, %184 : vector<4x8x8xf32>
    %cst_106 = arith.constant dense<0xFF800000> : vector<4x8xf32>
    %186 = vector.multi_reduction <maximumf>, %185, %cst_106 [2] : vector<4x8x8xf32> to vector<4x8xf32>
    %187 = vector.shape_cast %186 : vector<4x8xf32> to vector<4x8x1xf32>
    %188 = vector.broadcast %187 : vector<4x8x1xf32> to vector<4x8x8xf32>
    %189 = arith.subf %185, %188 : vector<4x8x8xf32>
    %190 = math.exp %189 : vector<4x8x8xf32>
    %cst_107 = arith.constant dense<0.000000e+00> : vector<4x8xf32>
    %191 = vector.multi_reduction <add>, %190, %cst_107 [2] : vector<4x8x8xf32> to vector<4x8xf32>
    %192 = vector.shape_cast %191 : vector<4x8xf32> to vector<4x8x1xf32>
    %193 = tpu.reciprocal %192 {approx = true} : vector<4x8x1xf32> -> vector<4x8x1xf32>
    %194 = vector.broadcast %193 : vector<4x8x1xf32> to vector<4x8x8xf32>
    %195 = arith.mulf %190, %194 : vector<4x8x8xf32>
    %196 = arith.truncf %195 : vector<4x8x8xf32> to vector<4x8x8xbf16>
    "tpu.trace_start"() <{level = 10 : i32, message = "hqk,hkd->hqd"}> : () -> ()
    %cst_108 = arith.constant dense<0.000000e+00> : vector<4x8x8xf32>
    %197 = tpu.matmul %196, %180, %cst_108 {dimension_numbers = #tpu.dot_dimension_numbers<[2], [1], [1], [2], [0, 0, 0, 1, 1, 2], [0], [0]>} : vector<4x8x8xbf16>, vector<4x8x8xbf16>, vector<4x8x8xf32> -> vector<4x8x8xf32>
    "tpu.trace_stop"() : () -> ()
    %198 = tpu.transpose %197, [1, 0, 2] : vector<4x8x8xf32> -> vector<8x4x8xf32>
    %199 = vector.shape_cast %198 : vector<8x4x8xf32> to vector<8x32xf32>
    %200 = arith.truncf %199 : vector<8x32xf32> to vector<8x32xbf16>
    %c1_109 = arith.constant 1 : index
    %c0_110 = arith.constant 0 : index
    %c0_111 = arith.constant 0 : index
    %201 = vector.load %arg12[%c1_109, %c0_110, %c0_111] : memref<2x32x32xbf16, #tpu.memory_space<vmem>>, vector<1x32x32xbf16>
    %202 = vector.shape_cast %201 : vector<1x32x32xbf16> to vector<32x32xbf16>
    %cst_112 = arith.constant dense<0.000000e+00> : vector<8x32xf32>
    %203 = tpu.matmul %200, %202, %cst_112 {dimension_numbers = #tpu.dot_dimension_numbers<[1], [0], [0], [1], [0, 0, 1, 1], [], []>} : vector<8x32xbf16>, vector<32x32xbf16>, vector<8x32xf32> -> vector<8x32xf32>
    %c1_113 = arith.constant 1 : index
    %c0_114 = arith.constant 0 : index
    %c0_115 = arith.constant 0 : index
    %204 = vector.load %arg13[%c1_113, %c0_114, %c0_115] : memref<2x1x32xf32, #tpu.memory_space<vmem>>, vector<1x1x32xf32>
    %205 = vector.shape_cast %204 : vector<1x1x32xf32> to vector<1x32xf32>
    %206 = vector.broadcast %205 : vector<1x32xf32> to vector<8x32xf32>
    %207 = arith.addf %203, %206 : vector<8x32xf32>
    %208 = arith.addf %149, %207 : vector<8x32xf32>
    %c1_116 = arith.constant 1 : index
    %c0_117 = arith.constant 0 : index
    %c0_118 = arith.constant 0 : index
    %209 = vector.load %arg18[%c1_116, %c0_117, %c0_118] : memref<2x1x32xf32, #tpu.memory_space<vmem>>, vector<1x1x32xf32>
    %210 = vector.shape_cast %209 : vector<1x1x32xf32> to vector<1x32xf32>
    %c1_119 = arith.constant 1 : index
    %c0_120 = arith.constant 0 : index
    %c0_121 = arith.constant 0 : index
    %211 = vector.load %arg19[%c1_119, %c0_120, %c0_121] : memref<2x1x32xf32, #tpu.memory_space<vmem>>, vector<1x1x32xf32>
    %212 = vector.shape_cast %211 : vector<1x1x32xf32> to vector<1x32xf32>
    %cst_122 = arith.constant dense<0.000000e+00> : vector<8xf32>
    %213 = vector.multi_reduction <add>, %208, %cst_122 [1] : vector<8x32xf32> to vector<8xf32>
    %214 = vector.shape_cast %213 : vector<8xf32> to vector<8x1xf32>
    %cst_123 = arith.constant 3.200000e+01 : f32
    %215 = vector.broadcast %cst_123 : f32 to vector<8x1xf32>
    %216 = arith.divf %214, %215 : vector<8x1xf32>
    %217 = vector.broadcast %216 : vector<8x1xf32> to vector<8x32xf32>
    %218 = arith.subf %208, %217 : vector<8x32xf32>
    %219 = arith.mulf %218, %218 : vector<8x32xf32>
    %cst_124 = arith.constant dense<0.000000e+00> : vector<8xf32>
    %220 = vector.multi_reduction <add>, %219, %cst_124 [1] : vector<8x32xf32> to vector<8xf32>
    %221 = vector.shape_cast %220 : vector<8xf32> to vector<8x1xf32>
    %cst_125 = arith.constant 3.200000e+01 : f32
    %222 = vector.broadcast %cst_125 : f32 to vector<8x1xf32>
    %223 = arith.divf %221, %222 : vector<8x1xf32>
    %224 = vector.broadcast %216 : vector<8x1xf32> to vector<8x32xf32>
    %225 = arith.subf %208, %224 : vector<8x32xf32>
    %cst_126 = arith.constant 9.99999974E-6 : f32
    %226 = vector.broadcast %cst_126 : f32 to vector<8x1xf32>
    %227 = arith.addf %223, %226 : vector<8x1xf32>
    %228 = math.rsqrt %227 : vector<8x1xf32>
    %229 = vector.broadcast %228 : vector<8x1xf32> to vector<8x32xf32>
    %230 = arith.mulf %225, %229 : vector<8x32xf32>
    %231 = vector.broadcast %210 : vector<1x32xf32> to vector<8x32xf32>
    %232 = arith.mulf %230, %231 : vector<8x32xf32>
    %233 = vector.broadcast %212 : vector<1x32xf32> to vector<8x32xf32>
    %234 = arith.addf %232, %233 : vector<8x32xf32>
    %235 = arith.truncf %234 : vector<8x32xf32> to vector<8x32xbf16>
    %c1_127 = arith.constant 1 : index
    %c0_128 = arith.constant 0 : index
    %c0_129 = arith.constant 0 : index
    %236 = vector.load %arg14[%c1_127, %c0_128, %c0_129] : memref<2x32x64xbf16, #tpu.memory_space<vmem>>, vector<1x32x64xbf16>
    %237 = vector.shape_cast %236 : vector<1x32x64xbf16> to vector<32x64xbf16>
    %cst_130 = arith.constant dense<0.000000e+00> : vector<8x64xf32>
    %238 = tpu.matmul %235, %237, %cst_130 {dimension_numbers = #tpu.dot_dimension_numbers<[1], [0], [0], [1], [0, 0, 1, 1], [], []>} : vector<8x32xbf16>, vector<32x64xbf16>, vector<8x64xf32> -> vector<8x64xf32>
    %c1_131 = arith.constant 1 : index
    %c0_132 = arith.constant 0 : index
    %c0_133 = arith.constant 0 : index
    %239 = vector.load %arg15[%c1_131, %c0_132, %c0_133] : memref<2x1x64xf32, #tpu.memory_space<vmem>>, vector<1x1x64xf32>
    %240 = vector.shape_cast %239 : vector<1x1x64xf32> to vector<1x64xf32>
    %241 = vector.broadcast %240 : vector<1x64xf32> to vector<8x64xf32>
    %242 = arith.addf %238, %241 : vector<8x64xf32>
    %cst_134 = arith.constant 0.000000e+00 : f32
    %243 = vector.broadcast %cst_134 : f32 to vector<8x64xf32>
    %244 = arith.maximumf %242, %243 : vector<8x64xf32>
    %245 = arith.truncf %244 : vector<8x64xf32> to vector<8x64xbf16>
    %c1_135 = arith.constant 1 : index
    %c0_136 = arith.constant 0 : index
    %c0_137 = arith.constant 0 : index
    %246 = vector.load %arg16[%c1_135, %c0_136, %c0_137] : memref<2x64x32xbf16, #tpu.memory_space<vmem>>, vector<1x64x32xbf16>
    %247 = vector.shape_cast %246 : vector<1x64x32xbf16> to vector<64x32xbf16>
    %cst_138 = arith.constant dense<0.000000e+00> : vector<8x32xf32>
    %248 = tpu.matmul %245, %247, %cst_138 {dimension_numbers = #tpu.dot_dimension_numbers<[1], [0], [0], [1], [0, 0, 1, 1], [], []>} : vector<8x64xbf16>, vector<64x32xbf16>, vector<8x32xf32> -> vector<8x32xf32>
    %c1_139 = arith.constant 1 : index
    %c0_140 = arith.constant 0 : index
    %c0_141 = arith.constant 0 : index
    %249 = vector.load %arg17[%c1_139, %c0_140, %c0_141] : memref<2x1x32xf32, #tpu.memory_space<vmem>>, vector<1x1x32xf32>
    %250 = vector.shape_cast %249 : vector<1x1x32xf32> to vector<1x32xf32>
    %251 = vector.broadcast %250 : vector<1x32xf32> to vector<8x32xf32>
    %252 = arith.addf %248, %251 : vector<8x32xf32>
    %253 = arith.addf %234, %252 : vector<8x32xf32>
    %c1_142 = arith.constant 1 : index
    %c0_143 = arith.constant 0 : index
    %c0_144 = arith.constant 0 : index
    %254 = vector.load %arg20[%c1_142, %c0_143, %c0_144] : memref<2x1x32xf32, #tpu.memory_space<vmem>>, vector<1x1x32xf32>
    %255 = vector.shape_cast %254 : vector<1x1x32xf32> to vector<1x32xf32>
    %c1_145 = arith.constant 1 : index
    %c0_146 = arith.constant 0 : index
    %c0_147 = arith.constant 0 : index
    %256 = vector.load %arg21[%c1_145, %c0_146, %c0_147] : memref<2x1x32xf32, #tpu.memory_space<vmem>>, vector<1x1x32xf32>
    %257 = vector.shape_cast %256 : vector<1x1x32xf32> to vector<1x32xf32>
    %cst_148 = arith.constant dense<0.000000e+00> : vector<8xf32>
    %258 = vector.multi_reduction <add>, %253, %cst_148 [1] : vector<8x32xf32> to vector<8xf32>
    %259 = vector.shape_cast %258 : vector<8xf32> to vector<8x1xf32>
    %cst_149 = arith.constant 3.200000e+01 : f32
    %260 = vector.broadcast %cst_149 : f32 to vector<8x1xf32>
    %261 = arith.divf %259, %260 : vector<8x1xf32>
    %262 = vector.broadcast %261 : vector<8x1xf32> to vector<8x32xf32>
    %263 = arith.subf %253, %262 : vector<8x32xf32>
    %264 = arith.mulf %263, %263 : vector<8x32xf32>
    %cst_150 = arith.constant dense<0.000000e+00> : vector<8xf32>
    %265 = vector.multi_reduction <add>, %264, %cst_150 [1] : vector<8x32xf32> to vector<8xf32>
    %266 = vector.shape_cast %265 : vector<8xf32> to vector<8x1xf32>
    %cst_151 = arith.constant 3.200000e+01 : f32
    %267 = vector.broadcast %cst_151 : f32 to vector<8x1xf32>
    %268 = arith.divf %266, %267 : vector<8x1xf32>
    %269 = vector.broadcast %261 : vector<8x1xf32> to vector<8x32xf32>
    %270 = arith.subf %253, %269 : vector<8x32xf32>
    %cst_152 = arith.constant 9.99999974E-6 : f32
    %271 = vector.broadcast %cst_152 : f32 to vector<8x1xf32>
    %272 = arith.addf %268, %271 : vector<8x1xf32>
    %273 = math.rsqrt %272 : vector<8x1xf32>
    %274 = vector.broadcast %273 : vector<8x1xf32> to vector<8x32xf32>
    %275 = arith.mulf %270, %274 : vector<8x32xf32>
    %276 = vector.broadcast %255 : vector<1x32xf32> to vector<8x32xf32>
    %277 = arith.mulf %275, %276 : vector<8x32xf32>
    %278 = vector.broadcast %257 : vector<1x32xf32> to vector<8x32xf32>
    %279 = arith.addf %277, %278 : vector<8x32xf32>
    %280 = arith.truncf %279 : vector<8x32xf32> to vector<8x32xbf16>
    %c0_153 = arith.constant 0 : index
    %c0_154 = arith.constant 0 : index
    %281 = vector.load %arg22[%c0_153, %c0_154] : memref<32x640xbf16, #tpu.memory_space<vmem>>, vector<32x640xbf16>
    %cst_155 = arith.constant dense<0.000000e+00> : vector<8x640xf32>
    %282 = tpu.matmul %280, %281, %cst_155 {dimension_numbers = #tpu.dot_dimension_numbers<[1], [0], [0], [1], [0, 0, 1, 1], [], []>} : vector<8x32xbf16>, vector<32x640xbf16>, vector<8x640xf32> -> vector<8x640xf32>
    %c0_156 = arith.constant 0 : index
    %c0_157 = arith.constant 0 : index
    %283 = vector.load %arg23[%c0_156, %c0_157] : memref<1x640xf32, #tpu.memory_space<vmem>>, vector<1x640xf32>
    %284 = vector.broadcast %283 : vector<1x640xf32> to vector<8x640xf32>
    %285 = arith.addf %282, %284 : vector<8x640xf32>
    %c0_158 = arith.constant 0 : index
    %c0_159 = arith.constant 0 : index
    %286 = vector.load %arg24[%c0_158, %c0_159] : memref<8x640xf32, #tpu.memory_space<vmem>>, vector<8x640xf32>
    tpu.vector_store %arg24[%c0_158, %c0_159], %285 {strides = array<i32>} : memref<8x640xf32, #tpu.memory_space<vmem>>, vector<8x640xf32>,
    return
  }
  func.func @transform_0(%arg0: i32) -> (i32, i32, i32) {
    %c0_i32 = arith.constant 0 : i32
    %c0_i32_0 = arith.constant 0 : i32
    %c0_i32_1 = arith.constant 0 : i32
    return %arg0, %c0_i32, %c0_i32_0 : i32, i32, i32
  }
  func.func @transform_1(%arg0: i32) -> (i32, i32, i32) {
    %c0_i32 = arith.constant 0 : i32
    %c0_i32_0 = arith.constant 0 : i32
    %c0_i32_1 = arith.constant 0 : i32
    return %arg0, %c0_i32, %c0_i32_0 : i32, i32, i32
  }
  func.func @transform_2(%arg0: i32) -> (i32, i32) {
    %c0_i32 = arith.constant 0 : i32
    %c0_i32_0 = arith.constant 0 : i32
    %c0_i32_1 = arith.constant 0 : i32
    return %c0_i32, %c0_i32_0 : i32, i32
  }
  func.func @transform_3(%arg0: i32) -> (i32, i32) {
    %c0_i32 = arith.constant 0 : i32
    %c0_i32_0 = arith.constant 0 : i32
    %c0_i32_1 = arith.constant 0 : i32
    return %c0_i32, %c0_i32_0 : i32, i32
  }
  func.func @transform_4(%arg0: i32) -> (i32, i32) {
    %c0_i32 = arith.constant 0 : i32
    %c0_i32_0 = arith.constant 0 : i32
    %c0_i32_1 = arith.constant 0 : i32
    return %c0_i32, %c0_i32_0 : i32, i32
  }
  func.func @transform_5(%arg0: i32) -> (i32, i32, i32) {
    %c0_i32 = arith.constant 0 : i32
    %c0_i32_0 = arith.constant 0 : i32
    %c0_i32_1 = arith.constant 0 : i32
    %c0_i32_2 = arith.constant 0 : i32
    return %c0_i32, %c0_i32_0, %c0_i32_1 : i32, i32, i32
  }
  func.func @transform_6(%arg0: i32) -> (i32, i32, i32) {
    %c0_i32 = arith.constant 0 : i32
    %c0_i32_0 = arith.constant 0 : i32
    %c0_i32_1 = arith.constant 0 : i32
    %c0_i32_2 = arith.constant 0 : i32
    return %c0_i32, %c0_i32_0, %c0_i32_1 : i32, i32, i32
  }
  func.func @transform_7(%arg0: i32) -> (i32, i32, i32) {
    %c0_i32 = arith.constant 0 : i32
    %c0_i32_0 = arith.constant 0 : i32
    %c0_i32_1 = arith.constant 0 : i32
    %c0_i32_2 = arith.constant 0 : i32
    return %c0_i32, %c0_i32_0, %c0_i32_1 : i32, i32, i32
  }
  func.func @transform_8(%arg0: i32) -> (i32, i32, i32) {
    %c0_i32 = arith.constant 0 : i32
    %c0_i32_0 = arith.constant 0 : i32
    %c0_i32_1 = arith.constant 0 : i32
    %c0_i32_2 = arith.constant 0 : i32
    return %c0_i32, %c0_i32_0, %c0_i32_1 : i32, i32, i32
  }
  func.func @transform_9(%arg0: i32) -> (i32, i32, i32) {
    %c0_i32 = arith.constant 0 : i32
    %c0_i32_0 = arith.constant 0 : i32
    %c0_i32_1 = arith.constant 0 : i32
    %c0_i32_2 = arith.constant 0 : i32
    return %c0_i32, %c0_i32_0, %c0_i32_1 : i32, i32, i32
  }
  func.func @transform_10(%arg0: i32) -> (i32, i32, i32) {
    %c0_i32 = arith.constant 0 : i32
    %c0_i32_0 = arith.constant 0 : i32
    %c0_i32_1 = arith.constant 0 : i32
    %c0_i32_2 = arith.constant 0 : i32
    return %c0_i32, %c0_i32_0, %c0_i32_1 : i32, i32, i32
  }
  func.func @transform_11(%arg0: i32) -> (i32, i32, i32) {
    %c0_i32 = arith.constant 0 : i32
    %c0_i32_0 = arith.constant 0 : i32
    %c0_i32_1 = arith.constant 0 : i32
    %c0_i32_2 = arith.constant 0 : i32
    return %c0_i32, %c0_i32_0, %c0_i32_1 : i32, i32, i32
  }
  func.func @transform_12(%arg0: i32) -> (i32, i32, i32) {
    %c0_i32 = arith.constant 0 : i32
    %c0_i32_0 = arith.constant 0 : i32
    %c0_i32_1 = arith.constant 0 : i32
    %c0_i32_2 = arith.constant 0 : i32
    return %c0_i32, %c0_i32_0, %c0_i32_1 : i32, i32, i32
  }
  func.func @transform_13(%arg0: i32) -> (i32, i32, i32) {
    %c0_i32 = arith.constant 0 : i32
    %c0_i32_0 = arith.constant 0 : i32
    %c0_i32_1 = arith.constant 0 : i32
    %c0_i32_2 = arith.constant 0 : i32
    return %c0_i32, %c0_i32_0, %c0_i32_1 : i32, i32, i32
  }
  func.func @transform_14(%arg0: i32) -> (i32, i32, i32) {
    %c0_i32 = arith.constant 0 : i32
    %c0_i32_0 = arith.constant 0 : i32
    %c0_i32_1 = arith.constant 0 : i32
    %c0_i32_2 = arith.constant 0 : i32
    return %c0_i32, %c0_i32_0, %c0_i32_1 : i32, i32, i32
  }
  func.func @transform_15(%arg0: i32) -> (i32, i32, i32) {
    %c0_i32 = arith.constant 0 : i32
    %c0_i32_0 = arith.constant 0 : i32
    %c0_i32_1 = arith.constant 0 : i32
    %c0_i32_2 = arith.constant 0 : i32
    return %c0_i32, %c0_i32_0, %c0_i32_1 : i32, i32, i32
  }
  func.func @transform_16(%arg0: i32) -> (i32, i32, i32) {
    %c0_i32 = arith.constant 0 : i32
    %c0_i32_0 = arith.constant 0 : i32
    %c0_i32_1 = arith.constant 0 : i32
    %c0_i32_2 = arith.constant 0 : i32
    return %c0_i32, %c0_i32_0, %c0_i32_1 : i32, i32, i32
  }
  func.func @transform_17(%arg0: i32) -> (i32, i32, i32) {
    %c0_i32 = arith.constant 0 : i32
    %c0_i32_0 = arith.constant 0 : i32
    %c0_i32_1 = arith.constant 0 : i32
    %c0_i32_2 = arith.constant 0 : i32
    return %c0_i32, %c0_i32_0, %c0_i32_1 : i32, i32, i32
  }
  func.func @transform_18(%arg0: i32) -> (i32, i32, i32) {
    %c0_i32 = arith.constant 0 : i32
    %c0_i32_0 = arith.constant 0 : i32
    %c0_i32_1 = arith.constant 0 : i32
    %c0_i32_2 = arith.constant 0 : i32
    return %c0_i32, %c0_i32_0, %c0_i32_1 : i32, i32, i32
  }
  func.func @transform_19(%arg0: i32) -> (i32, i32, i32) {
    %c0_i32 = arith.constant 0 : i32
    %c0_i32_0 = arith.constant 0 : i32
    %c0_i32_1 = arith.constant 0 : i32
    %c0_i32_2 = arith.constant 0 : i32
    return %c0_i32, %c0_i32_0, %c0_i32_1 : i32, i32, i32
  }
  func.func @transform_20(%arg0: i32) -> (i32, i32, i32) {
    %c0_i32 = arith.constant 0 : i32
    %c0_i32_0 = arith.constant 0 : i32
    %c0_i32_1 = arith.constant 0 : i32
    %c0_i32_2 = arith.constant 0 : i32
    return %c0_i32, %c0_i32_0, %c0_i32_1 : i32, i32, i32
  }
  func.func @transform_21(%arg0: i32) -> (i32, i32) {
    %c0_i32 = arith.constant 0 : i32
    %c0_i32_0 = arith.constant 0 : i32
    %c0_i32_1 = arith.constant 0 : i32
    return %c0_i32, %c0_i32_0 : i32, i32
  }
  func.func @transform_22(%arg0: i32) -> (i32, i32) {
    %c0_i32 = arith.constant 0 : i32
    %c0_i32_0 = arith.constant 0 : i32
    %c0_i32_1 = arith.constant 0 : i32
    return %c0_i32, %c0_i32_0 : i32, i32
  }
  func.func @transform_23(%arg0: i32) -> (i32, i32) {
    %c0_i32 = arith.constant 0 : i32
    %c0_i32_0 = arith.constant 0 : i32
    return %arg0, %c0_i32 : i32, i32
  }
}

</mosaic_0001>

<llo_original>
// kernel: world_model_forward.1
$region0: #{world_model_forward.1}
  #allocation0 [shape = 'u32[]', space=smem, size = 0x4, offset = 0x4, fixed_abs, tag = 'smem constant byte address 0x4 - core index']
  #allocation1 [shape = 'u32[144,128]{1,0:T(1,128)}', space=vmem, size = 0x12000, scoped, tag = 'internal scratch']
  %s0 = inlined_call_operand.vmem [shape: f32[2,8,16], index: 0, kind: input, shape index: {}]
  %s1 = inlined_call_operand.vmem [shape: f32[2,8,4], index: 1, kind: input, shape index: {}]
  %s2 = inlined_call_operand.vmem [shape: f32[8,32], index: 2, kind: input, shape index: {}]
  %s3 = inlined_call_operand.vmem [shape: bf16[16,32], index: 3, kind: input, shape index: {}]
  %s4 = inlined_call_operand.vmem [shape: bf16[4,32], index: 4, kind: input, shape index: {}]
  %s5 = inlined_call_operand.vmem [shape: bf16[2,32,32], index: 5, kind: input, shape index: {}]
  %s6 = inlined_call_operand.vmem [shape: f32[2,1,32], index: 6, kind: input, shape index: {}]
  %s7 = inlined_call_operand.vmem [shape: bf16[2,32,32], index: 7, kind: input, shape index: {}]
  %s8 = inlined_call_operand.vmem [shape: f32[2,1,32], index: 8, kind: input, shape index: {}]
  %s9 = inlined_call_operand.vmem [shape: bf16[2,32,32], index: 9, kind: input, shape index: {}]
  %s10 = inlined_call_operand.vmem [shape: f32[2,1,32], index: 10, kind: input, shape index: {}]
  %s11 = inlined_call_operand.vmem [shape: bf16[2,32,32], index: 11, kind: input, shape index: {}]
  %s12 = inlined_call_operand.vmem [shape: f32[2,1,32], index: 12, kind: input, shape index: {}]
  %s13 = inlined_call_operand.vmem [shape: bf16[2,32,64], index: 13, kind: input, shape index: {}]
  %s14 = inlined_call_operand.vmem [shape: f32[2,1,64], index: 14, kind: input, shape index: {}]
  %s15 = inlined_call_operand.vmem [shape: bf16[2,64,32], index: 15, kind: input, shape index: {}]
  %s16 = inlined_call_operand.vmem [shape: f32[2,1,32], index: 16, kind: input, shape index: {}]
  %s17 = inlined_call_operand.vmem [shape: f32[2,1,32], index: 17, kind: input, shape index: {}]
  %s18 = inlined_call_operand.vmem [shape: f32[2,1,32], index: 18, kind: input, shape index: {}]
  %s19 = inlined_call_operand.vmem [shape: f32[2,1,32], index: 19, kind: input, shape index: {}]
  %s20 = inlined_call_operand.vmem [shape: f32[2,1,32], index: 20, kind: input, shape index: {}]
  %s21 = inlined_call_operand.vmem [shape: bf16[32,640], index: 21, kind: input, shape index: {}]
  %s22 = inlined_call_operand.vmem [shape: f32[1,640], index: 22, kind: input, shape index: {}]
  %s23 = inlined_call_operand.vmem [shape: f32[16,640], index: 23, kind: output, shape index: {}]
  %s24 = sld [smem:[#allocation0]]
  $region125: #{world_model_forward.1} parent=0
    _
  %s26 = ssub.s32 1, %s24
  %s27 = scalar_select 0, %s26, %s24
  loop: start=0, step=1, limit=4
  $region2: #{world_model_forward.1} parent=0 // loop_pre_header
    _
  $region3: #{world_model_forward.1} parent=0 // loop_header
    %s29 = sphi 0, %s33
    %p30 = scmp.ge.s32.totalorder %s29, 4
    %s39 = sphi 0, %s41
    %s42 = sphi 0, %s39
    %s43 = sphi 0, %s42
    %s59 = sphi 0, %s43
    %s65 = sphi 0, %s67
    %s68 = sphi 0, %s65
    %s69 = sphi 0, %s68
    %s85 = sphi 0, %s69
    %s89 = sphi 0, %s89
    %s91 = sphi 0, %s89
    %s92 = sphi 0, %s91
    %s106 = sphi 0, %s92
    %s110 = sphi 0, %s110
    %s112 = sphi 0, %s110
    %s113 = sphi 0, %s112
    %s127 = sphi 0, %s113
    %s131 = sphi 0, %s131
    %s133 = sphi 0, %s131
    %s134 = sphi 0, %s133
    %s148 = sphi 0, %s134
    %s152 = sphi 0, %s152
    %s154 = sphi 0, %s152
    %s155 = sphi 0, %s154
    %s169 = sphi 0, %s155
    %s173 = sphi 0, %s173
    %s175 = sphi 0, %s173
    %s176 = sphi 0, %s175
    %s190 = sphi 0, %s176
    %s194 = sphi 0, %s194
    %s196 = sphi 0, %s194
    %s197 = sphi 0, %s196
    %s211 = sphi 0, %s197
    %s215 = sphi 0, %s215
    %s217 = sphi 0, %s215
    %s218 = sphi 0, %s217
    %s232 = sphi 0, %s218
    %s236 = sphi 0, %s236
    %s238 = sphi 0, %s236
    %s239 = sphi 0, %s238
    %s253 = sphi 0, %s239
    %s257 = sphi 0, %s257
    %s259 = sphi 0, %s257
    %s260 = sphi 0, %s259
    %s274 = sphi 0, %s260
    %s278 = sphi 0, %s278
    %s280 = sphi 0, %s278
    %s281 = sphi 0, %s280
    %s295 = sphi 0, %s281
    %s299 = sphi 0, %s299
    %s301 = sphi 0, %s299
    %s302 = sphi 0, %s301
    %s316 = sphi 0, %s302
    %s320 = sphi 0, %s320
    %s322 = sphi 0, %s320
    %s323 = sphi 0, %s322
    %s337 = sphi 0, %s323
    %s341 = sphi 0, %s341
    %s343 = sphi 0, %s341
    %s344 = sphi 0, %s343
    %s358 = sphi 0, %s344
    %s362 = sphi 0, %s362
    %s364 = sphi 0, %s362
    %s365 = sphi 0, %s364
    %s379 = sphi 0, %s365
    %s383 = sphi 0, %s383
    %s385 = sphi 0, %s383
    %s386 = sphi 0, %s385
    %s400 = sphi 0, %s386
    %s404 = sphi 0, %s404
    %s406 = sphi 0, %s404
    %s407 = sphi 0, %s406
    %s421 = sphi 0, %s407
    %s425 = sphi 0, %s425
    %s427 = sphi 0, %s425
    %s428 = sphi 0, %s427
    %s442 = sphi 0, %s428
    %s446 = sphi 0, %s446
    %s448 = sphi 0, %s446
    %s449 = sphi 0, %s448
    %s463 = sphi 0, %s449
    %s467 = sphi 0, %s467
    %s469 = sphi 0, %s467
    %s470 = sphi 0, %s469
    %s484 = sphi 0, %s470
    %s488 = sphi 0, %s488
    %s490 = sphi 0, %s488
    %s491 = sphi 0, %s490
    %s505 = sphi 0, %s491
    %s509 = sphi 0, %s509
    %s511 = sphi 0, %s509
    %s512 = sphi 0, %s511
    %s526 = sphi 0, %s512
    %s532 = sphi 0, %s534
    %s535 = sphi 0, %s532
    %s536 = sphi 0, %s535
    %s552 = sphi 0, %s536
  $region4: #{world_model_forward.1} parent=0 // loop_header_branch
    %32 = sbr.rel (%p30) target = $region8
  $region5: #{world_model_forward.1} parent=0 // loop_body
    %s34 = ssub.s32 %s29, 1
    %s35 = ssub.s32 %s29, 2
    %s36 = sadd.s32 %s29, 1
    %s37 = ssub.s32 %s29, %s36
    %p38 = scmp.eq.s32.totalorder %s37, 0
    %s40 = sadd.s32 %s39, 1
    %s41 = scalar_select %p38, %s39, %s40
    %p44 = pneg %p38
    %p45 = scmp.eq.s32.totalorder %s29, 1
    %p46 = por %p44, %p45
    %p47 = scmp.ne.s32.totalorder %s39, %s42
    %p48 = scmp.eq.s32.totalorder %s29, 0
    %p49 = por %p47, %p48
    %p50 = scmp.ne.s32.totalorder %s39, %s42
    %p51 = scmp.eq.s32.totalorder %s34, 1
    %p52 = por %p50, %p51
    %p53 = scmp.ne.s32.totalorder %s42, %s43
    %p54 = scmp.eq.s32.totalorder %s34, 0
    %p55 = por %p53, %p54
    %p56 = scmp.ne.s32.totalorder %s42, %s43
    %p57 = scmp.eq.s32.totalorder %s35, 1
    %p58 = por %p56, %p57
    %p60 = scmp.ne.s32.totalorder %s43, %s59
    %p61 = scmp.eq.s32.totalorder %s35, 0
    %p62 = por %p60, %p61
    %s63 = ssub.s32 %s29, %s36
    %p64 = scmp.eq.s32.totalorder %s63, 0
    %s66 = sadd.s32 %s65, 1
    %s67 = scalar_select %p64, %s65, %s66
    %p70 = pneg %p64
    %p71 = scmp.eq.s32.totalorder %s29, 1
    %p72 = por %p70, %p71
    %p73 = scmp.ne.s32.totalorder %s65, %s68
    %p74 = scmp.eq.s32.totalorder %s29, 0
    %p75 = por %p73, %p74
    %p76 = scmp.ne.s32.totalorder %s65, %s68
    %p77 = scmp.eq.s32.totalorder %s34, 1
    %p78 = por %p76, %p77
    %p79 = scmp.ne.s32.totalorder %s68, %s69
    %p80 = scmp.eq.s32.totalorder %s34, 0
    %p81 = por %p79, %p80
    %p82 = scmp.ne.s32.totalorder %s68, %s69
    %p83 = scmp.eq.s32.totalorder %s35, 1
    %p84 = por %p82, %p83
    %p86 = scmp.ne.s32.totalorder %s69, %s85
    %p87 = scmp.eq.s32.totalorder %s35, 0
    %p88 = por %p86, %p87
    %s90 = sadd.s32 %s89, 1
    %p93 = scmp.eq.s32.totalorder %s29, 1
    %p94 = scmp.ne.s32.totalorder %s89, %s91
    %p95 = scmp.eq.s32.totalorder %s29, 0
    %p96 = por %p94, %p95
    %p97 = scmp.ne.s32.totalorder %s89, %s91
    %p98 = scmp.eq.s32.totalorder %s34, 1
    %p99 = por %p97, %p98
    %p100 = scmp.ne.s32.totalorder %s91, %s92
    %p101 = scmp.eq.s32.totalorder %s34, 0
    %p102 = por %p100, %p101
    %p103 = scmp.ne.s32.totalorder %s91, %s92
    %p104 = scmp.eq.s32.totalorder %s35, 1
    %p105 = por %p103, %p104
    %p107 = scmp.ne.s32.totalorder %s92, %s106
    %p108 = scmp.eq.s32.totalorder %s35, 0
    %p109 = por %p107, %p108
    %s111 = sadd.s32 %s110, 1
    %p114 = scmp.eq.s32.totalorder %s29, 1
    %p115 = scmp.ne.s32.totalorder %s110, %s112
    %p116 = scmp.eq.s32.totalorder %s29, 0
    %p117 = por %p115, %p116
    %p118 = scmp.ne.s32.totalorder %s110, %s112
    %p119 = scmp.eq.s32.totalorder %s34, 1
    %p120 = por %p118, %p119
    %p121 = scmp.ne.s32.totalorder %s112, %s113
    %p122 = scmp.eq.s32.totalorder %s34, 0
    %p123 = por %p121, %p122
    %p124 = scmp.ne.s32.totalorder %s112, %s113
    %p125 = scmp.eq.s32.totalorder %s35, 1
    %p126 = por %p124, %p125
    %p128 = scmp.ne.s32.totalorder %s113, %s127
    %p129 = scmp.eq.s32.totalorder %s35, 0
    %p130 = por %p128, %p129
    %s132 = sadd.s32 %s131, 1
    %p135 = scmp.eq.s32.totalorder %s29, 1
    %p136 = scmp.ne.s32.totalorder %s131, %s133
    %p137 = scmp.eq.s32.totalorder %s29, 0
    %p138 = por %p136, %p137
    %p139 = scmp.ne.s32.totalorder %s131, %s133
    %p140 = scmp.eq.s32.totalorder %s34, 1
    %p141 = por %p139, %p140
    %p142 = scmp.ne.s32.totalorder %s133, %s134
    %p143 = scmp.eq.s32.totalorder %s34, 0
    %p144 = por %p142, %p143
    %p145 = scmp.ne.s32.totalorder %s133, %s134
    %p146 = scmp.eq.s32.totalorder %s35, 1
    %p147 = por %p145, %p146
    %p149 = scmp.ne.s32.totalorder %s134, %s148
    %p150 = scmp.eq.s32.totalorder %s35, 0
    %p151 = por %p149, %p150
    %s153 = sadd.s32 %s152, 1
    %p156 = scmp.eq.s32.totalorder %s29, 1
    %p157 = scmp.ne.s32.totalorder %s152, %s154
    %p158 = scmp.eq.s32.totalorder %s29, 0
    %p159 = por %p157, %p158
    %p160 = scmp.ne.s32.totalorder %s152, %s154
    %p161 = scmp.eq.s32.totalorder %s34, 1
    %p162 = por %p160, %p161
    %p163 = scmp.ne.s32.totalorder %s154, %s155
    %p164 = scmp.eq.s32.totalorder %s34, 0
    %p165 = por %p163, %p164
    %p166 = scmp.ne.s32.totalorder %s154, %s155
    %p167 = scmp.eq.s32.totalorder %s35, 1
    %p168 = por %p166, %p167
    %p170 = scmp.ne.s32.totalorder %s155, %s169
    %p171 = scmp.eq.s32.totalorder %s35, 0
    %p172 = por %p170, %p171
    %s174 = sadd.s32 %s173, 1
    %p177 = scmp.eq.s32.totalorder %s29, 1
    %p178 = scmp.ne.s32.totalorder %s173, %s175
    %p179 = scmp.eq.s32.totalorder %s29, 0
    %p180 = por %p178, %p179
    %p181 = scmp.ne.s32.totalorder %s173, %s175
    %p182 = scmp.eq.s32.totalorder %s34, 1
    %p183 = por %p181, %p182
    %p184 = scmp.ne.s32.totalorder %s175, %s176
    %p185 = scmp.eq.s32.totalorder %s34, 0
    %p186 = por %p184, %p185
    %p187 = scmp.ne.s32.totalorder %s175, %s176
    %p188 = scmp.eq.s32.totalorder %s35, 1
    %p189 = por %p187, %p188
    %p191 = scmp.ne.s32.totalorder %s176, %s190
    %p192 = scmp.eq.s32.totalorder %s35, 0
    %p193 = por %p191, %p192
    %s195 = sadd.s32 %s194, 1
    %p198 = scmp.eq.s32.totalorder %s29, 1
    %p199 = scmp.ne.s32.totalorder %s194, %s196
    %p200 = scmp.eq.s32.totalorder %s29, 0
    %p201 = por %p199, %p200
    %p202 = scmp.ne.s32.totalorder %s194, %s196
    %p203 = scmp.eq.s32.totalorder %s34, 1
    %p204 = por %p202, %p203
    %p205 = scmp.ne.s32.totalorder %s196, %s197
    %p206 = scmp.eq.s32.totalorder %s34, 0
    %p207 = por %p205, %p206
    %p208 = scmp.ne.s32.totalorder %s196, %s197
    %p209 = scmp.eq.s32.totalorder %s35, 1
    %p210 = por %p208, %p209
    %p212 = scmp.ne.s32.totalorder %s197, %s211
    %p213 = scmp.eq.s32.totalorder %s35, 0
    %p214 = por %p212, %p213
    %s216 = sadd.s32 %s215, 1
    %p219 = scmp.eq.s32.totalorder %s29, 1
    %p220 = scmp.ne.s32.totalorder %s215, %s217
    %p221 = scmp.eq.s32.totalorder %s29, 0
    %p222 = por %p220, %p221
    %p223 = scmp.ne.s32.totalorder %s215, %s217
    %p224 = scmp.eq.s32.totalorder %s34, 1
    %p225 = por %p223, %p224
    %p226 = scmp.ne.s32.totalorder %s217, %s218
    %p227 = scmp.eq.s32.totalorder %s34, 0
    %p228 = por %p226, %p227
    %p229 = scmp.ne.s32.totalorder %s217, %s218
    %p230 = scmp.eq.s32.totalorder %s35, 1
    %p231 = por %p229, %p230
    %p233 = scmp.ne.s32.totalorder %s218, %s232
    %p234 = scmp.eq.s32.totalorder %s35, 0
    %p235 = por %p233, %p234
    %s237 = sadd.s32 %s236, 1
    %p240 = scmp.eq.s32.totalorder %s29, 1
    %p241 = scmp.ne.s32.totalorder %s236, %s238
    %p242 = scmp.eq.s32.totalorder %s29, 0
    %p243 = por %p241, %p242
    %p244 = scmp.ne.s32.totalorder %s236, %s238
    %p245 = scmp.eq.s32.totalorder %s34, 1
    %p246 = por %p244, %p245
    %p247 = scmp.ne.s32.totalorder %s238, %s239
    %p248 = scmp.eq.s32.totalorder %s34, 0
    %p249 = por %p247, %p248
    %p250 = scmp.ne.s32.totalorder %s238, %s239
    %p251 = scmp.eq.s32.totalorder %s35, 1
    %p252 = por %p250, %p251
    %p254 = scmp.ne.s32.totalorder %s239, %s253
    %p255 = scmp.eq.s32.totalorder %s35, 0
    %p256 = por %p254, %p255
    %s258 = sadd.s32 %s257, 1
    %p261 = scmp.eq.s32.totalorder %s29, 1
    %p262 = scmp.ne.s32.totalorder %s257, %s259
    %p263 = scmp.eq.s32.totalorder %s29, 0
    %p264 = por %p262, %p263
    %p265 = scmp.ne.s32.totalorder %s257, %s259
    %p266 = scmp.eq.s32.totalorder %s34, 1
    %p267 = por %p265, %p266
    %p268 = scmp.ne.s32.totalorder %s259, %s260
    %p269 = scmp.eq.s32.totalorder %s34, 0
    %p270 = por %p268, %p269
    %p271 = scmp.ne.s32.totalorder %s259, %s260
    %p272 = scmp.eq.s32.totalorder %s35, 1
    %p273 = por %p271, %p272
    %p275 = scmp.ne.s32.totalorder %s260, %s274
    %p276 = scmp.eq.s32.totalorder %s35, 0
    %p277 = por %p275, %p276
    %s279 = sadd.s32 %s278, 1
    %p282 = scmp.eq.s32.totalorder %s29, 1
    %p283 = scmp.ne.s32.totalorder %s278, %s280
    %p284 = scmp.eq.s32.totalorder %s29, 0
    %p285 = por %p283, %p284
    %p286 = scmp.ne.s32.totalorder %s278, %s280
    %p287 = scmp.eq.s32.totalorder %s34, 1
    %p288 = por %p286, %p287
    %p289 = scmp.ne.s32.totalorder %s280, %s281
    %p290 = scmp.eq.s32.totalorder %s34, 0
    %p291 = por %p289, %p290
    %p292 = scmp.ne.s32.totalorder %s280, %s281
    %p293 = scmp.eq.s32.totalorder %s35, 1
    %p294 = por %p292, %p293
    %p296 = scmp.ne.s32.totalorder %s281, %s295
    %p297 = scmp.eq.s32.totalorder %s35, 0
    %p298 = por %p296, %p297
    %s300 = sadd.s32 %s299, 1
    %p303 = scmp.eq.s32.totalorder %s29, 1
    %p304 = scmp.ne.s32.totalorder %s299, %s301
    %p305 = scmp.eq.s32.totalorder %s29, 0
    %p306 = por %p304, %p305
    %p307 = scmp.ne.s32.totalorder %s299, %s301
    %p308 = scmp.eq.s32.totalorder %s34, 1
    %p309 = por %p307, %p308
    %p310 = scmp.ne.s32.totalorder %s301, %s302
    %p311 = scmp.eq.s32.totalorder %s34, 0
    %p312 = por %p310, %p311
    %p313 = scmp.ne.s32.totalorder %s301, %s302
    %p314 = scmp.eq.s32.totalorder %s35, 1
    %p315 = por %p313, %p314
    %p317 = scmp.ne.s32.totalorder %s302, %s316
    %p318 = scmp.eq.s32.totalorder %s35, 0
    %p319 = por %p317, %p318
    %s321 = sadd.s32 %s320, 1
    %p324 = scmp.eq.s32.totalorder %s29, 1
    %p325 = scmp.ne.s32.totalorder %s320, %s322
    %p326 = scmp.eq.s32.totalorder %s29, 0
    %p327 = por %p325, %p326
    %p328 = scmp.ne.s32.totalorder %s320, %s322
    %p329 = scmp.eq.s32.totalorder %s34, 1
    %p330 = por %p328, %p329
    %p331 = scmp.ne.s32.totalorder %s322, %s323
    %p332 = scmp.eq.s32.totalorder %s34, 0
    %p333 = por %p331, %p332
    %p334 = scmp.ne.s32.totalorder %s322, %s323
    %p335 = scmp.eq.s32.totalorder %s35, 1
    %p336 = por %p334, %p335
    %p338 = scmp.ne.s32.totalorder %s323, %s337
    %p339 = scmp.eq.s32.totalorder %s35, 0
    %p340 = por %p338, %p339
    %s342 = sadd.s32 %s341, 1
    %p345 = scmp.eq.s32.totalorder %s29, 1
    %p346 = scmp.ne.s32.totalorder %s341, %s343
    %p347 = scmp.eq.s32.totalorder %s29, 0
    %p348 = por %p346, %p347
    %p349 = scmp.ne.s32.totalorder %s341, %s343
    %p350 = scmp.eq.s32.totalorder %s34, 1
    %p351 = por %p349, %p350
    %p352 = scmp.ne.s32.totalorder %s343, %s344
    %p353 = scmp.eq.s32.totalorder %s34, 0
    %p354 = por %p352, %p353
    %p355 = scmp.ne.s32.totalorder %s343, %s344
    %p356 = scmp.eq.s32.totalorder %s35, 1
    %p357 = por %p355, %p356
    %p359 = scmp.ne.s32.totalorder %s344, %s358
    %p360 = scmp.eq.s32.totalorder %s35, 0
    %p361 = por %p359, %p360
    %s363 = sadd.s32 %s362, 1
    %p366 = scmp.eq.s32.totalorder %s29, 1
    %p367 = scmp.ne.s32.totalorder %s362, %s364
    %p368 = scmp.eq.s32.totalorder %s29, 0
    %p369 = por %p367, %p368
    %p370 = scmp.ne.s32.totalorder %s362, %s364
    %p371 = scmp.eq.s32.totalorder %s34, 1
    %p372 = por %p370, %p371
    %p373 = scmp.ne.s32.totalorder %s364, %s365
    %p374 = scmp.eq.s32.totalorder %s34, 0
    %p375 = por %p373, %p374
    %p376 = scmp.ne.s32.totalorder %s364, %s365
    %p377 = scmp.eq.s32.totalorder %s35, 1
    %p378 = por %p376, %p377
    %p380 = scmp.ne.s32.totalorder %s365, %s379
    %p381 = scmp.eq.s32.totalorder %s35, 0
    %p382 = por %p380, %p381
    %s384 = sadd.s32 %s383, 1
    %p387 = scmp.eq.s32.totalorder %s29, 1
    %p388 = scmp.ne.s32.totalorder %s383, %s385
    %p389 = scmp.eq.s32.totalorder %s29, 0
    %p390 = por %p388, %p389
    %p391 = scmp.ne.s32.totalorder %s383, %s385
    %p392 = scmp.eq.s32.totalorder %s34, 1
    %p393 = por %p391, %p392
    %p394 = scmp.ne.s32.totalorder %s385, %s386
    %p395 = scmp.eq.s32.totalorder %s34, 0
    %p396 = por %p394, %p395
    %p397 = scmp.ne.s32.totalorder %s385, %s386
    %p398 = scmp.eq.s32.totalorder %s35, 1
    %p399 = por %p397, %p398
    %p401 = scmp.ne.s32.totalorder %s386, %s400
    %p402 = scmp.eq.s32.totalorder %s35, 0
    %p403 = por %p401, %p402
    %s405 = sadd.s32 %s404, 1
    %p408 = scmp.eq.s32.totalorder %s29, 1
    %p409 = scmp.ne.s32.totalorder %s404, %s406
    %p410 = scmp.eq.s32.totalorder %s29, 0
    %p411 = por %p409, %p410
    %p412 = scmp.ne.s32.totalorder %s404, %s406
    %p413 = scmp.eq.s32.totalorder %s34, 1
    %p414 = por %p412, %p413
    %p415 = scmp.ne.s32.totalorder %s406, %s407
    %p416 = scmp.eq.s32.totalorder %s34, 0
    %p417 = por %p415, %p416
    %p418 = scmp.ne.s32.totalorder %s406, %s407
    %p419 = scmp.eq.s32.totalorder %s35, 1
    %p420 = por %p418, %p419
    %p422 = scmp.ne.s32.totalorder %s407, %s421
    %p423 = scmp.eq.s32.totalorder %s35, 0
    %p424 = por %p422, %p423
    %s426 = sadd.s32 %s425, 1
    %p429 = scmp.eq.s32.totalorder %s29, 1
    %p430 = scmp.ne.s32.totalorder %s425, %s427
    %p431 = scmp.eq.s32.totalorder %s29, 0
    %p432 = por %p430, %p431
    %p433 = scmp.ne.s32.totalorder %s425, %s427
    %p434 = scmp.eq.s32.totalorder %s34, 1
    %p435 = por %p433, %p434
    %p436 = scmp.ne.s32.totalorder %s427, %s428
    %p437 = scmp.eq.s32.totalorder %s34, 0
    %p438 = por %p436, %p437
    %p439 = scmp.ne.s32.totalorder %s427, %s428
    %p440 = scmp.eq.s32.totalorder %s35, 1
    %p441 = por %p439, %p440
    %p443 = scmp.ne.s32.totalorder %s428, %s442
    %p444 = scmp.eq.s32.totalorder %s35, 0
    %p445 = por %p443, %p444
    %s447 = sadd.s32 %s446, 1
    %p450 = scmp.eq.s32.totalorder %s29, 1
    %p451 = scmp.ne.s32.totalorder %s446, %s448
    %p452 = scmp.eq.s32.totalorder %s29, 0
    %p453 = por %p451, %p452
    %p454 = scmp.ne.s32.totalorder %s446, %s448
    %p455 = scmp.eq.s32.totalorder %s34, 1
    %p456 = por %p454, %p455
    %p457 = scmp.ne.s32.totalorder %s448, %s449
    %p458 = scmp.eq.s32.totalorder %s34, 0
    %p459 = por %p457, %p458
    %p460 = scmp.ne.s32.totalorder %s448, %s449
    %p461 = scmp.eq.s32.totalorder %s35, 1
    %p462 = por %p460, %p461
    %p464 = scmp.ne.s32.totalorder %s449, %s463
    %p465 = scmp.eq.s32.totalorder %s35, 0
    %p466 = por %p464, %p465
    %s468 = sadd.s32 %s467, 1
    %p471 = scmp.eq.s32.totalorder %s29, 1
    %p472 = scmp.ne.s32.totalorder %s467, %s469
    %p473 = scmp.eq.s32.totalorder %s29, 0
    %p474 = por %p472, %p473
    %p475 = scmp.ne.s32.totalorder %s467, %s469
    %p476 = scmp.eq.s32.totalorder %s34, 1
    %p477 = por %p475, %p476
    %p478 = scmp.ne.s32.totalorder %s469, %s470
    %p479 = scmp.eq.s32.totalorder %s34, 0
    %p480 = por %p478, %p479
    %p481 = scmp.ne.s32.totalorder %s469, %s470
    %p482 = scmp.eq.s32.totalorder %s35, 1
    %p483 = por %p481, %p482
    %p485 = scmp.ne.s32.totalorder %s470, %s484
    %p486 = scmp.eq.s32.totalorder %s35, 0
    %p487 = por %p485, %p486
    %s489 = sadd.s32 %s488, 1
    %p492 = scmp.eq.s32.totalorder %s29, 1
    %p493 = scmp.ne.s32.totalorder %s488, %s490
    %p494 = scmp.eq.s32.totalorder %s29, 0
    %p495 = por %p493, %p494
    %p496 = scmp.ne.s32.totalorder %s488, %s490
    %p497 = scmp.eq.s32.totalorder %s34, 1
    %p498 = por %p496, %p497
    %p499 = scmp.ne.s32.totalorder %s490, %s491
    %p500 = scmp.eq.s32.totalorder %s34, 0
    %p501 = por %p499, %p500
    %p502 = scmp.ne.s32.totalorder %s490, %s491
    %p503 = scmp.eq.s32.totalorder %s35, 1
    %p504 = por %p502, %p503
    %p506 = scmp.ne.s32.totalorder %s491, %s505
    %p507 = scmp.eq.s32.totalorder %s35, 0
    %p508 = por %p506, %p507
    %s510 = sadd.s32 %s509, 1
    %p513 = scmp.eq.s32.totalorder %s29, 1
    %p514 = scmp.ne.s32.totalorder %s509, %s511
    %p515 = scmp.eq.s32.totalorder %s29, 0
    %p516 = por %p514, %p515
    %p517 = scmp.ne.s32.totalorder %s509, %s511
    %p518 = scmp.eq.s32.totalorder %s34, 1
    %p519 = por %p517, %p518
    %p520 = scmp.ne.s32.totalorder %s511, %s512
    %p521 = scmp.eq.s32.totalorder %s34, 0
    %p522 = por %p520, %p521
    %p523 = scmp.ne.s32.totalorder %s511, %s512
    %p524 = scmp.eq.s32.totalorder %s35, 1
    %p525 = por %p523, %p524
    %p527 = scmp.ne.s32.totalorder %s512, %s526
    %p528 = scmp.eq.s32.totalorder %s35, 0
    %p529 = por %p527, %p528
    %s530 = ssub.s32 %s29, %s36
    %p531 = scmp.eq.s32.totalorder %s530, 0
    %s533 = sadd.s32 %s532, 1
    %s534 = scalar_select %p531, %s532, %s533
    %p537 = pneg %p531
    %p538 = scmp.eq.s32.totalorder %s29, 1
    %p539 = por %p537, %p538
    %p540 = scmp.ne.s32.totalorder %s532, %s535
    %p541 = scmp.eq.s32.totalorder %s29, 0
    %p542 = por %p540, %p541
    %p543 = scmp.ne.s32.totalorder %s532, %s535
    %p544 = scmp.eq.s32.totalorder %s34, 1
    %p545 = por %p543, %p544
    %p546 = scmp.ne.s32.totalorder %s535, %s536
    %p547 = scmp.eq.s32.totalorder %s34, 0
    %p548 = por %p546, %p547
    %p549 = scmp.ne.s32.totalorder %s535, %s536
    %p550 = scmp.eq.s32.totalorder %s35, 1
    %p551 = por %p549, %p550
    %p553 = scmp.ne.s32.totalorder %s536, %s552
    %p554 = scmp.eq.s32.totalorder %s35, 0
    %p555 = por %p553, %p554
    %p556 = scmp.le.s32.totalorder 1, %s29
    %p557 = scmp.lt.s32.totalorder %s29, 3
    %p558 = pnand %p556, %p557
    %p559 = pneg %p558
    // Predicated region
    $region9: #{world_model_forward.1} parent=5 // pred_check
      _
    $region10: #{world_model_forward.1} parent=5 // pred_check_branch
      %561 = sbr.rel (%p558) target = $region12
    $region11: #{world_model_forward.1} parent=5 // pred_region
      %s562 = ssub.s32 %s29, 1
      // Predicated region
      $region13: #{world_model_forward.1} parent=11 // pred_check
        %p563 = pneg %p102
      $region14: #{world_model_forward.1} parent=11 // pred_check_branch
        %565 = sbr.rel (%p563) target = $region16
      $region15: #{world_model_forward.1} parent=11 // pred_region
        _
      $region16: #{world_model_forward.1} parent=11 // pred_fallthru
        _
      // Predicated region
      $region17: #{world_model_forward.1} parent=11 // pred_check
        %p566 = pneg %p123
      $region18: #{world_model_forward.1} parent=11 // pred_check_branch
        %568 = sbr.rel (%p566) target = $region20
      $region19: #{world_model_forward.1} parent=11 // pred_region
        _
      $region20: #{world_model_forward.1} parent=11 // pred_fallthru
        _
      // Predicated region
      $region21: #{world_model_forward.1} parent=11 // pred_check
        %p569 = pneg %p144
      $region22: #{world_model_forward.1} parent=11 // pred_check_branch
        %571 = sbr.rel (%p569) target = $region24
      $region23: #{world_model_forward.1} parent=11 // pred_region
        _
      $region24: #{world_model_forward.1} parent=11 // pred_fallthru
        _
      // Predicated region
      $region25: #{world_model_forward.1} parent=11 // pred_check
        %p572 = pneg %p165
      $region26: #{world_model_forward.1} parent=11 // pred_check_branch
        %574 = sbr.rel (%p572) target = $region28
      $region27: #{world_model_forward.1} parent=11 // pred_region
        _
      $region28: #{world_model_forward.1} parent=11 // pred_fallthru
        _
      // Predicated region
      $region29: #{world_model_forward.1} parent=11 // pred_check
        %p575 = pneg %p186
      $region30: #{world_model_forward.1} parent=11 // pred_check_branch
        %577 = sbr.rel (%p575) target = $region32
      $region31: #{world_model_forward.1} parent=11 // pred_region
        _
      $region32: #{world_model_forward.1} parent=11 // pred_fallthru
        _
      // Predicated region
      $region33: #{world_model_forward.1} parent=11 // pred_check
        %p578 = pneg %p207
      $region34: #{world_model_forward.1} parent=11 // pred_check_branch
        %580 = sbr.rel (%p578) target = $region36
      $region35: #{world_model_forward.1} parent=11 // pred_region
        _
      $region36: #{world_model_forward.1} parent=11 // pred_fallthru
        _
      // Predicated region
      $region37: #{world_model_forward.1} parent=11 // pred_check
        %p581 = pneg %p228
      $region38: #{world_model_forward.1} parent=11 // pred_check_branch
        %583 = sbr.rel (%p581) target = $region40
      $region39: #{world_model_forward.1} parent=11 // pred_region
        _
      $region40: #{world_model_forward.1} parent=11 // pred_fallthru
        _
      // Predicated region
      $region41: #{world_model_forward.1} parent=11 // pred_check
        %p584 = pneg %p249
      $region42: #{world_model_forward.1} parent=11 // pred_check_branch
        %586 = sbr.rel (%p584) target = $region44
      $region43: #{world_model_forward.1} parent=11 // pred_region
        _
      $region44: #{world_model_forward.1} parent=11 // pred_fallthru
        _
      // Predicated region
      $region45: #{world_model_forward.1} parent=11 // pred_check
        %p587 = pneg %p270
      $region46: #{world_model_forward.1} parent=11 // pred_check_branch
        %589 = sbr.rel (%p587) target = $region48
      $region47: #{world_model_forward.1} parent=11 // pred_region
        _
      $region48: #{world_model_forward.1} parent=11 // pred_fallthru
        _
      // Predicated region
      $region49: #{world_model_forward.1} parent=11 // pred_check
        %p590 = pneg %p291
      $region50: #{world_model_forward.1} parent=11 // pred_check_branch
        %592 = sbr.rel (%p590) target = $region52
      $region51: #{world_model_forward.1} parent=11 // pred_region
        _
      $region52: #{world_model_forward.1} parent=11 // pred_fallthru
        _
      // Predicated region
      $region53: #{world_model_forward.1} parent=11 // pred_check
        %p593 = pneg %p312
      $region54: #{world_model_forward.1} parent=11 // pred_check_branch
        %595 = sbr.rel (%p593) target = $region56
      $region55: #{world_model_forward.1} parent=11 // pred_region
        _
      $region56: #{world_model_forward.1} parent=11 // pred_fallthru
        _
      // Predicated region
      $region57: #{world_model_forward.1} parent=11 // pred_check
        %p596 = pneg %p333
      $region58: #{world_model_forward.1} parent=11 // pred_check_branch
        %598 = sbr.rel (%p596) target = $region60
      $region59: #{world_model_forward.1} parent=11 // pred_region
        _
      $region60: #{world_model_forward.1} parent=11 // pred_fallthru
        _
      // Predicated region
      $region61: #{world_model_forward.1} parent=11 // pred_check
        %p599 = pneg %p354
      $region62: #{world_model_forward.1} parent=11 // pred_check_branch
        %601 = sbr.rel (%p599) target = $region64
      $region63: #{world_model_forward.1} parent=11 // pred_region
        _
      $region64: #{world_model_forward.1} parent=11 // pred_fallthru
        _
      // Predicated region
      $region65: #{world_model_forward.1} parent=11 // pred_check
        %p602 = pneg %p375
      $region66: #{world_model_forward.1} parent=11 // pred_check_branch
        %604 = sbr.rel (%p602) target = $region68
      $region67: #{world_model_forward.1} parent=11 // pred_region
        _
      $region68: #{world_model_forward.1} parent=11 // pred_fallthru
        _
      // Predicated region
      $region69: #{world_model_forward.1} parent=11 // pred_check
        %p605 = pneg %p396
      $region70: #{world_model_forward.1} parent=11 // pred_check_branch
        %607 = sbr.rel (%p605) target = $region72
      $region71: #{world_model_forward.1} parent=11 // pred_region
        _
      $region72: #{world_model_forward.1} parent=11 // pred_fallthru
        _
      // Predicated region
      $region73: #{world_model_forward.1} parent=11 // pred_check
        %p608 = pneg %p417
      $region74: #{world_model_forward.1} parent=11 // pred_check_branch
        %610 = sbr.rel (%p608) target = $region76
      $region75: #{world_model_forward.1} parent=11 // pred_region
        _
      $region76: #{world_model_forward.1} parent=11 // pred_fallthru
        _
      // Predicated region
      $region77: #{world_model_forward.1} parent=11 // pred_check
        %p611 = pneg %p438
      $region78: #{world_model_forward.1} parent=11 // pred_check_branch
        %613 = sbr.rel (%p611) target = $region80
      $region79: #{world_model_forward.1} parent=11 // pred_region
        _
      $region80: #{world_model_forward.1} parent=11 // pred_fallthru
        _
      // Predicated region
      $region81: #{world_model_forward.1} parent=11 // pred_check
        %p614 = pneg %p459
      $region82: #{world_model_forward.1} parent=11 // pred_check_branch
        %616 = sbr.rel (%p614) target = $region84
      $region83: #{world_model_forward.1} parent=11 // pred_region
        _
      $region84: #{world_model_forward.1} parent=11 // pred_fallthru
        _
      // Predicated region
      $region85: #{world_model_forward.1} parent=11 // pred_check
        %p617 = pneg %p480
      $region86: #{world_model_forward.1} parent=11 // pred_check_branch
        %619 = sbr.rel (%p617) target = $region88
      $region87: #{world_model_forward.1} parent=11 // pred_region
        _
      $region88: #{world_model_forward.1} parent=11 // pred_fallthru
        _
      // Predicated region
      $region89: #{world_model_forward.1} parent=11 // pred_check
        %p620 = pneg %p501
      $region90: #{world_model_forward.1} parent=11 // pred_check_branch
        %622 = sbr.rel (%p620) target = $region92
      $region91: #{world_model_forward.1} parent=11 // pred_region
        _
      $region92: #{world_model_forward.1} parent=11 // pred_fallthru
        _
      // Predicated region
      $region93: #{world_model_forward.1} parent=11 // pred_check
        %p623 = pneg %p522
      $region94: #{world_model_forward.1} parent=11 // pred_check_branch
        %625 = sbr.rel (%p623) target = $region96
      $region95: #{world_model_forward.1} parent=11 // pred_region
        _
      $region96: #{world_model_forward.1} parent=11 // pred_fallthru
        _
    $region12: #{world_model_forward.1} parent=5 // pred_fallthru
      _
    %p626 = scmp.lt.s32.totalorder %s29, 2
    // Predicated region
    $region97: #{world_model_forward.1} parent=5 // pred_check
      %p627 = pneg %p626
    $region98: #{world_model_forward.1} parent=5 // pred_check_branch
      %629 = sbr.rel (%p627) target = $region100
    $region99: #{world_model_forward.1} parent=5 // pred_region
      // Predicated region
      $region101: #{world_model_forward.1} parent=99 // pred_check
        %p630 = pneg %p49
      $region102: #{world_model_forward.1} parent=99 // pred_check_branch
        %632 = sbr.rel (%p630) target = $region104
      $region103: #{world_model_forward.1} parent=99 // pred_region
        %p633 = scmp.lt.s32.totalorder %s29, 1
        %s634 = scalar_select %p633, %s29, 1
        %s635 = smul.addr %s634, 8
        %s636 = scalar_lea.vmem %s0, %s635
      $region104: #{world_model_forward.1} parent=99 // pred_fallthru
        _
      // Predicated region
      $region105: #{world_model_forward.1} parent=99 // pred_check
        %p637 = pneg %p75
      $region106: #{world_model_forward.1} parent=99 // pred_check_branch
        %639 = sbr.rel (%p637) target = $region108
      $region107: #{world_model_forward.1} parent=99 // pred_region
        %p640 = scmp.lt.s32.totalorder %s29, 1
        %s641 = scalar_select %p640, %s29, 1
        %s642 = smul.addr %s641, 8
        %s643 = scalar_lea.vmem %s1, %s642
      $region108: #{world_model_forward.1} parent=99 // pred_fallthru
        _
    $region100: #{world_model_forward.1} parent=5 // pred_fallthru
      _
    %p644 = scmp.le.s32.totalorder 1, %s29
    %p645 = scmp.lt.s32.totalorder %s29, 3
    %p646 = pnand %p644, %p645
    %p647 = pneg %p646
    // Predicated region
    $region109: #{world_model_forward.1} parent=5 // pred_check
      _
    $region110: #{world_model_forward.1} parent=5 // pred_check_branch
      %649 = sbr.rel (%p646) target = $region112
    $region111: #{world_model_forward.1} parent=5 // pred_region
      %s650 = ssub.s32 %s29, 1
      %p651 = scmp.lt.s32.totalorder %s34, 1
      %s652 = scalar_select %p651, %s34, 1
      %s653 = smul.addr %s652, 8
      %s654 = scalar_lea.vmem %s0, %s653
      %p655 = pneg %p55
      %p656 = pneg %p52
      %p657 = scmp.lt.s32.totalorder %s34, 1
      %s658 = scalar_select %p657, %s34, 1
      %s659 = smul.addr %s658, 8
      %s660 = scalar_lea.vmem %s1, %s659
      %p661 = pneg %p81
      %p662 = pneg %p78
      %p663 = pneg %p102
      %p664 = pneg %p99
      %p665 = pneg %p123
      %p666 = pneg %p120
      %p667 = pneg %p144
      %p668 = pneg %p141
      %p669 = pneg %p165
      %p670 = pneg %p162
      %p671 = pneg %p186
      %p672 = pneg %p183
      %p673 = pneg %p207
      %p674 = pneg %p204
      %p675 = pneg %p228
      %p676 = pneg %p225
      %p677 = pneg %p249
      %p678 = pneg %p246
      %p679 = pneg %p270
      %p680 = pneg %p267
      %p681 = pneg %p291
      %p682 = pneg %p288
      %p683 = pneg %p312
      %p684 = pneg %p309
      %p685 = pneg %p333
      %p686 = pneg %p330
      %p687 = pneg %p354
      %p688 = pneg %p351
      %p689 = pneg %p375
      %p690 = pneg %p372
      %p691 = pneg %p396
      %p692 = pneg %p393
      %p693 = pneg %p417
      %p694 = pneg %p414
      %p695 = pneg %p438
      %p696 = pneg %p435
      %p697 = pneg %p459
      %p698 = pneg %p456
      %p699 = pneg %p480
      %p700 = pneg %p477
      %p701 = pneg %p501
      %p702 = pneg %p498
      %p703 = pneg %p522
      %p704 = pneg %p519
      %p705 = pneg %p548
      %p706 = pneg %p545
      %p707 = scmp.lt.s32.totalorder %s34, 1
      %s708 = scalar_select %p707, %s34, 1
      %s709 = smul.addr %s708, 5
      %s710 = smul.addr %s709, 8
      %s711 = scalar_lea.vmem %s23, %s710
      %p712 = scmp.lt.s32.totalorder %s34, 1
      %s713 = scalar_select %p712, %s34, 1
      %s714 = smul.addr %s713, 8
      %s715 = scalar_lea.vmem %s0, %s714
      %p716 = scmp.lt.s32.totalorder %s34, 1
      %s717 = scalar_select %p716, %s34, 1
      %s718 = smul.addr %s717, 8
      %s719 = scalar_lea.vmem %s1, %s718
      %p720 = scmp.lt.s32.totalorder %s34, 1
      %s721 = scalar_select %p720, %s34, 1
      %s722 = smul.addr %s721, 5
      %s723 = smul.addr %s722, 8
      %s724 = scalar_lea.vmem %s23, %s723
      %v726 = vld [vmem:[%s715] sm:$0xff]
      %v727 = vpack.c.bf16 %v726, %v726
      %v728 = vld [vmem:[%s719] sm:$0xff]
      %v729 = vpack.c.bf16 %v728, %v728
      %v730 = vld [vmem:[%s3] sm:$0xf]
      %v731 = vld [vmem:[%s3 + $0x4] sm:$0xf]
      %v732 = vld [vmem:[%s4] sm:$0x3]
      %vm733 = vcmask 31744
      %v735 = vsel %vm733, %v729, 0
      %vm737 = vcmask 1041408
      %v739 = vsel %vm737, %v732, 0
      %741 = vmatprep.subr.bf16.mxu0 0
      %742 = vmatpush1.bf16.msra.mxu0 %v739
      %743 = vmatprep.subr.bf16.mxu0 0
      %744 = vmatpush1.bf16.msra.mxu0 0
      %745 = vmatprep.subr.bf16.mxu0 0
      %746 = vmatpush1.bf16.msra.mxu0 0
      %747 = vmatprep.subr.bf16.mxu0 0
      %748 = vmatpush1.bf16.msra.mxu0 0
      %749 = vmatprep.subr.bf16.mxu0 0
      %750 = vmatpush1.bf16.msra.mxu0 0
      %751 = vmatprep.subr.bf16.mxu0 0
      %752 = vmatpush1.bf16.msra.mxu0 0
      %753 = vmatprep.subr.bf16.mxu0 0
      %754 = vmatpush1.bf16.msra.mxu0 0
      %755 = vmatprep.subr.bf16.mxu0 0
      %756 = vmatpush1.bf16.msra.mxu0 0
      %757 = vmatprep.subr.bf16.mxu0 0
      %758 = vmatpush1.bf16.msra.mxu0 0
      %759 = vmatprep.subr.bf16.mxu0 0
      %760 = vmatpush1.bf16.msra.mxu0 0
      %761 = vmatprep.subr.bf16.mxu0 0
      %762 = vmatpush1.bf16.msra.mxu0 0
      %763 = vmatprep.subr.bf16.mxu0 0
      %764 = vmatpush1.bf16.msra.mxu0 0
      %765 = vmatprep.subr.bf16.mxu0 0
      %766 = vmatpush1.bf16.msra.mxu0 0
      %767 = vmatprep.subr.bf16.mxu0 0
      %768 = vmatpush1.bf16.msra.mxu0 0
      %769 = vmatprep.subr.bf16.mxu0 0
      %770 = vmatpush1.bf16.msra.mxu0 0
      %771 = vmatprep.subr.bf16.mxu0 0
      %772 = vmatpush1.bf16.msra.mxu0 0
      %773 = vmatprep.mubr.bf16.mxu0 0
      %774 = vmatmul.mubr.bf16.gmra.mrb[0].mxu0 %v735
      %v775 = vpop.f32.mrb[0].mxu0
      %v776 = vadd.f32 0.0, %v775
      %v777 = vpop.f32.mrb[0].mxu0
      %v778 = vpop.f32.mrb[0].mxu0
      %v779 = vpop.f32.mrb[0].mxu0
      %780 = vdwg.mxu0
      %v783 = vunpack.c.l.b16 %v730
      %v784 = vunpack.c.l.b16 %v731
      %v785 = vpack.c.b16 %v784, %v783
      %vm787 = vcmask 130048
      %v789 = vsel %vm787, %v727, 0
      %791 = vmatprep.subr.bf16.mxu0 0
      %792 = vmatpush1.bf16.msra.mxu0 %v785
      %793 = vmatprep.subr.bf16.mxu0 0
      %794 = vmatpush1.bf16.msra.mxu0 0
      %795 = vmatprep.subr.bf16.mxu0 0
      %796 = vmatpush1.bf16.msra.mxu0 0
      %797 = vmatprep.subr.bf16.mxu0 0
      %798 = vmatpush1.bf16.msra.mxu0 0
      %799 = vmatprep.subr.bf16.mxu0 0
      %800 = vmatpush1.bf16.msra.mxu0 0
      %801 = vmatprep.subr.bf16.mxu0 0
      %802 = vmatpush1.bf16.msra.mxu0 0
      %803 = vmatprep.subr.bf16.mxu0 0
      %804 = vmatpush1.bf16.msra.mxu0 0
      %805 = vmatprep.subr.bf16.mxu0 0
      %806 = vmatpush1.bf16.msra.mxu0 0
      %807 = vmatprep.subr.bf16.mxu0 0
      %808 = vmatpush1.bf16.msra.mxu0 0
      %809 = vmatprep.subr.bf16.mxu0 0
      %810 = vmatpush1.bf16.msra.mxu0 0
      %811 = vmatprep.subr.bf16.mxu0 0
      %812 = vmatpush1.bf16.msra.mxu0 0
      %813 = vmatprep.subr.bf16.mxu0 0
      %814 = vmatpush1.bf16.msra.mxu0 0
      %815 = vmatprep.subr.bf16.mxu0 0
      %816 = vmatpush1.bf16.msra.mxu0 0
      %817 = vmatprep.subr.bf16.mxu0 0
      %818 = vmatpush1.bf16.msra.mxu0 0
      %819 = vmatprep.subr.bf16.mxu0 0
      %820 = vmatpush1.bf16.msra.mxu0 0
      %821 = vmatprep.subr.bf16.mxu0 0
      %822 = vmatpush1.bf16.msra.mxu0 0
      %823 = vmatprep.mubr.bf16.mxu0 0
      %824 = vmatmul.mubr.bf16.gmra.mrb[0].mxu0 %v789
      %v825 = vpop.f32.mrb[0].mxu0
      %v826 = vadd.f32 %v776, %v825
      %v827 = vpop.f32.mrb[0].mxu0
      %v828 = vpop.f32.mrb[0].mxu0
      %v829 = vpop.f32.mrb[0].mxu0
      %830 = vdwg.mxu0
      %v831 = vld [vmem:[%s2] sm:$0xff]
      %v832 = vadd.f32 %v826, %v831
      %v833 = vlaneseq
      %v834 = vshrl.u32 %v833, 7
      %v835 = vlaneseq
      %v836 = vand.u32 %v835, 127
      %vm837 = vcmp.le.s32.totalorder %v836, %v834
      %v838 = vsel %vm837, 0.0, -1e+30
      %v839 = vpack.c.bf16 %v832, %v832
      %v840 = vld [vmem:[%s5] sm:$0xf]
      %v841 = vld [vmem:[%s5 + $0x4] sm:$0xf]
      %v842 = vld [vmem:[%s5 + $0x8] sm:$0xf]
      %v843 = vld [vmem:[%s5 + $0xc] sm:$0xf]
      %v844 = vld [vmem:[%s6] sm:$0x1]
      %v846 = vlaneseq
      %v847 = vshrl.u32 %v846, 7
      %v848 = vsub.s32 0, %v847
      %v849 = vrot.slane %v844, %v848
      %v855 = vunpack.c.l.b16 %v840
      %v856 = vunpack.c.l.b16 %v841
      %v857 = vunpack.c.l.b16 %v842
      %v858 = vunpack.c.l.b16 %v843
      %v859 = vpack.c.b16 %v856, %v855
      %v860 = vpack.c.b16 %v858, %v857
      %vm863 = vcmask 261120
      %v865 = vsel %vm863, %v839, 0
      %867 = vmatprep.subr.bf16.mxu0 0
      %868 = vmatpush1.bf16.msra.mxu0 %v859
      %869 = vmatprep.subr.bf16.mxu0 0
      %870 = vmatpush1.bf16.msra.mxu0 %v860
      %871 = vmatprep.subr.bf16.mxu0 0
      %872 = vmatpush1.bf16.msra.mxu0 0
      %873 = vmatprep.subr.bf16.mxu0 0
      %874 = vmatpush1.bf16.msra.mxu0 0
      %875 = vmatprep.subr.bf16.mxu0 0
      %876 = vmatpush1.bf16.msra.mxu0 0
      %877 = vmatprep.subr.bf16.mxu0 0
      %878 = vmatpush1.bf16.msra.mxu0 0
      %879 = vmatprep.subr.bf16.mxu0 0
      %880 = vmatpush1.bf16.msra.mxu0 0
      %881 = vmatprep.subr.bf16.mxu0 0
      %882 = vmatpush1.bf16.msra.mxu0 0
      %883 = vmatprep.subr.bf16.mxu0 0
      %884 = vmatpush1.bf16.msra.mxu0 0
      %885 = vmatprep.subr.bf16.mxu0 0
      %886 = vmatpush1.bf16.msra.mxu0 0
      %887 = vmatprep.subr.bf16.mxu0 0
      %888 = vmatpush1.bf16.msra.mxu0 0
      %889 = vmatprep.subr.bf16.mxu0 0
      %890 = vmatpush1.bf16.msra.mxu0 0
      %891 = vmatprep.subr.bf16.mxu0 0
      %892 = vmatpush1.bf16.msra.mxu0 0
      %893 = vmatprep.subr.bf16.mxu0 0
      %894 = vmatpush1.bf16.msra.mxu0 0
      %895 = vmatprep.subr.bf16.mxu0 0
      %896 = vmatpush1.bf16.msra.mxu0 0
      %897 = vmatprep.subr.bf16.mxu0 0
      %898 = vmatpush1.bf16.msra.mxu0 0
      %899 = vmatprep.mubr.bf16.mxu0 0
      %900 = vmatmul.mubr.bf16.gmra.mrb[0].mxu0 %v865
      %v901 = vpop.f32.mrb[0].mxu0
      %v902 = vadd.f32 %v849, %v901
      %v903 = vpop.f32.mrb[0].mxu0
      %v904 = vpop.f32.mrb[0].mxu0
      %v905 = vpop.f32.mrb[0].mxu0
      %906 = vdwg.mxu0
      %908 = vrot.lane.b32.xlu0 %v902, 120
      %v909 = vpop.permute.xlu0 %908
      %911 = vrot.lane.b32.xlu0 %v902, 112
      %v912 = vpop.permute.xlu0 %911
      %914 = vrot.lane.b32.xlu0 %v902, 104
      %v915 = vpop.permute.xlu0 %914
      %v917 = vcombine.low %v902, %v912
      %v918 = vcombine.high %v902, %v912
      %v920 = vunpack.c.l.s4 1983009808
      %v921 = vunpack.c.0.s8 %v920
      %v922 = vlaneseq
      %v923 = vshrl.u32 %v922, 7
      %v924 = vsub.s32 %v921, %v923
      %v925 = vrot.slane %v917, %v924
      %v927 = vunpack.c.l.s4 1983009808
      %v928 = vunpack.c.0.s8 %v927
      %v929 = vlaneseq
      %v930 = vshrl.u32 %v929, 7
      %v931 = vsub.s32 %v928, %v930
      %v932 = vrot.slane %v918, %v931
      %v933 = vcombine.low %v909, %v915
      %v934 = vcombine.high %v909, %v915
      %v936 = vunpack.c.l.s4 1983009808
      %v937 = vunpack.c.0.s8 %v936
      %v938 = vlaneseq
      %v939 = vshrl.u32 %v938, 7
      %v940 = vsub.s32 %v937, %v939
      %v941 = vrot.slane %v933, %v940
      %v943 = vunpack.c.l.s4 1983009808
      %v944 = vunpack.c.0.s8 %v943
      %v945 = vlaneseq
      %v946 = vshrl.u32 %v945, 7
      %v947 = vsub.s32 %v944, %v946
      %v948 = vrot.slane %v934, %v947
      %v949 = vcombine.low %v925, %v941
      %v950 = vcombine.high %v925, %v941
      %v952 = vunpack.c.l.s4 1934713408
      %v953 = vunpack.c.0.s8 %v952
      %v954 = vlaneseq
      %v955 = vshrl.u32 %v954, 7
      %v956 = vsub.s32 %v953, %v955
      %v957 = vrot.slane %v949, %v956
      %v959 = vunpack.c.l.s4 1934713408
      %v960 = vunpack.c.0.s8 %v959
      %v961 = vlaneseq
      %v962 = vshrl.u32 %v961, 7
      %v963 = vsub.s32 %v960, %v962
      %v964 = vrot.slane %v950, %v963
      %v965 = vcombine.low %v932, %v948
      %v966 = vcombine.high %v932, %v948
      %v968 = vunpack.c.l.s4 1934713408
      %v969 = vunpack.c.0.s8 %v968
      %v970 = vlaneseq
      %v971 = vshrl.u32 %v970, 7
      %v972 = vsub.s32 %v969, %v971
      %v973 = vrot.slane %v965, %v972
      %v975 = vunpack.c.l.s4 1934713408
      %v976 = vunpack.c.0.s8 %v975
      %v977 = vlaneseq
      %v978 = vshrl.u32 %v977, 7
      %v979 = vsub.s32 %v976, %v978
      %v980 = vrot.slane %v966, %v979
      %v981 = vcombine.high %v957, 0.0
      %v982 = vcombine.high %v964, 0.0
      %v983 = vcombine.high %v973, 0.0
      %v984 = vcombine.high %v980, 0.0
      %v985 = vld [vmem:[%s7] sm:$0xf]
      %v986 = vld [vmem:[%s7 + $0x4] sm:$0xf]
      %v987 = vld [vmem:[%s7 + $0x8] sm:$0xf]
      %v988 = vld [vmem:[%s7 + $0xc] sm:$0xf]
      %v989 = vld [vmem:[%s8] sm:$0x1]
      %v991 = vlaneseq
      %v992 = vshrl.u32 %v991, 7
      %v993 = vsub.s32 0, %v992
      %v994 = vrot.slane %v989, %v993
      %v1000 = vunpack.c.l.b16 %v985
      %v1001 = vunpack.c.l.b16 %v986
      %v1002 = vunpack.c.l.b16 %v987
      %v1003 = vunpack.c.l.b16 %v988
      %v1004 = vpack.c.b16 %v1001, %v1000
      %v1005 = vpack.c.b16 %v1003, %v1002
      %1008 = vmatprep.subr.bf16.mxu0 0
      %1009 = vmatpush1.bf16.msra.mxu0 %v1004
      %1010 = vmatprep.subr.bf16.mxu0 0
      %1011 = vmatpush1.bf16.msra.mxu0 %v1005
      %1012 = vmatprep.subr.bf16.mxu0 0
      %1013 = vmatpush1.bf16.msra.mxu0 0
      %1014 = vmatprep.subr.bf16.mxu0 0
      %1015 = vmatpush1.bf16.msra.mxu0 0
      %1016 = vmatprep.subr.bf16.mxu0 0
      %1017 = vmatpush1.bf16.msra.mxu0 0
      %1018 = vmatprep.subr.bf16.mxu0 0
      %1019 = vmatpush1.bf16.msra.mxu0 0
      %1020 = vmatprep.subr.bf16.mxu0 0
      %1021 = vmatpush1.bf16.msra.mxu0 0
      %1022 = vmatprep.subr.bf16.mxu0 0
      %1023 = vmatpush1.bf16.msra.mxu0 0
      %1024 = vmatprep.subr.bf16.mxu0 0
      %1025 = vmatpush1.bf16.msra.mxu0 0
      %1026 = vmatprep.subr.bf16.mxu0 0
      %1027 = vmatpush1.bf16.msra.mxu0 0
      %1028 = vmatprep.subr.bf16.mxu0 0
      %1029 = vmatpush1.bf16.msra.mxu0 0
      %1030 = vmatprep.subr.bf16.mxu0 0
      %1031 = vmatpush1.bf16.msra.mxu0 0
      %1032 = vmatprep.subr.bf16.mxu0 0
      %1033 = vmatpush1.bf16.msra.mxu0 0
      %1034 = vmatprep.subr.bf16.mxu0 0
      %1035 = vmatpush1.bf16.msra.mxu0 0
      %1036 = vmatprep.subr.bf16.mxu0 0
      %1037 = vmatpush1.bf16.msra.mxu0 0
      %1038 = vmatprep.subr.bf16.mxu0 0
      %1039 = vmatpush1.bf16.msra.mxu0 0
      %1040 = vmatprep.mubr.bf16.mxu0 0
      %1041 = vmatmul.mubr.bf16.gmra.mrb[0].mxu0 %v865
      %v1042 = vpop.f32.mrb[0].mxu0
      %v1043 = vadd.f32 %v994, %v1042
      %v1044 = vpop.f32.mrb[0].mxu0
      %v1045 = vpop.f32.mrb[0].mxu0
      %v1046 = vpop.f32.mrb[0].mxu0
      %1047 = vdwg.mxu0
      %1049 = vrot.lane.b32.xlu0 %v1043, 120
      %v1050 = vpop.permute.xlu0 %1049
      %1052 = vrot.lane.b32.xlu0 %v1043, 112
      %v1053 = vpop.permute.xlu0 %1052
      %1055 = vrot.lane.b32.xlu0 %v1043, 104
      %v1056 = vpop.permute.xlu0 %1055
      %v1058 = vcombine.low %v1043, %v1053
      %v1059 = vcombine.high %v1043, %v1053
      %v1061 = vunpack.c.l.s4 1983009808
      %v1062 = vunpack.c.0.s8 %v1061
      %v1063 = vlaneseq
      %v1064 = vshrl.u32 %v1063, 7
      %v1065 = vsub.s32 %v1062, %v1064
      %v1066 = vrot.slane %v1058, %v1065
      %v1068 = vunpack.c.l.s4 1983009808
      %v1069 = vunpack.c.0.s8 %v1068
      %v1070 = vlaneseq
      %v1071 = vshrl.u32 %v1070, 7
      %v1072 = vsub.s32 %v1069, %v1071
      %v1073 = vrot.slane %v1059, %v1072
      %v1074 = vcombine.low %v1050, %v1056
      %v1075 = vcombine.high %v1050, %v1056
      %v1077 = vunpack.c.l.s4 1983009808
      %v1078 = vunpack.c.0.s8 %v1077
      %v1079 = vlaneseq
      %v1080 = vshrl.u32 %v1079, 7
      %v1081 = vsub.s32 %v1078, %v1080
      %v1082 = vrot.slane %v1074, %v1081
      %v1084 = vunpack.c.l.s4 1983009808
      %v1085 = vunpack.c.0.s8 %v1084
      %v1086 = vlaneseq
      %v1087 = vshrl.u32 %v1086, 7
      %v1088 = vsub.s32 %v1085, %v1087
      %v1089 = vrot.slane %v1075, %v1088
      %v1090 = vcombine.low %v1066, %v1082
      %v1091 = vcombine.high %v1066, %v1082
      %v1093 = vunpack.c.l.s4 1934713408
      %v1094 = vunpack.c.0.s8 %v1093
      %v1095 = vlaneseq
      %v1096 = vshrl.u32 %v1095, 7
      %v1097 = vsub.s32 %v1094, %v1096
      %v1098 = vrot.slane %v1090, %v1097
      %v1100 = vunpack.c.l.s4 1934713408
      %v1101 = vunpack.c.0.s8 %v1100
      %v1102 = vlaneseq
      %v1103 = vshrl.u32 %v1102, 7
      %v1104 = vsub.s32 %v1101, %v1103
      %v1105 = vrot.slane %v1091, %v1104
      %v1106 = vcombine.low %v1073, %v1089
      %v1107 = vcombine.high %v1073, %v1089
      %v1109 = vunpack.c.l.s4 1934713408
      %v1110 = vunpack.c.0.s8 %v1109
      %v1111 = vlaneseq
      %v1112 = vshrl.u32 %v1111, 7
      %v1113 = vsub.s32 %v1110, %v1112
      %v1114 = vrot.slane %v1106, %v1113
      %v1116 = vunpack.c.l.s4 1934713408
      %v1117 = vunpack.c.0.s8 %v1116
      %v1118 = vlaneseq
      %v1119 = vshrl.u32 %v1118, 7
      %v1120 = vsub.s32 %v1117, %v1119
      %v1121 = vrot.slane %v1107, %v1120
      %v1122 = vcombine.high %v1098, 0.0
      %v1123 = vcombine.high %v1105, 0.0
      %v1124 = vcombine.high %v1114, 0.0
      %v1125 = vcombine.high %v1121, 0.0
      %v1126 = vld [vmem:[%s9] sm:$0xf]
      %v1127 = vld [vmem:[%s9 + $0x4] sm:$0xf]
      %v1128 = vld [vmem:[%s9 + $0x8] sm:$0xf]
      %v1129 = vld [vmem:[%s9 + $0xc] sm:$0xf]
      %v1130 = vld [vmem:[%s10] sm:$0x1]
      %v1132 = vlaneseq
      %v1133 = vshrl.u32 %v1132, 7
      %v1134 = vsub.s32 0, %v1133
      %v1135 = vrot.slane %v1130, %v1134
      %v1141 = vunpack.c.l.b16 %v1126
      %v1142 = vunpack.c.l.b16 %v1127
      %v1143 = vunpack.c.l.b16 %v1128
      %v1144 = vunpack.c.l.b16 %v1129
      %v1145 = vpack.c.b16 %v1142, %v1141
      %v1146 = vpack.c.b16 %v1144, %v1143
      %1149 = vmatprep.subr.bf16.mxu0 0
      %1150 = vmatpush1.bf16.msra.mxu0 %v1145
      %1151 = vmatprep.subr.bf16.mxu0 0
      %1152 = vmatpush1.bf16.msra.mxu0 %v1146
      %1153 = vmatprep.subr.bf16.mxu0 0
      %1154 = vmatpush1.bf16.msra.mxu0 0
      %1155 = vmatprep.subr.bf16.mxu0 0
      %1156 = vmatpush1.bf16.msra.mxu0 0
      %1157 = vmatprep.subr.bf16.mxu0 0
      %1158 = vmatpush1.bf16.msra.mxu0 0
      %1159 = vmatprep.subr.bf16.mxu0 0
      %1160 = vmatpush1.bf16.msra.mxu0 0
      %1161 = vmatprep.subr.bf16.mxu0 0
      %1162 = vmatpush1.bf16.msra.mxu0 0
      %1163 = vmatprep.subr.bf16.mxu0 0
      %1164 = vmatpush1.bf16.msra.mxu0 0
      %1165 = vmatprep.subr.bf16.mxu0 0
      %1166 = vmatpush1.bf16.msra.mxu0 0
      %1167 = vmatprep.subr.bf16.mxu0 0
      %1168 = vmatpush1.bf16.msra.mxu0 0
      %1169 = vmatprep.subr.bf16.mxu0 0
      %1170 = vmatpush1.bf16.msra.mxu0 0
      %1171 = vmatprep.subr.bf16.mxu0 0
      %1172 = vmatpush1.bf16.msra.mxu0 0
      %1173 = vmatprep.subr.bf16.mxu0 0
      %1174 = vmatpush1.bf16.msra.mxu0 0
      %1175 = vmatprep.subr.bf16.mxu0 0
      %1176 = vmatpush1.bf16.msra.mxu0 0
      %1177 = vmatprep.subr.bf16.mxu0 0
      %1178 = vmatpush1.bf16.msra.mxu0 0
      %1179 = vmatprep.subr.bf16.mxu0 0
      %1180 = vmatpush1.bf16.msra.mxu0 0
      %1181 = vmatprep.mubr.bf16.mxu0 0
      %1182 = vmatmul.mubr.bf16.gmra.mrb[0].mxu0 %v865
      %v1183 = vpop.f32.mrb[0].mxu0
      %v1184 = vadd.f32 %v1135, %v1183
      %v1185 = vpop.f32.mrb[0].mxu0
      %v1186 = vpop.f32.mrb[0].mxu0
      %v1187 = vpop.f32.mrb[0].mxu0
      %1188 = vdwg.mxu0
      %1190 = vrot.lane.b32.xlu0 %v1184, 120
      %v1191 = vpop.permute.xlu0 %1190
      %1193 = vrot.lane.b32.xlu0 %v1184, 112
      %v1194 = vpop.permute.xlu0 %1193
      %1196 = vrot.lane.b32.xlu0 %v1184, 104
      %v1197 = vpop.permute.xlu0 %1196
      %v1199 = vcombine.low %v1184, %v1194
      %v1200 = vcombine.high %v1184, %v1194
      %v1202 = vunpack.c.l.s4 1983009808
      %v1203 = vunpack.c.0.s8 %v1202
      %v1204 = vlaneseq
      %v1205 = vshrl.u32 %v1204, 7
      %v1206 = vsub.s32 %v1203, %v1205
      %v1207 = vrot.slane %v1199, %v1206
      %v1209 = vunpack.c.l.s4 1983009808
      %v1210 = vunpack.c.0.s8 %v1209
      %v1211 = vlaneseq
      %v1212 = vshrl.u32 %v1211, 7
      %v1213 = vsub.s32 %v1210, %v1212
      %v1214 = vrot.slane %v1200, %v1213
      %v1215 = vcombine.low %v1191, %v1197
      %v1216 = vcombine.high %v1191, %v1197
      %v1218 = vunpack.c.l.s4 1983009808
      %v1219 = vunpack.c.0.s8 %v1218
      %v1220 = vlaneseq
      %v1221 = vshrl.u32 %v1220, 7
      %v1222 = vsub.s32 %v1219, %v1221
      %v1223 = vrot.slane %v1215, %v1222
      %v1225 = vunpack.c.l.s4 1983009808
      %v1226 = vunpack.c.0.s8 %v1225
      %v1227 = vlaneseq
      %v1228 = vshrl.u32 %v1227, 7
      %v1229 = vsub.s32 %v1226, %v1228
      %v1230 = vrot.slane %v1216, %v1229
      %v1231 = vcombine.low %v1207, %v1223
      %v1232 = vcombine.high %v1207, %v1223
      %v1234 = vunpack.c.l.s4 1934713408
      %v1235 = vunpack.c.0.s8 %v1234
      %v1236 = vlaneseq
      %v1237 = vshrl.u32 %v1236, 7
      %v1238 = vsub.s32 %v1235, %v1237
      %v1239 = vrot.slane %v1231, %v1238
      %v1241 = vunpack.c.l.s4 1934713408
      %v1242 = vunpack.c.0.s8 %v1241
      %v1243 = vlaneseq
      %v1244 = vshrl.u32 %v1243, 7
      %v1245 = vsub.s32 %v1242, %v1244
      %v1246 = vrot.slane %v1232, %v1245
      %v1247 = vcombine.low %v1214, %v1230
      %v1248 = vcombine.high %v1214, %v1230
      %v1250 = vunpack.c.l.s4 1934713408
      %v1251 = vunpack.c.0.s8 %v1250
      %v1252 = vlaneseq
      %v1253 = vshrl.u32 %v1252, 7
      %v1254 = vsub.s32 %v1251, %v1253
      %v1255 = vrot.slane %v1247, %v1254
      %v1257 = vunpack.c.l.s4 1934713408
      %v1258 = vunpack.c.0.s8 %v1257
      %v1259 = vlaneseq
      %v1260 = vshrl.u32 %v1259, 7
      %v1261 = vsub.s32 %v1258, %v1260
      %v1262 = vrot.slane %v1248, %v1261
      %v1263 = vcombine.high %v1239, 0.0
      %v1264 = vcombine.high %v1246, 0.0
      %v1265 = vcombine.high %v1255, 0.0
      %v1266 = vcombine.high %v1262, 0.0
      %v1267 = vcombine.low %v957, %v964
      %v1269 = vunpack.c.l.s4 1983009808
      %v1270 = vunpack.c.0.s8 %v1269
      %v1271 = vlaneseq
      %v1272 = vshrl.u32 %v1271, 7
      %v1273 = vsub.s32 %v1270, %v1272
      %v1274 = vrot.slane %v1267, %v1273
      %v1275 = vcombine.low %v981, %v982
      %v1277 = vunpack.c.l.s4 1983009808
      %v1278 = vunpack.c.0.s8 %v1277
      %v1279 = vlaneseq
      %v1280 = vshrl.u32 %v1279, 7
      %v1281 = vsub.s32 %v1278, %v1280
      %v1282 = vrot.slane %v1275, %v1281
      %v1283 = vcombine.low %v973, %v980
      %v1285 = vunpack.c.l.s4 1983009808
      %v1286 = vunpack.c.0.s8 %v1285
      %v1287 = vlaneseq
      %v1288 = vshrl.u32 %v1287, 7
      %v1289 = vsub.s32 %v1286, %v1288
      %v1290 = vrot.slane %v1283, %v1289
      %v1291 = vcombine.low %v983, %v984
      %v1293 = vunpack.c.l.s4 1983009808
      %v1294 = vunpack.c.0.s8 %v1293
      %v1295 = vlaneseq
      %v1296 = vshrl.u32 %v1295, 7
      %v1297 = vsub.s32 %v1294, %v1296
      %v1298 = vrot.slane %v1291, %v1297
      %v1299 = vcombine.low %v1274, %v1282
      %v1300 = vcombine.high %v1274, %v1282
      %v1302 = vunpack.c.l.s4 1934713408
      %v1303 = vunpack.c.0.s8 %v1302
      %v1304 = vlaneseq
      %v1305 = vshrl.u32 %v1304, 7
      %v1306 = vsub.s32 %v1303, %v1305
      %v1307 = vrot.slane %v1299, %v1306
      %v1309 = vunpack.c.l.s4 1934713408
      %v1310 = vunpack.c.0.s8 %v1309
      %v1311 = vlaneseq
      %v1312 = vshrl.u32 %v1311, 7
      %v1313 = vsub.s32 %v1310, %v1312
      %v1314 = vrot.slane %v1300, %v1313
      %v1315 = vcombine.low %v1290, %v1298
      %v1316 = vcombine.high %v1290, %v1298
      %v1318 = vunpack.c.l.s4 1934713408
      %v1319 = vunpack.c.0.s8 %v1318
      %v1320 = vlaneseq
      %v1321 = vshrl.u32 %v1320, 7
      %v1322 = vsub.s32 %v1319, %v1321
      %v1323 = vrot.slane %v1315, %v1322
      %v1325 = vunpack.c.l.s4 1934713408
      %v1326 = vunpack.c.0.s8 %v1325
      %v1327 = vlaneseq
      %v1328 = vshrl.u32 %v1327, 7
      %v1329 = vsub.s32 %v1326, %v1328
      %v1330 = vrot.slane %v1316, %v1329
      %v1331 = vcombine.low %v1307, %v1323
      %v1332 = vcombine.high %v1307, %v1323
      %v1333 = vcombine.low %v1314, %v1330
      %v1334 = vcombine.high %v1314, %v1330
      %v1335 = vpack.c.bf16 %v1331, %v1331
      %v1336 = vpack.c.bf16 %v1332, %v1332
      %v1337 = vpack.c.bf16 %v1333, %v1333
      %v1338 = vpack.c.bf16 %v1334, %v1334
      %v1339 = vcombine.low %v1098, %v1105
      %v1341 = vunpack.c.l.s4 1983009808
      %v1342 = vunpack.c.0.s8 %v1341
      %v1343 = vlaneseq
      %v1344 = vshrl.u32 %v1343, 7
      %v1345 = vsub.s32 %v1342, %v1344
      %v1346 = vrot.slane %v1339, %v1345
      %v1347 = vcombine.low %v1122, %v1123
      %v1349 = vunpack.c.l.s4 1983009808
      %v1350 = vunpack.c.0.s8 %v1349
      %v1351 = vlaneseq
      %v1352 = vshrl.u32 %v1351, 7
      %v1353 = vsub.s32 %v1350, %v1352
      %v1354 = vrot.slane %v1347, %v1353
      %v1355 = vcombine.low %v1114, %v1121
      %v1357 = vunpack.c.l.s4 1983009808
      %v1358 = vunpack.c.0.s8 %v1357
      %v1359 = vlaneseq
      %v1360 = vshrl.u32 %v1359, 7
      %v1361 = vsub.s32 %v1358, %v1360
      %v1362 = vrot.slane %v1355, %v1361
      %v1363 = vcombine.low %v1124, %v1125
      %v1365 = vunpack.c.l.s4 1983009808
      %v1366 = vunpack.c.0.s8 %v1365
      %v1367 = vlaneseq
      %v1368 = vshrl.u32 %v1367, 7
      %v1369 = vsub.s32 %v1366, %v1368
      %v1370 = vrot.slane %v1363, %v1369
      %v1371 = vcombine.low %v1346, %v1354
      %v1372 = vcombine.high %v1346, %v1354
      %v1374 = vunpack.c.l.s4 1934713408
      %v1375 = vunpack.c.0.s8 %v1374
      %v1376 = vlaneseq
      %v1377 = vshrl.u32 %v1376, 7
      %v1378 = vsub.s32 %v1375, %v1377
      %v1379 = vrot.slane %v1371, %v1378
      %v1381 = vunpack.c.l.s4 1934713408
      %v1382 = vunpack.c.0.s8 %v1381
      %v1383 = vlaneseq
      %v1384 = vshrl.u32 %v1383, 7
      %v1385 = vsub.s32 %v1382, %v1384
      %v1386 = vrot.slane %v1372, %v1385
      %v1387 = vcombine.low %v1362, %v1370
      %v1388 = vcombine.high %v1362, %v1370
      %v1390 = vunpack.c.l.s4 1934713408
      %v1391 = vunpack.c.0.s8 %v1390
      %v1392 = vlaneseq
      %v1393 = vshrl.u32 %v1392, 7
      %v1394 = vsub.s32 %v1391, %v1393
      %v1395 = vrot.slane %v1387, %v1394
      %v1397 = vunpack.c.l.s4 1934713408
      %v1398 = vunpack.c.0.s8 %v1397
      %v1399 = vlaneseq
      %v1400 = vshrl.u32 %v1399, 7
      %v1401 = vsub.s32 %v1398, %v1400
      %v1402 = vrot.slane %v1388, %v1401
      %v1403 = vcombine.low %v1379, %v1395
      %v1404 = vcombine.high %v1379, %v1395
      %v1405 = vcombine.low %v1386, %v1402
      %v1406 = vcombine.high %v1386, %v1402
      %v1407 = vpack.c.bf16 %v1403, %v1403
      %v1408 = vpack.c.bf16 %v1404, %v1404
      %v1409 = vpack.c.bf16 %v1405, %v1405
      %v1410 = vpack.c.bf16 %v1406, %v1406
      %v1411 = vcombine.low %v1239, %v1246
      %v1413 = vunpack.c.l.s4 1983009808
      %v1414 = vunpack.c.0.s8 %v1413
      %v1415 = vlaneseq
      %v1416 = vshrl.u32 %v1415, 7
      %v1417 = vsub.s32 %v1414, %v1416
      %v1418 = vrot.slane %v1411, %v1417
      %v1419 = vcombine.low %v1263, %v1264
      %v1421 = vunpack.c.l.s4 1983009808
      %v1422 = vunpack.c.0.s8 %v1421
      %v1423 = vlaneseq
      %v1424 = vshrl.u32 %v1423, 7
      %v1425 = vsub.s32 %v1422, %v1424
      %v1426 = vrot.slane %v1419, %v1425
      %v1427 = vcombine.low %v1255, %v1262
      %v1429 = vunpack.c.l.s4 1983009808
      %v1430 = vunpack.c.0.s8 %v1429
      %v1431 = vlaneseq
      %v1432 = vshrl.u32 %v1431, 7
      %v1433 = vsub.s32 %v1430, %v1432
      %v1434 = vrot.slane %v1427, %v1433
      %v1435 = vcombine.low %v1265, %v1266
      %v1437 = vunpack.c.l.s4 1983009808
      %v1438 = vunpack.c.0.s8 %v1437
      %v1439 = vlaneseq
      %v1440 = vshrl.u32 %v1439, 7
      %v1441 = vsub.s32 %v1438, %v1440
      %v1442 = vrot.slane %v1435, %v1441
      %v1443 = vcombine.low %v1418, %v1426
      %v1444 = vcombine.high %v1418, %v1426
      %v1446 = vunpack.c.l.s4 1934713408
      %v1447 = vunpack.c.0.s8 %v1446
      %v1448 = vlaneseq
      %v1449 = vshrl.u32 %v1448, 7
      %v1450 = vsub.s32 %v1447, %v1449
      %v1451 = vrot.slane %v1443, %v1450
      %v1453 = vunpack.c.l.s4 1934713408
      %v1454 = vunpack.c.0.s8 %v1453
      %v1455 = vlaneseq
      %v1456 = vshrl.u32 %v1455, 7
      %v1457 = vsub.s32 %v1454, %v1456
      %v1458 = vrot.slane %v1444, %v1457
      %v1459 = vcombine.low %v1434, %v1442
      %v1460 = vcombine.high %v1434, %v1442
      %v1462 = vunpack.c.l.s4 1934713408
      %v1463 = vunpack.c.0.s8 %v1462
      %v1464 = vlaneseq
      %v1465 = vshrl.u32 %v1464, 7
      %v1466 = vsub.s32 %v1463, %v1465
      %v1467 = vrot.slane %v1459, %v1466
      %v1469 = vunpack.c.l.s4 1934713408
      %v1470 = vunpack.c.0.s8 %v1469
      %v1471 = vlaneseq
      %v1472 = vshrl.u32 %v1471, 7
      %v1473 = vsub.s32 %v1470, %v1472
      %v1474 = vrot.slane %v1460, %v1473
      %v1475 = vcombine.low %v1451, %v1467
      %v1476 = vcombine.high %v1451, %v1467
      %v1477 = vcombine.low %v1458, %v1474
      %v1478 = vcombine.high %v1458, %v1474
      %v1479 = vpack.c.bf16 %v1475, %v1475
      %v1480 = vpack.c.bf16 %v1476, %v1476
      %v1481 = vpack.c.bf16 %v1477, %v1477
      %v1482 = vpack.c.bf16 %v1478, %v1478
      %vm1483 = vcmask 64512
      %v1485 = vsel %vm1483, %v1335, 0
      %v1488 = vsel %vm1483, %v1407, 0
      %1490 = vmatprep.subr.bf16.mxu0 0
      %1491 = vmatpush1.bf16.xpose.msra.mxu0 %v1488
      %1492 = vmatprep.subr.bf16.mxu0 0
      %1493 = vmatpush1.bf16.xpose.msra.mxu0 0
      %1494 = vmatprep.subr.bf16.mxu0 0
      %1495 = vmatpush1.bf16.xpose.msra.mxu0 0
      %1496 = vmatprep.subr.bf16.mxu0 0
      %1497 = vmatpush1.bf16.xpose.msra.mxu0 0
      %1498 = vmatprep.subr.bf16.mxu0 0
      %1499 = vmatpush1.bf16.xpose.msra.mxu0 0
      %1500 = vmatprep.subr.bf16.mxu0 0
      %1501 = vmatpush1.bf16.xpose.msra.mxu0 0
      %1502 = vmatprep.subr.bf16.mxu0 0
      %1503 = vmatpush1.bf16.xpose.msra.mxu0 0
      %1504 = vmatprep.subr.bf16.mxu0 0
      %1505 = vmatpush1.bf16.xpose.msra.mxu0 0
      %1506 = vmatprep.subr.bf16.mxu0 0
      %1507 = vmatpush1.bf16.xpose.msra.mxu0 0
      %1508 = vmatprep.subr.bf16.mxu0 0
      %1509 = vmatpush1.bf16.xpose.msra.mxu0 0
      %1510 = vmatprep.subr.bf16.mxu0 0
      %1511 = vmatpush1.bf16.xpose.msra.mxu0 0
      %1512 = vmatprep.subr.bf16.mxu0 0
      %1513 = vmatpush1.bf16.xpose.msra.mxu0 0
      %1514 = vmatprep.subr.bf16.mxu0 0
      %1515 = vmatpush1.bf16.xpose.msra.mxu0 0
      %1516 = vmatprep.subr.bf16.mxu0 0
      %1517 = vmatpush1.bf16.xpose.msra.mxu0 0
      %1518 = vmatprep.subr.bf16.mxu0 0
      %1519 = vmatpush1.bf16.xpose.msra.mxu0 0
      %1520 = vmatprep.subr.bf16.mxu0 0
      %1521 = vmatpush1.bf16.xpose.msra.mxu0 0
      %1522 = vmatprep.mubr.bf16.mxu0 0
      %1523 = vmatmul.mubr.bf16.gmra.mrb[0].mxu0 %v1485
      %v1524 = vpop.f32.mrb[0].mxu0
      %v1525 = vadd.f32 0.0, %v1524
      %v1526 = vpop.f32.mrb[0].mxu0
      %v1527 = vpop.f32.mrb[0].mxu0
      %v1528 = vpop.f32.mrb[0].mxu0
      %1529 = vdwg.mxu0
      %v1531 = vsel %vm1483, %v1336, 0
      %v1534 = vsel %vm1483, %v1408, 0
      %1536 = vmatprep.subr.bf16.mxu0 0
      %1537 = vmatpush1.bf16.xpose.msra.mxu0 %v1534
      %1538 = vmatprep.subr.bf16.mxu0 0
      %1539 = vmatpush1.bf16.xpose.msra.mxu0 0
      %1540 = vmatprep.subr.bf16.mxu0 0
      %1541 = vmatpush1.bf16.xpose.msra.mxu0 0
      %1542 = vmatprep.subr.bf16.mxu0 0
      %1543 = vmatpush1.bf16.xpose.msra.mxu0 0
      %1544 = vmatprep.subr.bf16.mxu0 0
      %1545 = vmatpush1.bf16.xpose.msra.mxu0 0
      %1546 = vmatprep.subr.bf16.mxu0 0
      %1547 = vmatpush1.bf16.xpose.msra.mxu0 0
      %1548 = vmatprep.subr.bf16.mxu0 0
      %1549 = vmatpush1.bf16.xpose.msra.mxu0 0
      %1550 = vmatprep.subr.bf16.mxu0 0
      %1551 = vmatpush1.bf16.xpose.msra.mxu0 0
      %1552 = vmatprep.subr.bf16.mxu0 0
      %1553 = vmatpush1.bf16.xpose.msra.mxu0 0
      %1554 = vmatprep.subr.bf16.mxu0 0
      %1555 = vmatpush1.bf16.xpose.msra.mxu0 0
      %1556 = vmatprep.subr.bf16.mxu0 0
      %1557 = vmatpush1.bf16.xpose.msra.mxu0 0
      %1558 = vmatprep.subr.bf16.mxu0 0
      %1559 = vmatpush1.bf16.xpose.msra.mxu0 0
      %1560 = vmatprep.subr.bf16.mxu0 0
      %1561 = vmatpush1.bf16.xpose.msra.mxu0 0
      %1562 = vmatprep.subr.bf16.mxu0 0
      %1563 = vmatpush1.bf16.xpose.msra.mxu0 0
      %1564 = vmatprep.subr.bf16.mxu0 0
      %1565 = vmatpush1.bf16.xpose.msra.mxu0 0
      %1566 = vmatprep.subr.bf16.mxu0 0
      %1567 = vmatpush1.bf16.xpose.msra.mxu0 0
      %1568 = vmatprep.mubr.bf16.mxu0 0
      %1569 = vmatmul.mubr.bf16.gmra.mrb[0].mxu0 %v1531
      %v1570 = vpop.f32.mrb[0].mxu0
      %v1571 = vadd.f32 0.0, %v1570
      %v1572 = vpop.f32.mrb[0].mxu0
      %v1573 = vpop.f32.mrb[0].mxu0
      %v1574 = vpop.f32.mrb[0].mxu0
      %1575 = vdwg.mxu0
      %v1577 = vsel %vm1483, %v1337, 0
      %v1580 = vsel %vm1483, %v1409, 0
      %1582 = vmatprep.subr.bf16.mxu0 0
      %1583 = vmatpush1.bf16.xpose.msra.mxu0 %v1580
      %1584 = vmatprep.subr.bf16.mxu0 0
      %1585 = vmatpush1.bf16.xpose.msra.mxu0 0
      %1586 = vmatprep.subr.bf16.mxu0 0
      %1587 = vmatpush1.bf16.xpose.msra.mxu0 0
      %1588 = vmatprep.subr.bf16.mxu0 0
      %1589 = vmatpush1.bf16.xpose.msra.mxu0 0
      %1590 = vmatprep.subr.bf16.mxu0 0
      %1591 = vmatpush1.bf16.xpose.msra.mxu0 0
      %1592 = vmatprep.subr.bf16.mxu0 0
      %1593 = vmatpush1.bf16.xpose.msra.mxu0 0
      %1594 = vmatprep.subr.bf16.mxu0 0
      %1595 = vmatpush1.bf16.xpose.msra.mxu0 0
      %1596 = vmatprep.subr.bf16.mxu0 0
      %1597 = vmatpush1.bf16.xpose.msra.mxu0 0
      %1598 = vmatprep.subr.bf16.mxu0 0
      %1599 = vmatpush1.bf16.xpose.msra.mxu0 0
      %1600 = vmatprep.subr.bf16.mxu0 0
      %1601 = vmatpush1.bf16.xpose.msra.mxu0 0
      %1602 = vmatprep.subr.bf16.mxu0 0
      %1603 = vmatpush1.bf16.xpose.msra.mxu0 0
      %1604 = vmatprep.subr.bf16.mxu0 0
      %1605 = vmatpush1.bf16.xpose.msra.mxu0 0
      %1606 = vmatprep.subr.bf16.mxu0 0
      %1607 = vmatpush1.bf16.xpose.msra.mxu0 0
      %1608 = vmatprep.subr.bf16.mxu0 0
      %1609 = vmatpush1.bf16.xpose.msra.mxu0 0
      %1610 = vmatprep.subr.bf16.mxu0 0
      %1611 = vmatpush1.bf16.xpose.msra.mxu0 0
      %1612 = vmatprep.subr.bf16.mxu0 0
      %1613 = vmatpush1.bf16.xpose.msra.mxu0 0
      %1614 = vmatprep.mubr.bf16.mxu0 0
      %1615 = vmatmul.mubr.bf16.gmra.mrb[0].mxu0 %v1577
      %v1616 = vpop.f32.mrb[0].mxu0
      %v1617 = vadd.f32 0.0, %v1616
      %v1618 = vpop.f32.mrb[0].mxu0
      %v1619 = vpop.f32.mrb[0].mxu0
      %v1620 = vpop.f32.mrb[0].mxu0
      %1621 = vdwg.mxu0
      %v1623 = vsel %vm1483, %v1338, 0
      %v1626 = vsel %vm1483, %v1410, 0
      %1628 = vmatprep.subr.bf16.mxu0 0
      %1629 = vmatpush1.bf16.xpose.msra.mxu0 %v1626
      %1630 = vmatprep.subr.bf16.mxu0 0
      %1631 = vmatpush1.bf16.xpose.msra.mxu0 0
      %1632 = vmatprep.subr.bf16.mxu0 0
      %1633 = vmatpush1.bf16.xpose.msra.mxu0 0
      %1634 = vmatprep.subr.bf16.mxu0 0
      %1635 = vmatpush1.bf16.xpose.msra.mxu0 0
      %1636 = vmatprep.subr.bf16.mxu0 0
      %1637 = vmatpush1.bf16.xpose.msra.mxu0 0
      %1638 = vmatprep.subr.bf16.mxu0 0
      %1639 = vmatpush1.bf16.xpose.msra.mxu0 0
      %1640 = vmatprep.subr.bf16.mxu0 0
      %1641 = vmatpush1.bf16.xpose.msra.mxu0 0
      %1642 = vmatprep.subr.bf16.mxu0 0
      %1643 = vmatpush1.bf16.xpose.msra.mxu0 0
      %1644 = vmatprep.subr.bf16.mxu0 0
      %1645 = vmatpush1.bf16.xpose.msra.mxu0 0
      %1646 = vmatprep.subr.bf16.mxu0 0
      %1647 = vmatpush1.bf16.xpose.msra.mxu0 0
      %1648 = vmatprep.subr.bf16.mxu0 0
      %1649 = vmatpush1.bf16.xpose.msra.mxu0 0
      %1650 = vmatprep.subr.bf16.mxu0 0
      %1651 = vmatpush1.bf16.xpose.msra.mxu0 0
      %1652 = vmatprep.subr.bf16.mxu0 0
      %1653 = vmatpush1.bf16.xpose.msra.mxu0 0
      %1654 = vmatprep.subr.bf16.mxu0 0
      %1655 = vmatpush1.bf16.xpose.msra.mxu0 0
      %1656 = vmatprep.subr.bf16.mxu0 0
      %1657 = vmatpush1.bf16.xpose.msra.mxu0 0
      %1658 = vmatprep.subr.bf16.mxu0 0
      %1659 = vmatpush1.bf16.xpose.msra.mxu0 0
      %1660 = vmatprep.mubr.bf16.mxu0 0
      %1661 = vmatmul.mubr.bf16.gmra.mrb[0].mxu0 %v1623
      %v1662 = vpop.f32.mrb[0].mxu0
      %v1663 = vadd.f32 0.0, %v1662
      %v1664 = vpop.f32.mrb[0].mxu0
      %v1665 = vpop.f32.mrb[0].mxu0
      %v1666 = vpop.f32.mrb[0].mxu0
      %1667 = vdwg.mxu0
      %v1668 = vmul.f32 %v1525, 0.35355338
      %v1669 = vmul.f32 %v1571, 0.35355338
      %v1670 = vmul.f32 %v1617, 0.35355338
      %v1671 = vmul.f32 %v1663, 0.35355338
      %v1672 = vadd.f32 %v1668, %v838
      %v1673 = vadd.f32 %v1669, %v838
      %v1674 = vadd.f32 %v1670, %v838
      %v1675 = vadd.f32 %v1671, %v838
      %v1676 = vsel %vm1483, %v1672, -inf
      %1677 = vmax.xlane.f32.xlu0 %v1676
      %v1678 = vpop.xlane.xlu0 %1677
      %v1679 = vsel %vm1483, %v1673, -inf
      %1680 = vmax.xlane.f32.xlu0 %v1679
      %v1681 = vpop.xlane.xlu0 %1680
      %v1682 = vsel %vm1483, %v1674, -inf
      %1683 = vmax.xlane.f32.xlu0 %v1682
      %v1684 = vpop.xlane.xlu0 %1683
      %v1685 = vsel %vm1483, %v1675, -inf
      %1686 = vmax.xlane.f32.xlu0 %v1685
      %v1687 = vpop.xlane.xlu0 %1686
      %v1688 = vsub.f32 %v1672, %v1678
      %v1689 = vsub.f32 %v1673, %v1681
      %v1690 = vsub.f32 %v1674, %v1684
      %v1691 = vsub.f32 %v1675, %v1687
      %v1692 = vmul.f32 %v1688, 1.442695
      %v1693 = vpow.pop %v1692
      %v1694 = vmul.f32 %v1689, 1.442695
      %v1695 = vpow.pop %v1694
      %v1696 = vmul.f32 %v1690, 1.442695
      %v1697 = vpow.pop %v1696
      %v1698 = vmul.f32 %v1691, 1.442695
      %v1699 = vpow.pop %v1698
      %v1700 = vsel %vm1483, %v1693, 0.0
      %1701 = vadd.xlane.f32.xlu0 %v1700
      %v1702 = vpop.xlane.xlu0 %1701
      %v1703 = vsel %vm1483, %v1695, 0.0
      %1704 = vadd.xlane.f32.xlu0 %v1703
      %v1705 = vpop.xlane.xlu0 %1704
      %v1706 = vsel %vm1483, %v1697, 0.0
      %1707 = vadd.xlane.f32.xlu0 %v1706
      %v1708 = vpop.xlane.xlu0 %1707
      %v1709 = vsel %vm1483, %v1699, 0.0
      %1710 = vadd.xlane.f32.xlu0 %v1709
      %v1711 = vpop.xlane.xlu0 %1710
      %v1712 = vrcp.pop %v1702
      %v1713 = vrcp.pop %v1705
      %v1714 = vrcp.pop %v1708
      %v1715 = vrcp.pop %v1711
      %v1716 = vmul.f32 %v1693, %v1712
      %v1717 = vmul.f32 %v1695, %v1713
      %v1718 = vmul.f32 %v1697, %v1714
      %v1719 = vmul.f32 %v1699, %v1715
      %v1720 = vpack.c.bf16 %v1716, %v1716
      %v1721 = vpack.c.bf16 %v1717, %v1717
      %v1722 = vpack.c.bf16 %v1718, %v1718
      %v1723 = vpack.c.bf16 %v1719, %v1719
      %v1725 = vsel %vm1483, %v1720, 0
      %vm1727 = vcmask 1043456
      %v1729 = vsel %vm1727, %v1479, 0
      %1731 = vmatprep.subr.bf16.mxu0 0
      %1732 = vmatpush1.bf16.msra.mxu0 %v1729
      %1733 = vmatprep.subr.bf16.mxu0 0
      %1734 = vmatpush1.bf16.msra.mxu0 0
      %1735 = vmatprep.subr.bf16.mxu0 0
      %1736 = vmatpush1.bf16.msra.mxu0 0
      %1737 = vmatprep.subr.bf16.mxu0 0
      %1738 = vmatpush1.bf16.msra.mxu0 0
      %1739 = vmatprep.subr.bf16.mxu0 0
      %1740 = vmatpush1.bf16.msra.mxu0 0
      %1741 = vmatprep.subr.bf16.mxu0 0
      %1742 = vmatpush1.bf16.msra.mxu0 0
      %1743 = vmatprep.subr.bf16.mxu0 0
      %1744 = vmatpush1.bf16.msra.mxu0 0
      %1745 = vmatprep.subr.bf16.mxu0 0
      %1746 = vmatpush1.bf16.msra.mxu0 0
      %1747 = vmatprep.subr.bf16.mxu0 0
      %1748 = vmatpush1.bf16.msra.mxu0 0
      %1749 = vmatprep.subr.bf16.mxu0 0
      %1750 = vmatpush1.bf16.msra.mxu0 0
      %1751 = vmatprep.subr.bf16.mxu0 0
      %1752 = vmatpush1.bf16.msra.mxu0 0
      %1753 = vmatprep.subr.bf16.mxu0 0
      %1754 = vmatpush1.bf16.msra.mxu0 0
      %1755 = vmatprep.subr.bf16.mxu0 0
      %1756 = vmatpush1.bf16.msra.mxu0 0
      %1757 = vmatprep.subr.bf16.mxu0 0
      %1758 = vmatpush1.bf16.msra.mxu0 0
      %1759 = vmatprep.subr.bf16.mxu0 0
      %1760 = vmatpush1.bf16.msra.mxu0 0
      %1761 = vmatprep.subr.bf16.mxu0 0
      %1762 = vmatpush1.bf16.msra.mxu0 0
      %1763 = vmatprep.mubr.bf16.mxu0 0
      %1764 = vmatmul.mubr.bf16.gmra.mrb[0].mxu0 %v1725
      %v1765 = vpop.f32.mrb[0].mxu0
      %v1766 = vadd.f32 0.0, %v1765
      %v1767 = vpop.f32.mrb[0].mxu0
      %v1768 = vpop.f32.mrb[0].mxu0
      %v1769 = vpop.f32.mrb[0].mxu0
      %1770 = vdwg.mxu0
      %v1772 = vsel %vm1483, %v1721, 0
      %v1775 = vsel %vm1727, %v1480, 0
      %1777 = vmatprep.subr.bf16.mxu0 0
      %1778 = vmatpush1.bf16.msra.mxu0 %v1775
      %1779 = vmatprep.subr.bf16.mxu0 0
      %1780 = vmatpush1.bf16.msra.mxu0 0
      %1781 = vmatprep.subr.bf16.mxu0 0
      %1782 = vmatpush1.bf16.msra.mxu0 0
      %1783 = vmatprep.subr.bf16.mxu0 0
      %1784 = vmatpush1.bf16.msra.mxu0 0
      %1785 = vmatprep.subr.bf16.mxu0 0
      %1786 = vmatpush1.bf16.msra.mxu0 0
      %1787 = vmatprep.subr.bf16.mxu0 0
      %1788 = vmatpush1.bf16.msra.mxu0 0
      %1789 = vmatprep.subr.bf16.mxu0 0
      %1790 = vmatpush1.bf16.msra.mxu0 0
      %1791 = vmatprep.subr.bf16.mxu0 0
      %1792 = vmatpush1.bf16.msra.mxu0 0
      %1793 = vmatprep.subr.bf16.mxu0 0
      %1794 = vmatpush1.bf16.msra.mxu0 0
      %1795 = vmatprep.subr.bf16.mxu0 0
      %1796 = vmatpush1.bf16.msra.mxu0 0
      %1797 = vmatprep.subr.bf16.mxu0 0
      %1798 = vmatpush1.bf16.msra.mxu0 0
      %1799 = vmatprep.subr.bf16.mxu0 0
      %1800 = vmatpush1.bf16.msra.mxu0 0
      %1801 = vmatprep.subr.bf16.mxu0 0
      %1802 = vmatpush1.bf16.msra.mxu0 0
      %1803 = vmatprep.subr.bf16.mxu0 0
      %1804 = vmatpush1.bf16.msra.mxu0 0
      %1805 = vmatprep.subr.bf16.mxu0 0
      %1806 = vmatpush1.bf16.msra.mxu0 0
      %1807 = vmatprep.subr.bf16.mxu0 0
      %1808 = vmatpush1.bf16.msra.mxu0 0
      %1809 = vmatprep.mubr.bf16.mxu0 0
      %1810 = vmatmul.mubr.bf16.gmra.mrb[0].mxu0 %v1772
      %v1811 = vpop.f32.mrb[0].mxu0
      %v1812 = vadd.f32 0.0, %v1811
      %v1813 = vpop.f32.mrb[0].mxu0
      %v1814 = vpop.f32.mrb[0].mxu0
      %v1815 = vpop.f32.mrb[0].mxu0
      %1816 = vdwg.mxu0
      %v1818 = vsel %vm1483, %v1722, 0
      %v1821 = vsel %vm1727, %v1481, 0
      %1823 = vmatprep.subr.bf16.mxu0 0
      %1824 = vmatpush1.bf16.msra.mxu0 %v1821
      %1825 = vmatprep.subr.bf16.mxu0 0
      %1826 = vmatpush1.bf16.msra.mxu0 0
      %1827 = vmatprep.subr.bf16.mxu0 0
      %1828 = vmatpush1.bf16.msra.mxu0 0
      %1829 = vmatprep.subr.bf16.mxu0 0
      %1830 = vmatpush1.bf16.msra.mxu0 0
      %1831 = vmatprep.subr.bf16.mxu0 0
      %1832 = vmatpush1.bf16.msra.mxu0 0
      %1833 = vmatprep.subr.bf16.mxu0 0
      %1834 = vmatpush1.bf16.msra.mxu0 0
      %1835 = vmatprep.subr.bf16.mxu0 0
      %1836 = vmatpush1.bf16.msra.mxu0 0
      %1837 = vmatprep.subr.bf16.mxu0 0
      %1838 = vmatpush1.bf16.msra.mxu0 0
      %1839 = vmatprep.subr.bf16.mxu0 0
      %1840 = vmatpush1.bf16.msra.mxu0 0
      %1841 = vmatprep.subr.bf16.mxu0 0
      %1842 = vmatpush1.bf16.msra.mxu0 0
      %1843 = vmatprep.subr.bf16.mxu0 0
      %1844 = vmatpush1.bf16.msra.mxu0 0
      %1845 = vmatprep.subr.bf16.mxu0 0
      %1846 = vmatpush1.bf16.msra.mxu0 0
      %1847 = vmatprep.subr.bf16.mxu0 0
      %1848 = vmatpush1.bf16.msra.mxu0 0
      %1849 = vmatprep.subr.bf16.mxu0 0
      %1850 = vmatpush1.bf16.msra.mxu0 0
      %1851 = vmatprep.subr.bf16.mxu0 0
      %1852 = vmatpush1.bf16.msra.mxu0 0
      %1853 = vmatprep.subr.bf16.mxu0 0
      %1854 = vmatpush1.bf16.msra.mxu0 0
      %1855 = vmatprep.mubr.bf16.mxu0 0
      %1856 = vmatmul.mubr.bf16.gmra.mrb[0].mxu0 %v1818
      %v1857 = vpop.f32.mrb[0].mxu0
      %v1858 = vadd.f32 0.0, %v1857
      %v1859 = vpop.f32.mrb[0].mxu0
      %v1860 = vpop.f32.mrb[0].mxu0
      %v1861 = vpop.f32.mrb[0].mxu0
      %1862 = vdwg.mxu0
      %v1864 = vsel %vm1483, %v1723, 0
      %v1867 = vsel %vm1727, %v1482, 0
      %1869 = vmatprep.subr.bf16.mxu0 0
      %1870 = vmatpush1.bf16.msra.mxu0 %v1867
      %1871 = vmatprep.subr.bf16.mxu0 0
      %1872 = vmatpush1.bf16.msra.mxu0 0
      %1873 = vmatprep.subr.bf16.mxu0 0
      %1874 = vmatpush1.bf16.msra.mxu0 0
      %1875 = vmatprep.subr.bf16.mxu0 0
      %1876 = vmatpush1.bf16.msra.mxu0 0
      %1877 = vmatprep.subr.bf16.mxu0 0
      %1878 = vmatpush1.bf16.msra.mxu0 0
      %1879 = vmatprep.subr.bf16.mxu0 0
      %1880 = vmatpush1.bf16.msra.mxu0 0
      %1881 = vmatprep.subr.bf16.mxu0 0
      %1882 = vmatpush1.bf16.msra.mxu0 0
      %1883 = vmatprep.subr.bf16.mxu0 0
      %1884 = vmatpush1.bf16.msra.mxu0 0
      %1885 = vmatprep.subr.bf16.mxu0 0
      %1886 = vmatpush1.bf16.msra.mxu0 0
      %1887 = vmatprep.subr.bf16.mxu0 0
      %1888 = vmatpush1.bf16.msra.mxu0 0
      %1889 = vmatprep.subr.bf16.mxu0 0
      %1890 = vmatpush1.bf16.msra.mxu0 0
      %1891 = vmatprep.subr.bf16.mxu0 0
      %1892 = vmatpush1.bf16.msra.mxu0 0
      %1893 = vmatprep.subr.bf16.mxu0 0
      %1894 = vmatpush1.bf16.msra.mxu0 0
      %1895 = vmatprep.subr.bf16.mxu0 0
      %1896 = vmatpush1.bf16.msra.mxu0 0
      %1897 = vmatprep.subr.bf16.mxu0 0
      %1898 = vmatpush1.bf16.msra.mxu0 0
      %1899 = vmatprep.subr.bf16.mxu0 0
      %1900 = vmatpush1.bf16.msra.mxu0 0
      %1901 = vmatprep.mubr.bf16.mxu0 0
      %1902 = vmatmul.mubr.bf16.gmra.mrb[0].mxu0 %v1864
      %v1903 = vpop.f32.mrb[0].mxu0
      %v1904 = vadd.f32 0.0, %v1903
      %v1905 = vpop.f32.mrb[0].mxu0
      %v1906 = vpop.f32.mrb[0].mxu0
      %v1907 = vpop.f32.mrb[0].mxu0
      %1908 = vdwg.mxu0
      %v1909 = vcombine.low %v1766, %v1858
      %v1910 = vcombine.high %v1766, %v1858
      %v1912 = vunpack.c.l.s4 1983009808
      %v1913 = vunpack.c.0.s8 %v1912
      %v1914 = vlaneseq
      %v1915 = vshrl.u32 %v1914, 7
      %v1916 = vsub.s32 %v1913, %v1915
      %v1917 = vrot.slane %v1909, %v1916
      %v1919 = vunpack.c.l.s4 1983009808
      %v1920 = vunpack.c.0.s8 %v1919
      %v1921 = vlaneseq
      %v1922 = vshrl.u32 %v1921, 7
      %v1923 = vsub.s32 %v1920, %v1922
      %v1924 = vrot.slane %v1910, %v1923
      %v1925 = vcombine.low %v1812, %v1904
      %v1926 = vcombine.high %v1812, %v1904
      %v1928 = vunpack.c.l.s4 1983009808
      %v1929 = vunpack.c.0.s8 %v1928
      %v1930 = vlaneseq
      %v1931 = vshrl.u32 %v1930, 7
      %v1932 = vsub.s32 %v1929, %v1931
      %v1933 = vrot.slane %v1925, %v1932
      %v1935 = vunpack.c.l.s4 1983009808
      %v1936 = vunpack.c.0.s8 %v1935
      %v1937 = vlaneseq
      %v1938 = vshrl.u32 %v1937, 7
      %v1939 = vsub.s32 %v1936, %v1938
      %v1940 = vrot.slane %v1926, %v1939
      %v1941 = vcombine.low %v1917, %v1933
      %v1942 = vcombine.high %v1917, %v1933
      %v1944 = vunpack.c.l.s4 1934713408
      %v1945 = vunpack.c.0.s8 %v1944
      %v1946 = vlaneseq
      %v1947 = vshrl.u32 %v1946, 7
      %v1948 = vsub.s32 %v1945, %v1947
      %v1949 = vrot.slane %v1941, %v1948
      %v1951 = vunpack.c.l.s4 1934713408
      %v1952 = vunpack.c.0.s8 %v1951
      %v1953 = vlaneseq
      %v1954 = vshrl.u32 %v1953, 7
      %v1955 = vsub.s32 %v1952, %v1954
      %v1956 = vrot.slane %v1942, %v1955
      %v1957 = vcombine.low %v1924, %v1940
      %v1958 = vcombine.high %v1924, %v1940
      %v1960 = vunpack.c.l.s4 1934713408
      %v1961 = vunpack.c.0.s8 %v1960
      %v1962 = vlaneseq
      %v1963 = vshrl.u32 %v1962, 7
      %v1964 = vsub.s32 %v1961, %v1963
      %v1965 = vrot.slane %v1957, %v1964
      %v1967 = vunpack.c.l.s4 1934713408
      %v1968 = vunpack.c.0.s8 %v1967
      %v1969 = vlaneseq
      %v1970 = vshrl.u32 %v1969, 7
      %v1971 = vsub.s32 %v1968, %v1970
      %v1972 = vrot.slane %v1958, %v1971
      %v1973 = vcombine.high %v1949, 0.0
      %v1974 = vcombine.high %v1956, 0.0
      %v1975 = vcombine.high %v1965, 0.0
      %v1976 = vcombine.high %v1972, 0.0
      %v1977 = vcombine.low %v1949, %v1956
      %v1979 = vunpack.c.l.s4 1983009808
      %v1980 = vunpack.c.0.s8 %v1979
      %v1981 = vlaneseq
      %v1982 = vshrl.u32 %v1981, 7
      %v1983 = vsub.s32 %v1980, %v1982
      %v1984 = vrot.slane %v1977, %v1983
      %v1985 = vcombine.low %v1973, %v1974
      %v1987 = vunpack.c.l.s4 1983009808
      %v1988 = vunpack.c.0.s8 %v1987
      %v1989 = vlaneseq
      %v1990 = vshrl.u32 %v1989, 7
      %v1991 = vsub.s32 %v1988, %v1990
      %v1992 = vrot.slane %v1985, %v1991
      %v1993 = vcombine.low %v1965, %v1972
      %v1995 = vunpack.c.l.s4 1983009808
      %v1996 = vunpack.c.0.s8 %v1995
      %v1997 = vlaneseq
      %v1998 = vshrl.u32 %v1997, 7
      %v1999 = vsub.s32 %v1996, %v1998
      %v2000 = vrot.slane %v1993, %v1999
      %v2001 = vcombine.low %v1975, %v1976
      %v2003 = vunpack.c.l.s4 1983009808
      %v2004 = vunpack.c.0.s8 %v2003
      %v2005 = vlaneseq
      %v2006 = vshrl.u32 %v2005, 7
      %v2007 = vsub.s32 %v2004, %v2006
      %v2008 = vrot.slane %v2001, %v2007
      %v2009 = vcombine.low %v1984, %v1992
      %v2010 = vcombine.high %v1984, %v1992
      %v2012 = vunpack.c.l.s4 1934713408
      %v2013 = vunpack.c.0.s8 %v2012
      %v2014 = vlaneseq
      %v2015 = vshrl.u32 %v2014, 7
      %v2016 = vsub.s32 %v2013, %v2015
      %v2017 = vrot.slane %v2009, %v2016
      %v2019 = vunpack.c.l.s4 1934713408
      %v2020 = vunpack.c.0.s8 %v2019
      %v2021 = vlaneseq
      %v2022 = vshrl.u32 %v2021, 7
      %v2023 = vsub.s32 %v2020, %v2022
      %v2024 = vrot.slane %v2010, %v2023
      %v2025 = vcombine.low %v2000, %v2008
      %v2026 = vcombine.high %v2000, %v2008
      %v2028 = vunpack.c.l.s4 1934713408
      %v2029 = vunpack.c.0.s8 %v2028
      %v2030 = vlaneseq
      %v2031 = vshrl.u32 %v2030, 7
      %v2032 = vsub.s32 %v2029, %v2031
      %v2033 = vrot.slane %v2025, %v2032
      %v2035 = vunpack.c.l.s4 1934713408
      %v2036 = vunpack.c.0.s8 %v2035
      %v2037 = vlaneseq
      %v2038 = vshrl.u32 %v2037, 7
      %v2039 = vsub.s32 %v2036, %v2038
      %v2040 = vrot.slane %v2026, %v2039
      %v2041 = vcombine.low %v2017, %v2033
      %v2042 = vcombine.high %v2017, %v2033
      %v2043 = vcombine.low %v2024, %v2040
      %v2044 = vcombine.high %v2024, %v2040
      %2046 = vrot.lane.b32.xlu0 %v2042, 8
      %v2047 = vpop.permute.xlu0 %2046
      %2050 = vrot.lane.b32.xlu0 %v2043, 16
      %v2051 = vpop.permute.xlu0 %2050
      %2054 = vrot.lane.b32.xlu0 %v2044, 24
      %v2055 = vpop.permute.xlu0 %2054
      %v2057 = vsel %vm1483, %v2041, %v2047
      %v2058 = vsel %vm787, %v2057, %v2051
      %vm2059 = vcmask 195584
      %v2060 = vsel %vm2059, %v2058, %v2055
      %v2061 = vpack.c.bf16 %v2060, %v2060
      %v2062 = vld [vmem:[%s11] sm:$0xf]
      %v2063 = vld [vmem:[%s11 + $0x4] sm:$0xf]
      %v2064 = vld [vmem:[%s11 + $0x8] sm:$0xf]
      %v2065 = vld [vmem:[%s11 + $0xc] sm:$0xf]
      %v2066 = vld [vmem:[%s12] sm:$0x1]
      %v2068 = vlaneseq
      %v2069 = vshrl.u32 %v2068, 7
      %v2070 = vsub.s32 0, %v2069
      %v2071 = vrot.slane %v2066, %v2070
      %v2077 = vunpack.c.l.b16 %v2062
      %v2078 = vunpack.c.l.b16 %v2063
      %v2079 = vunpack.c.l.b16 %v2064
      %v2080 = vunpack.c.l.b16 %v2065
      %v2081 = vpack.c.b16 %v2078, %v2077
      %v2082 = vpack.c.b16 %v2080, %v2079
      %v2086 = vsel %vm863, %v2061, 0
      %2088 = vmatprep.subr.bf16.mxu0 0
      %2089 = vmatpush1.bf16.msra.mxu0 %v2081
      %2090 = vmatprep.subr.bf16.mxu0 0
      %2091 = vmatpush1.bf16.msra.mxu0 %v2082
      %2092 = vmatprep.subr.bf16.mxu0 0
      %2093 = vmatpush1.bf16.msra.mxu0 0
      %2094 = vmatprep.subr.bf16.mxu0 0
      %2095 = vmatpush1.bf16.msra.mxu0 0
      %2096 = vmatprep.subr.bf16.mxu0 0
      %2097 = vmatpush1.bf16.msra.mxu0 0
      %2098 = vmatprep.subr.bf16.mxu0 0
      %2099 = vmatpush1.bf16.msra.mxu0 0
      %2100 = vmatprep.subr.bf16.mxu0 0
      %2101 = vmatpush1.bf16.msra.mxu0 0
      %2102 = vmatprep.subr.bf16.mxu0 0
      %2103 = vmatpush1.bf16.msra.mxu0 0
      %2104 = vmatprep.subr.bf16.mxu0 0
      %2105 = vmatpush1.bf16.msra.mxu0 0
      %2106 = vmatprep.subr.bf16.mxu0 0
      %2107 = vmatpush1.bf16.msra.mxu0 0
      %2108 = vmatprep.subr.bf16.mxu0 0
      %2109 = vmatpush1.bf16.msra.mxu0 0
      %2110 = vmatprep.subr.bf16.mxu0 0
      %2111 = vmatpush1.bf16.msra.mxu0 0
      %2112 = vmatprep.subr.bf16.mxu0 0
      %2113 = vmatpush1.bf16.msra.mxu0 0
      %2114 = vmatprep.subr.bf16.mxu0 0
      %2115 = vmatpush1.bf16.msra.mxu0 0
      %2116 = vmatprep.subr.bf16.mxu0 0
      %2117 = vmatpush1.bf16.msra.mxu0 0
      %2118 = vmatprep.subr.bf16.mxu0 0
      %2119 = vmatpush1.bf16.msra.mxu0 0
      %2120 = vmatprep.mubr.bf16.mxu0 0
      %2121 = vmatmul.mubr.bf16.gmra.mrb[0].mxu0 %v2086
      %v2122 = vpop.f32.mrb[0].mxu0
      %v2123 = vadd.f32 %v2071, %v2122
      %v2124 = vpop.f32.mrb[0].mxu0
      %v2125 = vpop.f32.mrb[0].mxu0
      %v2126 = vpop.f32.mrb[0].mxu0
      %2127 = vdwg.mxu0
      %v2128 = vadd.f32 %v832, %v2123
      %v2129 = vld [vmem:[%s17] sm:$0x1]
      %v2130 = vld [vmem:[%s18] sm:$0x1]
      %v2131 = vsel %vm863, %v2128, 0.0
      %2132 = vadd.xlane.f32.xlu0 %v2131
      %v2133 = vpop.xlane.xlu0 %2132
      %v2134 = vrcp.pop 32.0
      %v2135 = vmul.f32 %v2133, %v2134
      %v2136 = vsub.f32 %v2128, %v2135
      %v2137 = vmul.f32 %v2136, %v2136
      %v2138 = vsel %vm863, %v2137, 0.0
      %2139 = vadd.xlane.f32.xlu0 %v2138
      %v2140 = vpop.xlane.xlu0 %2139
      %v2141 = vmul.f32 %v2140, %v2134
      %v2142 = vadd.f32 %v2141, 1e-05
      %v2143 = vrsqrt.pop %v2142
      %v2144 = vmul.f32 %v2136, %v2143
      %v2146 = vlaneseq
      %v2147 = vshrl.u32 %v2146, 7
      %v2148 = vsub.s32 0, %v2147
      %v2149 = vrot.slane %v2129, %v2148
      %v2151 = vmul.f32 %v2144, %v2149
      %v2153 = vlaneseq
      %v2154 = vshrl.u32 %v2153, 7
      %v2155 = vsub.s32 0, %v2154
      %v2156 = vrot.slane %v2130, %v2155
      %v2158 = vadd.f32 %v2151, %v2156
      %v2159 = vpack.c.bf16 %v2158, %v2158
      %v2160 = vld [vmem:[%s13] sm:$0xf]
      %v2161 = vld [vmem:[%s13 + $0x4] sm:$0xf]
      %v2162 = vld [vmem:[%s13 + $0x8] sm:$0xf]
      %v2163 = vld [vmem:[%s13 + $0xc] sm:$0xf]
      %v2164 = vld [vmem:[%s14] sm:$0x1]
      %v2166 = vlaneseq
      %v2167 = vshrl.u32 %v2166, 7
      %v2168 = vsub.s32 0, %v2167
      %v2169 = vrot.slane %v2164, %v2168
      %v2175 = vunpack.c.l.b16 %v2160
      %v2176 = vunpack.c.l.b16 %v2161
      %v2177 = vunpack.c.l.b16 %v2162
      %v2178 = vunpack.c.l.b16 %v2163
      %v2179 = vpack.c.b16 %v2176, %v2175
      %v2180 = vpack.c.b16 %v2178, %v2177
      %v2184 = vsel %vm863, %v2159, 0
      %2186 = vmatprep.subr.bf16.mxu0 0
      %2187 = vmatpush1.bf16.msra.mxu0 %v2179
      %2188 = vmatprep.subr.bf16.mxu0 0
      %2189 = vmatpush1.bf16.msra.mxu0 %v2180
      %2190 = vmatprep.subr.bf16.mxu0 0
      %2191 = vmatpush1.bf16.msra.mxu0 0
      %2192 = vmatprep.subr.bf16.mxu0 0
      %2193 = vmatpush1.bf16.msra.mxu0 0
      %2194 = vmatprep.subr.bf16.mxu0 0
      %2195 = vmatpush1.bf16.msra.mxu0 0
      %2196 = vmatprep.subr.bf16.mxu0 0
      %2197 = vmatpush1.bf16.msra.mxu0 0
      %2198 = vmatprep.subr.bf16.mxu0 0
      %2199 = vmatpush1.bf16.msra.mxu0 0
      %2200 = vmatprep.subr.bf16.mxu0 0
      %2201 = vmatpush1.bf16.msra.mxu0 0
      %2202 = vmatprep.subr.bf16.mxu0 0
      %2203 = vmatpush1.bf16.msra.mxu0 0
      %2204 = vmatprep.subr.bf16.mxu0 0
      %2205 = vmatpush1.bf16.msra.mxu0 0
      %2206 = vmatprep.subr.bf16.mxu0 0
      %2207 = vmatpush1.bf16.msra.mxu0 0
      %2208 = vmatprep.subr.bf16.mxu0 0
      %2209 = vmatpush1.bf16.msra.mxu0 0
      %2210 = vmatprep.subr.bf16.mxu0 0
      %2211 = vmatpush1.bf16.msra.mxu0 0
      %2212 = vmatprep.subr.bf16.mxu0 0
      %2213 = vmatpush1.bf16.msra.mxu0 0
      %2214 = vmatprep.subr.bf16.mxu0 0
      %2215 = vmatpush1.bf16.msra.mxu0 0
      %2216 = vmatprep.subr.bf16.mxu0 0
      %2217 = vmatpush1.bf16.msra.mxu0 0
      %2218 = vmatprep.mubr.bf16.mxu0 0
      %2219 = vmatmul.mubr.bf16.gmra.mrb[0].mxu0 %v2184
      %v2220 = vpop.f32.mrb[0].mxu0
      %v2221 = vadd.f32 %v2169, %v2220
      %v2222 = vpop.f32.mrb[0].mxu0
      %v2223 = vpop.f32.mrb[0].mxu0
      %v2224 = vpop.f32.mrb[0].mxu0
      %2225 = vdwg.mxu0
      %v2226 = vmax.f32 %v2221, 0.0
      %v2227 = vpack.c.bf16 %v2226, %v2226
      %v2228 = vld [vmem:[%s15] sm:$0xf]
      %v2229 = vld [vmem:[%s15 + $0x4] sm:$0xf]
      %v2230 = vld [vmem:[%s15 + $0x8] sm:$0xf]
      %v2231 = vld [vmem:[%s15 + $0xc] sm:$0xf]
      %v2232 = vld [vmem:[%s15 + $0x10] sm:$0xf]
      %v2233 = vld [vmem:[%s15 + $0x14] sm:$0xf]
      %v2234 = vld [vmem:[%s15 + $0x18] sm:$0xf]
      %v2235 = vld [vmem:[%s15 + $0x1c] sm:$0xf]
      %v2236 = vld [vmem:[%s16] sm:$0x1]
      %v2238 = vlaneseq
      %v2239 = vshrl.u32 %v2238, 7
      %v2240 = vsub.s32 0, %v2239
      %v2241 = vrot.slane %v2236, %v2240
      %v2251 = vunpack.c.l.b16 %v2228
      %v2252 = vunpack.c.l.b16 %v2229
      %v2253 = vunpack.c.l.b16 %v2230
      %v2254 = vunpack.c.l.b16 %v2231
      %v2255 = vunpack.c.l.b16 %v2232
      %v2256 = vunpack.c.l.b16 %v2233
      %v2257 = vunpack.c.l.b16 %v2234
      %v2258 = vunpack.c.l.b16 %v2235
      %v2259 = vpack.c.b16 %v2252, %v2251
      %v2260 = vpack.c.b16 %v2254, %v2253
      %v2261 = vpack.c.b16 %v2256, %v2255
      %v2262 = vpack.c.b16 %v2258, %v2257
      %vm2267 = vcmask 523264
      %v2269 = vsel %vm2267, %v2227, 0
      %2271 = vmatprep.subr.bf16.mxu0 0
      %2272 = vmatpush1.bf16.msra.mxu0 %v2259
      %2273 = vmatprep.subr.bf16.mxu0 0
      %2274 = vmatpush1.bf16.msra.mxu0 %v2260
      %2275 = vmatprep.subr.bf16.mxu0 0
      %2276 = vmatpush1.bf16.msra.mxu0 %v2261
      %2277 = vmatprep.subr.bf16.mxu0 0
      %2278 = vmatpush1.bf16.msra.mxu0 %v2262
      %2279 = vmatprep.subr.bf16.mxu0 0
      %2280 = vmatpush1.bf16.msra.mxu0 0
      %2281 = vmatprep.subr.bf16.mxu0 0
      %2282 = vmatpush1.bf16.msra.mxu0 0
      %2283 = vmatprep.subr.bf16.mxu0 0
      %2284 = vmatpush1.bf16.msra.mxu0 0
      %2285 = vmatprep.subr.bf16.mxu0 0
      %2286 = vmatpush1.bf16.msra.mxu0 0
      %2287 = vmatprep.subr.bf16.mxu0 0
      %2288 = vmatpush1.bf16.msra.mxu0 0
      %2289 = vmatprep.subr.bf16.mxu0 0
      %2290 = vmatpush1.bf16.msra.mxu0 0
      %2291 = vmatprep.subr.bf16.mxu0 0
      %2292 = vmatpush1.bf16.msra.mxu0 0
      %2293 = vmatprep.subr.bf16.mxu0 0
      %2294 = vmatpush1.bf16.msra.mxu0 0
      %2295 = vmatprep.subr.bf16.mxu0 0
      %2296 = vmatpush1.bf16.msra.mxu0 0
      %2297 = vmatprep.subr.bf16.mxu0 0
      %2298 = vmatpush1.bf16.msra.mxu0 0
      %2299 = vmatprep.subr.bf16.mxu0 0
      %2300 = vmatpush1.bf16.msra.mxu0 0
      %2301 = vmatprep.subr.bf16.mxu0 0
      %2302 = vmatpush1.bf16.msra.mxu0 0
      %2303 = vmatprep.mubr.bf16.mxu0 0
      %2304 = vmatmul.mubr.bf16.gmra.mrb[0].mxu0 %v2269
      %v2305 = vpop.f32.mrb[0].mxu0
      %v2306 = vadd.f32 %v2241, %v2305
      %v2307 = vpop.f32.mrb[0].mxu0
      %v2308 = vpop.f32.mrb[0].mxu0
      %v2309 = vpop.f32.mrb[0].mxu0
      %2310 = vdwg.mxu0
      %v2311 = vadd.f32 %v2158, %v2306
      %v2312 = vld [vmem:[%s19] sm:$0x1]
      %v2313 = vld [vmem:[%s20] sm:$0x1]
      %v2314 = vsel %vm863, %v2311, 0.0
      %2315 = vadd.xlane.f32.xlu0 %v2314
      %v2316 = vpop.xlane.xlu0 %2315
      %v2317 = vmul.f32 %v2316, %v2134
      %v2318 = vsub.f32 %v2311, %v2317
      %v2319 = vmul.f32 %v2318, %v2318
      %v2320 = vsel %vm863, %v2319, 0.0
      %2321 = vadd.xlane.f32.xlu0 %v2320
      %v2322 = vpop.xlane.xlu0 %2321
      %v2323 = vmul.f32 %v2322, %v2134
      %v2324 = vadd.f32 %v2323, 1e-05
      %v2325 = vrsqrt.pop %v2324
      %v2326 = vmul.f32 %v2318, %v2325
      %v2328 = vlaneseq
      %v2329 = vshrl.u32 %v2328, 7
      %v2330 = vsub.s32 0, %v2329
      %v2331 = vrot.slane %v2312, %v2330
      %v2333 = vmul.f32 %v2326, %v2331
      %v2335 = vlaneseq
      %v2336 = vshrl.u32 %v2335, 7
      %v2337 = vsub.s32 0, %v2336
      %v2338 = vrot.slane %v2313, %v2337
      %v2340 = vadd.f32 %v2333, %v2338
      %v2341 = vpack.c.bf16 %v2340, %v2340
      %s2342 = scalar_lea.vmem %s5, 16
      %v2343 = vld [vmem:[%s2342] sm:$0xf]
      %v2344 = vld [vmem:[%s2342 + $0x4] sm:$0xf]
      %v2345 = vld [vmem:[%s2342 + $0x8] sm:$0xf]
      %v2346 = vld [vmem:[%s2342 + $0xc] sm:$0xf]
      %s2347 = scalar_lea.vmem %s6, 1
      %v2348 = vld [vmem:[%s2347] sm:$0x1]
      %v2350 = vlaneseq
      %v2351 = vshrl.u32 %v2350, 7
      %v2352 = vsub.s32 0, %v2351
      %v2353 = vrot.slane %v2348, %v2352
      %v2359 = vunpack.c.l.b16 %v2343
      %v2360 = vunpack.c.l.b16 %v2344
      %v2361 = vunpack.c.l.b16 %v2345
      %v2362 = vunpack.c.l.b16 %v2346
      %v2363 = vpack.c.b16 %v2360, %v2359
      %v2364 = vpack.c.b16 %v2362, %v2361
      %v2368 = vsel %vm863, %v2341, 0
      %2370 = vmatprep.subr.bf16.mxu0 0
      %2371 = vmatpush1.bf16.msra.mxu0 %v2363
      %2372 = vmatprep.subr.bf16.mxu0 0
      %2373 = vmatpush1.bf16.msra.mxu0 %v2364
      %2374 = vmatprep.subr.bf16.mxu0 0
      %2375 = vmatpush1.bf16.msra.mxu0 0
      %2376 = vmatprep.subr.bf16.mxu0 0
      %2377 = vmatpush1.bf16.msra.mxu0 0
      %2378 = vmatprep.subr.bf16.mxu0 0
      %2379 = vmatpush1.bf16.msra.mxu0 0
      %2380 = vmatprep.subr.bf16.mxu0 0
      %2381 = vmatpush1.bf16.msra.mxu0 0
      %2382 = vmatprep.subr.bf16.mxu0 0
      %2383 = vmatpush1.bf16.msra.mxu0 0
      %2384 = vmatprep.subr.bf16.mxu0 0
      %2385 = vmatpush1.bf16.msra.mxu0 0
      %2386 = vmatprep.subr.bf16.mxu0 0
      %2387 = vmatpush1.bf16.msra.mxu0 0
      %2388 = vmatprep.subr.bf16.mxu0 0
      %2389 = vmatpush1.bf16.msra.mxu0 0
      %2390 = vmatprep.subr.bf16.mxu0 0
      %2391 = vmatpush1.bf16.msra.mxu0 0
      %2392 = vmatprep.subr.bf16.mxu0 0
      %2393 = vmatpush1.bf16.msra.mxu0 0
      %2394 = vmatprep.subr.bf16.mxu0 0
      %2395 = vmatpush1.bf16.msra.mxu0 0
      %2396 = vmatprep.subr.bf16.mxu0 0
      %2397 = vmatpush1.bf16.msra.mxu0 0
      %2398 = vmatprep.subr.bf16.mxu0 0
      %2399 = vmatpush1.bf16.msra.mxu0 0
      %2400 = vmatprep.subr.bf16.mxu0 0
      %2401 = vmatpush1.bf16.msra.mxu0 0
      %2402 = vmatprep.mubr.bf16.mxu0 0
      %2403 = vmatmul.mubr.bf16.gmra.mrb[0].mxu0 %v2368
      %v2404 = vpop.f32.mrb[0].mxu0
      %v2405 = vadd.f32 %v2353, %v2404
      %v2406 = vpop.f32.mrb[0].mxu0
      %v2407 = vpop.f32.mrb[0].mxu0
      %v2408 = vpop.f32.mrb[0].mxu0
      %2409 = vdwg.mxu0
      %2411 = vrot.lane.b32.xlu0 %v2405, 120
      %v2412 = vpop.permute.xlu0 %2411
      %2414 = vrot.lane.b32.xlu0 %v2405, 112
      %v2415 = vpop.permute.xlu0 %2414
      %2417 = vrot.lane.b32.xlu0 %v2405, 104
      %v2418 = vpop.permute.xlu0 %2417
      %v2420 = vcombine.low %v2405, %v2415
      %v2421 = vcombine.high %v2405, %v2415
      %v2423 = vunpack.c.l.s4 1983009808
      %v2424 = vunpack.c.0.s8 %v2423
      %v2425 = vlaneseq
      %v2426 = vshrl.u32 %v2425, 7
      %v2427 = vsub.s32 %v2424, %v2426
      %v2428 = vrot.slane %v2420, %v2427
      %v2430 = vunpack.c.l.s4 1983009808
      %v2431 = vunpack.c.0.s8 %v2430
      %v2432 = vlaneseq
      %v2433 = vshrl.u32 %v2432, 7
      %v2434 = vsub.s32 %v2431, %v2433
      %v2435 = vrot.slane %v2421, %v2434
      %v2436 = vcombine.low %v2412, %v2418
      %v2437 = vcombine.high %v2412, %v2418
      %v2439 = vunpack.c.l.s4 1983009808
      %v2440 = vunpack.c.0.s8 %v2439
      %v2441 = vlaneseq
      %v2442 = vshrl.u32 %v2441, 7
      %v2443 = vsub.s32 %v2440, %v2442
      %v2444 = vrot.slane %v2436, %v2443
      %v2446 = vunpack.c.l.s4 1983009808
      %v2447 = vunpack.c.0.s8 %v2446
      %v2448 = vlaneseq
      %v2449 = vshrl.u32 %v2448, 7
      %v2450 = vsub.s32 %v2447, %v2449
      %v2451 = vrot.slane %v2437, %v2450
      %v2452 = vcombine.low %v2428, %v2444
      %v2453 = vcombine.high %v2428, %v2444
      %v2455 = vunpack.c.l.s4 1934713408
      %v2456 = vunpack.c.0.s8 %v2455
      %v2457 = vlaneseq
      %v2458 = vshrl.u32 %v2457, 7
      %v2459 = vsub.s32 %v2456, %v2458
      %v2460 = vrot.slane %v2452, %v2459
      %v2462 = vunpack.c.l.s4 1934713408
      %v2463 = vunpack.c.0.s8 %v2462
      %v2464 = vlaneseq
      %v2465 = vshrl.u32 %v2464, 7
      %v2466 = vsub.s32 %v2463, %v2465
      %v2467 = vrot.slane %v2453, %v2466
      %v2468 = vcombine.low %v2435, %v2451
      %v2469 = vcombine.high %v2435, %v2451
      %v2471 = vunpack.c.l.s4 1934713408
      %v2472 = vunpack.c.0.s8 %v2471
      %v2473 = vlaneseq
      %v2474 = vshrl.u32 %v2473, 7
      %v2475 = vsub.s32 %v2472, %v2474
      %v2476 = vrot.slane %v2468, %v2475
      %v2478 = vunpack.c.l.s4 1934713408
      %v2479 = vunpack.c.0.s8 %v2478
      %v2480 = vlaneseq
      %v2481 = vshrl.u32 %v2480, 7
      %v2482 = vsub.s32 %v2479, %v2481
      %v2483 = vrot.slane %v2469, %v2482
      %v2484 = vcombine.high %v2460, 0.0
      %v2485 = vcombine.high %v2467, 0.0
      %v2486 = vcombine.high %v2476, 0.0
      %v2487 = vcombine.high %v2483, 0.0
      %s2488 = scalar_lea.vmem %s7, 16
      %v2489 = vld [vmem:[%s2488] sm:$0xf]
      %v2490 = vld [vmem:[%s2488 + $0x4] sm:$0xf]
      %v2491 = vld [vmem:[%s2488 + $0x8] sm:$0xf]
      %v2492 = vld [vmem:[%s2488 + $0xc] sm:$0xf]
      %s2493 = scalar_lea.vmem %s8, 1
      %v2494 = vld [vmem:[%s2493] sm:$0x1]
      %v2496 = vlaneseq
      %v2497 = vshrl.u32 %v2496, 7
      %v2498 = vsub.s32 0, %v2497
      %v2499 = vrot.slane %v2494, %v2498
      %v2505 = vunpack.c.l.b16 %v2489
      %v2506 = vunpack.c.l.b16 %v2490
      %v2507 = vunpack.c.l.b16 %v2491
      %v2508 = vunpack.c.l.b16 %v2492
      %v2509 = vpack.c.b16 %v2506, %v2505
      %v2510 = vpack.c.b16 %v2508, %v2507
      %2513 = vmatprep.subr.bf16.mxu0 0
      %2514 = vmatpush1.bf16.msra.mxu0 %v2509
      %2515 = vmatprep.subr.bf16.mxu0 0
      %2516 = vmatpush1.bf16.msra.mxu0 %v2510
      %2517 = vmatprep.subr.bf16.mxu0 0
      %2518 = vmatpush1.bf16.msra.mxu0 0
      %2519 = vmatprep.subr.bf16.mxu0 0
      %2520 = vmatpush1.bf16.msra.mxu0 0
      %2521 = vmatprep.subr.bf16.mxu0 0
      %2522 = vmatpush1.bf16.msra.mxu0 0
      %2523 = vmatprep.subr.bf16.mxu0 0
      %2524 = vmatpush1.bf16.msra.mxu0 0
      %2525 = vmatprep.subr.bf16.mxu0 0
      %2526 = vmatpush1.bf16.msra.mxu0 0
      %2527 = vmatprep.subr.bf16.mxu0 0
      %2528 = vmatpush1.bf16.msra.mxu0 0
      %2529 = vmatprep.subr.bf16.mxu0 0
      %2530 = vmatpush1.bf16.msra.mxu0 0
      %2531 = vmatprep.subr.bf16.mxu0 0
      %2532 = vmatpush1.bf16.msra.mxu0 0
      %2533 = vmatprep.subr.bf16.mxu0 0
      %2534 = vmatpush1.bf16.msra.mxu0 0
      %2535 = vmatprep.subr.bf16.mxu0 0
      %2536 = vmatpush1.bf16.msra.mxu0 0
      %2537 = vmatprep.subr.bf16.mxu0 0
      %2538 = vmatpush1.bf16.msra.mxu0 0
      %2539 = vmatprep.subr.bf16.mxu0 0
      %2540 = vmatpush1.bf16.msra.mxu0 0
      %2541 = vmatprep.subr.bf16.mxu0 0
      %2542 = vmatpush1.bf16.msra.mxu0 0
      %2543 = vmatprep.subr.bf16.mxu0 0
      %2544 = vmatpush1.bf16.msra.mxu0 0
      %2545 = vmatprep.mubr.bf16.mxu0 0
      %2546 = vmatmul.mubr.bf16.gmra.mrb[0].mxu0 %v2368
      %v2547 = vpop.f32.mrb[0].mxu0
      %v2548 = vadd.f32 %v2499, %v2547
      %v2549 = vpop.f32.mrb[0].mxu0
      %v2550 = vpop.f32.mrb[0].mxu0
      %v2551 = vpop.f32.mrb[0].mxu0
      %2552 = vdwg.mxu0
      %2554 = vrot.lane.b32.xlu0 %v2548, 120
      %v2555 = vpop.permute.xlu0 %2554
      %2557 = vrot.lane.b32.xlu0 %v2548, 112
      %v2558 = vpop.permute.xlu0 %2557
      %2560 = vrot.lane.b32.xlu0 %v2548, 104
      %v2561 = vpop.permute.xlu0 %2560
      %v2563 = vcombine.low %v2548, %v2558
      %v2564 = vcombine.high %v2548, %v2558
      %v2566 = vunpack.c.l.s4 1983009808
      %v2567 = vunpack.c.0.s8 %v2566
      %v2568 = vlaneseq
      %v2569 = vshrl.u32 %v2568, 7
      %v2570 = vsub.s32 %v2567, %v2569
      %v2571 = vrot.slane %v2563, %v2570
      %v2573 = vunpack.c.l.s4 1983009808
      %v2574 = vunpack.c.0.s8 %v2573
      %v2575 = vlaneseq
      %v2576 = vshrl.u32 %v2575, 7
      %v2577 = vsub.s32 %v2574, %v2576
      %v2578 = vrot.slane %v2564, %v2577
      %v2579 = vcombine.low %v2555, %v2561
      %v2580 = vcombine.high %v2555, %v2561
      %v2582 = vunpack.c.l.s4 1983009808
      %v2583 = vunpack.c.0.s8 %v2582
      %v2584 = vlaneseq
      %v2585 = vshrl.u32 %v2584, 7
      %v2586 = vsub.s32 %v2583, %v2585
      %v2587 = vrot.slane %v2579, %v2586
      %v2589 = vunpack.c.l.s4 1983009808
      %v2590 = vunpack.c.0.s8 %v2589
      %v2591 = vlaneseq
      %v2592 = vshrl.u32 %v2591, 7
      %v2593 = vsub.s32 %v2590, %v2592
      %v2594 = vrot.slane %v2580, %v2593
      %v2595 = vcombine.low %v2571, %v2587
      %v2596 = vcombine.high %v2571, %v2587
      %v2598 = vunpack.c.l.s4 1934713408
      %v2599 = vunpack.c.0.s8 %v2598
      %v2600 = vlaneseq
      %v2601 = vshrl.u32 %v2600, 7
      %v2602 = vsub.s32 %v2599, %v2601
      %v2603 = vrot.slane %v2595, %v2602
      %v2605 = vunpack.c.l.s4 1934713408
      %v2606 = vunpack.c.0.s8 %v2605
      %v2607 = vlaneseq
      %v2608 = vshrl.u32 %v2607, 7
      %v2609 = vsub.s32 %v2606, %v2608
      %v2610 = vrot.slane %v2596, %v2609
      %v2611 = vcombine.low %v2578, %v2594
      %v2612 = vcombine.high %v2578, %v2594
      %v2614 = vunpack.c.l.s4 1934713408
      %v2615 = vunpack.c.0.s8 %v2614
      %v2616 = vlaneseq
      %v2617 = vshrl.u32 %v2616, 7
      %v2618 = vsub.s32 %v2615, %v2617
      %v2619 = vrot.slane %v2611, %v2618
      %v2621 = vunpack.c.l.s4 1934713408
      %v2622 = vunpack.c.0.s8 %v2621
      %v2623 = vlaneseq
      %v2624 = vshrl.u32 %v2623, 7
      %v2625 = vsub.s32 %v2622, %v2624
      %v2626 = vrot.slane %v2612, %v2625
      %v2627 = vcombine.high %v2603, 0.0
      %v2628 = vcombine.high %v2610, 0.0
      %v2629 = vcombine.high %v2619, 0.0
      %v2630 = vcombine.high %v2626, 0.0
      %s2631 = scalar_lea.vmem %s9, 16
      %v2632 = vld [vmem:[%s2631] sm:$0xf]
      %v2633 = vld [vmem:[%s2631 + $0x4] sm:$0xf]
      %v2634 = vld [vmem:[%s2631 + $0x8] sm:$0xf]
      %v2635 = vld [vmem:[%s2631 + $0xc] sm:$0xf]
      %s2636 = scalar_lea.vmem %s10, 1
      %v2637 = vld [vmem:[%s2636] sm:$0x1]
      %v2639 = vlaneseq
      %v2640 = vshrl.u32 %v2639, 7
      %v2641 = vsub.s32 0, %v2640
      %v2642 = vrot.slane %v2637, %v2641
      %v2648 = vunpack.c.l.b16 %v2632
      %v2649 = vunpack.c.l.b16 %v2633
      %v2650 = vunpack.c.l.b16 %v2634
      %v2651 = vunpack.c.l.b16 %v2635
      %v2652 = vpack.c.b16 %v2649, %v2648
      %v2653 = vpack.c.b16 %v2651, %v2650
      %2656 = vmatprep.subr.bf16.mxu0 0
      %2657 = vmatpush1.bf16.msra.mxu0 %v2652
      %2658 = vmatprep.subr.bf16.mxu0 0
      %2659 = vmatpush1.bf16.msra.mxu0 %v2653
      %2660 = vmatprep.subr.bf16.mxu0 0
      %2661 = vmatpush1.bf16.msra.mxu0 0
      %2662 = vmatprep.subr.bf16.mxu0 0
      %2663 = vmatpush1.bf16.msra.mxu0 0
      %2664 = vmatprep.subr.bf16.mxu0 0
      %2665 = vmatpush1.bf16.msra.mxu0 0
      %2666 = vmatprep.subr.bf16.mxu0 0
      %2667 = vmatpush1.bf16.msra.mxu0 0
      %2668 = vmatprep.subr.bf16.mxu0 0
      %2669 = vmatpush1.bf16.msra.mxu0 0
      %2670 = vmatprep.subr.bf16.mxu0 0
      %2671 = vmatpush1.bf16.msra.mxu0 0
      %2672 = vmatprep.subr.bf16.mxu0 0
      %2673 = vmatpush1.bf16.msra.mxu0 0
      %2674 = vmatprep.subr.bf16.mxu0 0
      %2675 = vmatpush1.bf16.msra.mxu0 0
      %2676 = vmatprep.subr.bf16.mxu0 0
      %2677 = vmatpush1.bf16.msra.mxu0 0
      %2678 = vmatprep.subr.bf16.mxu0 0
      %2679 = vmatpush1.bf16.msra.mxu0 0
      %2680 = vmatprep.subr.bf16.mxu0 0
      %2681 = vmatpush1.bf16.msra.mxu0 0
      %2682 = vmatprep.subr.bf16.mxu0 0
      %2683 = vmatpush1.bf16.msra.mxu0 0
      %2684 = vmatprep.subr.bf16.mxu0 0
      %2685 = vmatpush1.bf16.msra.mxu0 0
      %2686 = vmatprep.subr.bf16.mxu0 0
      %2687 = vmatpush1.bf16.msra.mxu0 0
      %2688 = vmatprep.mubr.bf16.mxu0 0
      %2689 = vmatmul.mubr.bf16.gmra.mrb[0].mxu0 %v2368
      %v2690 = vpop.f32.mrb[0].mxu0
      %v2691 = vadd.f32 %v2642, %v2690
      %v2692 = vpop.f32.mrb[0].mxu0
      %v2693 = vpop.f32.mrb[0].mxu0
      %v2694 = vpop.f32.mrb[0].mxu0
      %2695 = vdwg.mxu0
      %2697 = vrot.lane.b32.xlu0 %v2691, 120
      %v2698 = vpop.permute.xlu0 %2697
      %2700 = vrot.lane.b32.xlu0 %v2691, 112
      %v2701 = vpop.permute.xlu0 %2700
      %2703 = vrot.lane.b32.xlu0 %v2691, 104
      %v2704 = vpop.permute.xlu0 %2703
      %v2706 = vcombine.low %v2691, %v2701
      %v2707 = vcombine.high %v2691, %v2701
      %v2709 = vunpack.c.l.s4 1983009808
      %v2710 = vunpack.c.0.s8 %v2709
      %v2711 = vlaneseq
      %v2712 = vshrl.u32 %v2711, 7
      %v2713 = vsub.s32 %v2710, %v2712
      %v2714 = vrot.slane %v2706, %v2713
      %v2716 = vunpack.c.l.s4 1983009808
      %v2717 = vunpack.c.0.s8 %v2716
      %v2718 = vlaneseq
      %v2719 = vshrl.u32 %v2718, 7
      %v2720 = vsub.s32 %v2717, %v2719
      %v2721 = vrot.slane %v2707, %v2720
      %v2722 = vcombine.low %v2698, %v2704
      %v2723 = vcombine.high %v2698, %v2704
      %v2725 = vunpack.c.l.s4 1983009808
      %v2726 = vunpack.c.0.s8 %v2725
      %v2727 = vlaneseq
      %v2728 = vshrl.u32 %v2727, 7
      %v2729 = vsub.s32 %v2726, %v2728
      %v2730 = vrot.slane %v2722, %v2729
      %v2732 = vunpack.c.l.s4 1983009808
      %v2733 = vunpack.c.0.s8 %v2732
      %v2734 = vlaneseq
      %v2735 = vshrl.u32 %v2734, 7
      %v2736 = vsub.s32 %v2733, %v2735
      %v2737 = vrot.slane %v2723, %v2736
      %v2738 = vcombine.low %v2714, %v2730
      %v2739 = vcombine.high %v2714, %v2730
      %v2741 = vunpack.c.l.s4 1934713408
      %v2742 = vunpack.c.0.s8 %v2741
      %v2743 = vlaneseq
      %v2744 = vshrl.u32 %v2743, 7
      %v2745 = vsub.s32 %v2742, %v2744
      %v2746 = vrot.slane %v2738, %v2745
      %v2748 = vunpack.c.l.s4 1934713408
      %v2749 = vunpack.c.0.s8 %v2748
      %v2750 = vlaneseq
      %v2751 = vshrl.u32 %v2750, 7
      %v2752 = vsub.s32 %v2749, %v2751
      %v2753 = vrot.slane %v2739, %v2752
      %v2754 = vcombine.low %v2721, %v2737
      %v2755 = vcombine.high %v2721, %v2737
      %v2757 = vunpack.c.l.s4 1934713408
      %v2758 = vunpack.c.0.s8 %v2757
      %v2759 = vlaneseq
      %v2760 = vshrl.u32 %v2759, 7
      %v2761 = vsub.s32 %v2758, %v2760
      %v2762 = vrot.slane %v2754, %v2761
      %v2764 = vunpack.c.l.s4 1934713408
      %v2765 = vunpack.c.0.s8 %v2764
      %v2766 = vlaneseq
      %v2767 = vshrl.u32 %v2766, 7
      %v2768 = vsub.s32 %v2765, %v2767
      %v2769 = vrot.slane %v2755, %v2768
      %v2770 = vcombine.high %v2746, 0.0
      %v2771 = vcombine.high %v2753, 0.0
      %v2772 = vcombine.high %v2762, 0.0
      %v2773 = vcombine.high %v2769, 0.0
      %v2774 = vcombine.low %v2460, %v2467
      %v2776 = vunpack.c.l.s4 1983009808
      %v2777 = vunpack.c.0.s8 %v2776
      %v2778 = vlaneseq
      %v2779 = vshrl.u32 %v2778, 7
      %v2780 = vsub.s32 %v2777, %v2779
      %v2781 = vrot.slane %v2774, %v2780
      %v2782 = vcombine.low %v2484, %v2485
      %v2784 = vunpack.c.l.s4 1983009808
      %v2785 = vunpack.c.0.s8 %v2784
      %v2786 = vlaneseq
      %v2787 = vshrl.u32 %v2786, 7
      %v2788 = vsub.s32 %v2785, %v2787
      %v2789 = vrot.slane %v2782, %v2788
      %v2790 = vcombine.low %v2476, %v2483
      %v2792 = vunpack.c.l.s4 1983009808
      %v2793 = vunpack.c.0.s8 %v2792
      %v2794 = vlaneseq
      %v2795 = vshrl.u32 %v2794, 7
      %v2796 = vsub.s32 %v2793, %v2795
      %v2797 = vrot.slane %v2790, %v2796
      %v2798 = vcombine.low %v2486, %v2487
      %v2800 = vunpack.c.l.s4 1983009808
      %v2801 = vunpack.c.0.s8 %v2800
      %v2802 = vlaneseq
      %v2803 = vshrl.u32 %v2802, 7
      %v2804 = vsub.s32 %v2801, %v2803
      %v2805 = vrot.slane %v2798, %v2804
      %v2806 = vcombine.low %v2781, %v2789
      %v2807 = vcombine.high %v2781, %v2789
      %v2809 = vunpack.c.l.s4 1934713408
      %v2810 = vunpack.c.0.s8 %v2809
      %v2811 = vlaneseq
      %v2812 = vshrl.u32 %v2811, 7
      %v2813 = vsub.s32 %v2810, %v2812
      %v2814 = vrot.slane %v2806, %v2813
      %v2816 = vunpack.c.l.s4 1934713408
      %v2817 = vunpack.c.0.s8 %v2816
      %v2818 = vlaneseq
      %v2819 = vshrl.u32 %v2818, 7
      %v2820 = vsub.s32 %v2817, %v2819
      %v2821 = vrot.slane %v2807, %v2820
      %v2822 = vcombine.low %v2797, %v2805
      %v2823 = vcombine.high %v2797, %v2805
      %v2825 = vunpack.c.l.s4 1934713408
      %v2826 = vunpack.c.0.s8 %v2825
      %v2827 = vlaneseq
      %v2828 = vshrl.u32 %v2827, 7
      %v2829 = vsub.s32 %v2826, %v2828
      %v2830 = vrot.slane %v2822, %v2829
      %v2832 = vunpack.c.l.s4 1934713408
      %v2833 = vunpack.c.0.s8 %v2832
      %v2834 = vlaneseq
      %v2835 = vshrl.u32 %v2834, 7
      %v2836 = vsub.s32 %v2833, %v2835
      %v2837 = vrot.slane %v2823, %v2836
      %v2838 = vcombine.low %v2814, %v2830
      %v2839 = vcombine.high %v2814, %v2830
      %v2840 = vcombine.low %v2821, %v2837
      %v2841 = vcombine.high %v2821, %v2837
      %v2842 = vpack.c.bf16 %v2838, %v2838
      %v2843 = vpack.c.bf16 %v2839, %v2839
      %v2844 = vpack.c.bf16 %v2840, %v2840
      %v2845 = vpack.c.bf16 %v2841, %v2841
      %v2846 = vcombine.low %v2603, %v2610
      %v2848 = vunpack.c.l.s4 1983009808
      %v2849 = vunpack.c.0.s8 %v2848
      %v2850 = vlaneseq
      %v2851 = vshrl.u32 %v2850, 7
      %v2852 = vsub.s32 %v2849, %v2851
      %v2853 = vrot.slane %v2846, %v2852
      %v2854 = vcombine.low %v2627, %v2628
      %v2856 = vunpack.c.l.s4 1983009808
      %v2857 = vunpack.c.0.s8 %v2856
      %v2858 = vlaneseq
      %v2859 = vshrl.u32 %v2858, 7
      %v2860 = vsub.s32 %v2857, %v2859
      %v2861 = vrot.slane %v2854, %v2860
      %v2862 = vcombine.low %v2619, %v2626
      %v2864 = vunpack.c.l.s4 1983009808
      %v2865 = vunpack.c.0.s8 %v2864
      %v2866 = vlaneseq
      %v2867 = vshrl.u32 %v2866, 7
      %v2868 = vsub.s32 %v2865, %v2867
      %v2869 = vrot.slane %v2862, %v2868
      %v2870 = vcombine.low %v2629, %v2630
      %v2872 = vunpack.c.l.s4 1983009808
      %v2873 = vunpack.c.0.s8 %v2872
      %v2874 = vlaneseq
      %v2875 = vshrl.u32 %v2874, 7
      %v2876 = vsub.s32 %v2873, %v2875
      %v2877 = vrot.slane %v2870, %v2876
      %v2878 = vcombine.low %v2853, %v2861
      %v2879 = vcombine.high %v2853, %v2861
      %v2881 = vunpack.c.l.s4 1934713408
      %v2882 = vunpack.c.0.s8 %v2881
      %v2883 = vlaneseq
      %v2884 = vshrl.u32 %v2883, 7
      %v2885 = vsub.s32 %v2882, %v2884
      %v2886 = vrot.slane %v2878, %v2885
      %v2888 = vunpack.c.l.s4 1934713408
      %v2889 = vunpack.c.0.s8 %v2888
      %v2890 = vlaneseq
      %v2891 = vshrl.u32 %v2890, 7
      %v2892 = vsub.s32 %v2889, %v2891
      %v2893 = vrot.slane %v2879, %v2892
      %v2894 = vcombine.low %v2869, %v2877
      %v2895 = vcombine.high %v2869, %v2877
      %v2897 = vunpack.c.l.s4 1934713408
      %v2898 = vunpack.c.0.s8 %v2897
      %v2899 = vlaneseq
      %v2900 = vshrl.u32 %v2899, 7
      %v2901 = vsub.s32 %v2898, %v2900
      %v2902 = vrot.slane %v2894, %v2901
      %v2904 = vunpack.c.l.s4 1934713408
      %v2905 = vunpack.c.0.s8 %v2904
      %v2906 = vlaneseq
      %v2907 = vshrl.u32 %v2906, 7
      %v2908 = vsub.s32 %v2905, %v2907
      %v2909 = vrot.slane %v2895, %v2908
      %v2910 = vcombine.low %v2886, %v2902
      %v2911 = vcombine.high %v2886, %v2902
      %v2912 = vcombine.low %v2893, %v2909
      %v2913 = vcombine.high %v2893, %v2909
      %v2914 = vpack.c.bf16 %v2910, %v2910
      %v2915 = vpack.c.bf16 %v2911, %v2911
      %v2916 = vpack.c.bf16 %v2912, %v2912
      %v2917 = vpack.c.bf16 %v2913, %v2913
      %v2918 = vcombine.low %v2746, %v2753
      %v2920 = vunpack.c.l.s4 1983009808
      %v2921 = vunpack.c.0.s8 %v2920
      %v2922 = vlaneseq
      %v2923 = vshrl.u32 %v2922, 7
      %v2924 = vsub.s32 %v2921, %v2923
      %v2925 = vrot.slane %v2918, %v2924
      %v2926 = vcombine.low %v2770, %v2771
      %v2928 = vunpack.c.l.s4 1983009808
      %v2929 = vunpack.c.0.s8 %v2928
      %v2930 = vlaneseq
      %v2931 = vshrl.u32 %v2930, 7
      %v2932 = vsub.s32 %v2929, %v2931
      %v2933 = vrot.slane %v2926, %v2932
      %v2934 = vcombine.low %v2762, %v2769
      %v2936 = vunpack.c.l.s4 1983009808
      %v2937 = vunpack.c.0.s8 %v2936
      %v2938 = vlaneseq
      %v2939 = vshrl.u32 %v2938, 7
      %v2940 = vsub.s32 %v2937, %v2939
      %v2941 = vrot.slane %v2934, %v2940
      %v2942 = vcombine.low %v2772, %v2773
      %v2944 = vunpack.c.l.s4 1983009808
      %v2945 = vunpack.c.0.s8 %v2944
      %v2946 = vlaneseq
      %v2947 = vshrl.u32 %v2946, 7
      %v2948 = vsub.s32 %v2945, %v2947
      %v2949 = vrot.slane %v2942, %v2948
      %v2950 = vcombine.low %v2925, %v2933
      %v2951 = vcombine.high %v2925, %v2933
      %v2953 = vunpack.c.l.s4 1934713408
      %v2954 = vunpack.c.0.s8 %v2953
      %v2955 = vlaneseq
      %v2956 = vshrl.u32 %v2955, 7
      %v2957 = vsub.s32 %v2954, %v2956
      %v2958 = vrot.slane %v2950, %v2957
      %v2960 = vunpack.c.l.s4 1934713408
      %v2961 = vunpack.c.0.s8 %v2960
      %v2962 = vlaneseq
      %v2963 = vshrl.u32 %v2962, 7
      %v2964 = vsub.s32 %v2961, %v2963
      %v2965 = vrot.slane %v2951, %v2964
      %v2966 = vcombine.low %v2941, %v2949
      %v2967 = vcombine.high %v2941, %v2949
      %v2969 = vunpack.c.l.s4 1934713408
      %v2970 = vunpack.c.0.s8 %v2969
      %v2971 = vlaneseq
      %v2972 = vshrl.u32 %v2971, 7
      %v2973 = vsub.s32 %v2970, %v2972
      %v2974 = vrot.slane %v2966, %v2973
      %v2976 = vunpack.c.l.s4 1934713408
      %v2977 = vunpack.c.0.s8 %v2976
      %v2978 = vlaneseq
      %v2979 = vshrl.u32 %v2978, 7
      %v2980 = vsub.s32 %v2977, %v2979
      %v2981 = vrot.slane %v2967, %v2980
      %v2982 = vcombine.low %v2958, %v2974
      %v2983 = vcombine.high %v2958, %v2974
      %v2984 = vcombine.low %v2965, %v2981
      %v2985 = vcombine.high %v2965, %v2981
      %v2986 = vpack.c.bf16 %v2982, %v2982
      %v2987 = vpack.c.bf16 %v2983, %v2983
      %v2988 = vpack.c.bf16 %v2984, %v2984
      %v2989 = vpack.c.bf16 %v2985, %v2985
      %v2991 = vsel %vm1483, %v2842, 0
      %v2994 = vsel %vm1483, %v2914, 0
      %2996 = vmatprep.subr.bf16.mxu0 0
      %2997 = vmatpush1.bf16.xpose.msra.mxu0 %v2994
      %2998 = vmatprep.subr.bf16.mxu0 0
      %2999 = vmatpush1.bf16.xpose.msra.mxu0 0
      %3000 = vmatprep.subr.bf16.mxu0 0
      %3001 = vmatpush1.bf16.xpose.msra.mxu0 0
      %3002 = vmatprep.subr.bf16.mxu0 0
      %3003 = vmatpush1.bf16.xpose.msra.mxu0 0
      %3004 = vmatprep.subr.bf16.mxu0 0
      %3005 = vmatpush1.bf16.xpose.msra.mxu0 0
      %3006 = vmatprep.subr.bf16.mxu0 0
      %3007 = vmatpush1.bf16.xpose.msra.mxu0 0
      %3008 = vmatprep.subr.bf16.mxu0 0
      %3009 = vmatpush1.bf16.xpose.msra.mxu0 0
      %3010 = vmatprep.subr.bf16.mxu0 0
      %3011 = vmatpush1.bf16.xpose.msra.mxu0 0
      %3012 = vmatprep.subr.bf16.mxu0 0
      %3013 = vmatpush1.bf16.xpose.msra.mxu0 0
      %3014 = vmatprep.subr.bf16.mxu0 0
      %3015 = vmatpush1.bf16.xpose.msra.mxu0 0
      %3016 = vmatprep.subr.bf16.mxu0 0
      %3017 = vmatpush1.bf16.xpose.msra.mxu0 0
      %3018 = vmatprep.subr.bf16.mxu0 0
      %3019 = vmatpush1.bf16.xpose.msra.mxu0 0
      %3020 = vmatprep.subr.bf16.mxu0 0
      %3021 = vmatpush1.bf16.xpose.msra.mxu0 0
      %3022 = vmatprep.subr.bf16.mxu0 0
      %3023 = vmatpush1.bf16.xpose.msra.mxu0 0
      %3024 = vmatprep.subr.bf16.mxu0 0
      %3025 = vmatpush1.bf16.xpose.msra.mxu0 0
      %3026 = vmatprep.subr.bf16.mxu0 0
      %3027 = vmatpush1.bf16.xpose.msra.mxu0 0
      %3028 = vmatprep.mubr.bf16.mxu0 0
      %3029 = vmatmul.mubr.bf16.gmra.mrb[0].mxu0 %v2991
      %v3030 = vpop.f32.mrb[0].mxu0
      %v3031 = vadd.f32 0.0, %v3030
      %v3032 = vpop.f32.mrb[0].mxu0
      %v3033 = vpop.f32.mrb[0].mxu0
      %v3034 = vpop.f32.mrb[0].mxu0
      %3035 = vdwg.mxu0
      %v3037 = vsel %vm1483, %v2843, 0
      %v3040 = vsel %vm1483, %v2915, 0
      %3042 = vmatprep.subr.bf16.mxu0 0
      %3043 = vmatpush1.bf16.xpose.msra.mxu0 %v3040
      %3044 = vmatprep.subr.bf16.mxu0 0
      %3045 = vmatpush1.bf16.xpose.msra.mxu0 0
      %3046 = vmatprep.subr.bf16.mxu0 0
      %3047 = vmatpush1.bf16.xpose.msra.mxu0 0
      %3048 = vmatprep.subr.bf16.mxu0 0
      %3049 = vmatpush1.bf16.xpose.msra.mxu0 0
      %3050 = vmatprep.subr.bf16.mxu0 0
      %3051 = vmatpush1.bf16.xpose.msra.mxu0 0
      %3052 = vmatprep.subr.bf16.mxu0 0
      %3053 = vmatpush1.bf16.xpose.msra.mxu0 0
      %3054 = vmatprep.subr.bf16.mxu0 0
      %3055 = vmatpush1.bf16.xpose.msra.mxu0 0
      %3056 = vmatprep.subr.bf16.mxu0 0
      %3057 = vmatpush1.bf16.xpose.msra.mxu0 0
      %3058 = vmatprep.subr.bf16.mxu0 0
      %3059 = vmatpush1.bf16.xpose.msra.mxu0 0
      %3060 = vmatprep.subr.bf16.mxu0 0
      %3061 = vmatpush1.bf16.xpose.msra.mxu0 0
      %3062 = vmatprep.subr.bf16.mxu0 0
      %3063 = vmatpush1.bf16.xpose.msra.mxu0 0
      %3064 = vmatprep.subr.bf16.mxu0 0
      %3065 = vmatpush1.bf16.xpose.msra.mxu0 0
      %3066 = vmatprep.subr.bf16.mxu0 0
      %3067 = vmatpush1.bf16.xpose.msra.mxu0 0
      %3068 = vmatprep.subr.bf16.mxu0 0
      %3069 = vmatpush1.bf16.xpose.msra.mxu0 0
      %3070 = vmatprep.subr.bf16.mxu0 0
      %3071 = vmatpush1.bf16.xpose.msra.mxu0 0
      %3072 = vmatprep.subr.bf16.mxu0 0
      %3073 = vmatpush1.bf16.xpose.msra.mxu0 0
      %3074 = vmatprep.mubr.bf16.mxu0 0
      %3075 = vmatmul.mubr.bf16.gmra.mrb[0].mxu0 %v3037
      %v3076 = vpop.f32.mrb[0].mxu0
      %v3077 = vadd.f32 0.0, %v3076
      %v3078 = vpop.f32.mrb[0].mxu0
      %v3079 = vpop.f32.mrb[0].mxu0
      %v3080 = vpop.f32.mrb[0].mxu0
      %3081 = vdwg.mxu0
      %v3083 = vsel %vm1483, %v2844, 0
      %v3086 = vsel %vm1483, %v2916, 0
      %3088 = vmatprep.subr.bf16.mxu0 0
      %3089 = vmatpush1.bf16.xpose.msra.mxu0 %v3086
      %3090 = vmatprep.subr.bf16.mxu0 0
      %3091 = vmatpush1.bf16.xpose.msra.mxu0 0
      %3092 = vmatprep.subr.bf16.mxu0 0
      %3093 = vmatpush1.bf16.xpose.msra.mxu0 0
      %3094 = vmatprep.subr.bf16.mxu0 0
      %3095 = vmatpush1.bf16.xpose.msra.mxu0 0
      %3096 = vmatprep.subr.bf16.mxu0 0
      %3097 = vmatpush1.bf16.xpose.msra.mxu0 0
      %3098 = vmatprep.subr.bf16.mxu0 0
      %3099 = vmatpush1.bf16.xpose.msra.mxu0 0
      %3100 = vmatprep.subr.bf16.mxu0 0
      %3101 = vmatpush1.bf16.xpose.msra.mxu0 0
      %3102 = vmatprep.subr.bf16.mxu0 0
      %3103 = vmatpush1.bf16.xpose.msra.mxu0 0
      %3104 = vmatprep.subr.bf16.mxu0 0
      %3105 = vmatpush1.bf16.xpose.msra.mxu0 0
      %3106 = vmatprep.subr.bf16.mxu0 0
      %3107 = vmatpush1.bf16.xpose.msra.mxu0 0
      %3108 = vmatprep.subr.bf16.mxu0 0
      %3109 = vmatpush1.bf16.xpose.msra.mxu0 0
      %3110 = vmatprep.subr.bf16.mxu0 0
      %3111 = vmatpush1.bf16.xpose.msra.mxu0 0
      %3112 = vmatprep.subr.bf16.mxu0 0
      %3113 = vmatpush1.bf16.xpose.msra.mxu0 0
      %3114 = vmatprep.subr.bf16.mxu0 0
      %3115 = vmatpush1.bf16.xpose.msra.mxu0 0
      %3116 = vmatprep.subr.bf16.mxu0 0
      %3117 = vmatpush1.bf16.xpose.msra.mxu0 0
      %3118 = vmatprep.subr.bf16.mxu0 0
      %3119 = vmatpush1.bf16.xpose.msra.mxu0 0
      %3120 = vmatprep.mubr.bf16.mxu0 0
      %3121 = vmatmul.mubr.bf16.gmra.mrb[0].mxu0 %v3083
      %v3122 = vpop.f32.mrb[0].mxu0
      %v3123 = vadd.f32 0.0, %v3122
      %v3124 = vpop.f32.mrb[0].mxu0
      %v3125 = vpop.f32.mrb[0].mxu0
      %v3126 = vpop.f32.mrb[0].mxu0
      %3127 = vdwg.mxu0
      %v3129 = vsel %vm1483, %v2845, 0
      %v3132 = vsel %vm1483, %v2917, 0
      %3134 = vmatprep.subr.bf16.mxu0 0
      %3135 = vmatpush1.bf16.xpose.msra.mxu0 %v3132
      %3136 = vmatprep.subr.bf16.mxu0 0
      %3137 = vmatpush1.bf16.xpose.msra.mxu0 0
      %3138 = vmatprep.subr.bf16.mxu0 0
      %3139 = vmatpush1.bf16.xpose.msra.mxu0 0
      %3140 = vmatprep.subr.bf16.mxu0 0
      %3141 = vmatpush1.bf16.xpose.msra.mxu0 0
      %3142 = vmatprep.subr.bf16.mxu0 0
      %3143 = vmatpush1.bf16.xpose.msra.mxu0 0
      %3144 = vmatprep.subr.bf16.mxu0 0
      %3145 = vmatpush1.bf16.xpose.msra.mxu0 0
      %3146 = vmatprep.subr.bf16.mxu0 0
      %3147 = vmatpush1.bf16.xpose.msra.mxu0 0
      %3148 = vmatprep.subr.bf16.mxu0 0
      %3149 = vmatpush1.bf16.xpose.msra.mxu0 0
      %3150 = vmatprep.subr.bf16.mxu0 0
      %3151 = vmatpush1.bf16.xpose.msra.mxu0 0
      %3152 = vmatprep.subr.bf16.mxu0 0
      %3153 = vmatpush1.bf16.xpose.msra.mxu0 0
      %3154 = vmatprep.subr.bf16.mxu0 0
      %3155 = vmatpush1.bf16.xpose.msra.mxu0 0
      %3156 = vmatprep.subr.bf16.mxu0 0
      %3157 = vmatpush1.bf16.xpose.msra.mxu0 0
      %3158 = vmatprep.subr.bf16.mxu0 0
      %3159 = vmatpush1.bf16.xpose.msra.mxu0 0
      %3160 = vmatprep.subr.bf16.mxu0 0
      %3161 = vmatpush1.bf16.xpose.msra.mxu0 0
      %3162 = vmatprep.subr.bf16.mxu0 0
      %3163 = vmatpush1.bf16.xpose.msra.mxu0 0
      %3164 = vmatprep.subr.bf16.mxu0 0
      %3165 = vmatpush1.bf16.xpose.msra.mxu0 0
      %3166 = vmatprep.mubr.bf16.mxu0 0
      %3167 = vmatmul.mubr.bf16.gmra.mrb[0].mxu0 %v3129
      %v3168 = vpop.f32.mrb[0].mxu0
      %v3169 = vadd.f32 0.0, %v3168
      %v3170 = vpop.f32.mrb[0].mxu0
      %v3171 = vpop.f32.mrb[0].mxu0
      %v3172 = vpop.f32.mrb[0].mxu0
      %3173 = vdwg.mxu0
      %v3174 = vmul.f32 %v3031, 0.35355338
      %v3175 = vmul.f32 %v3077, 0.35355338
      %v3176 = vmul.f32 %v3123, 0.35355338
      %v3177 = vmul.f32 %v3169, 0.35355338
      %v3178 = vadd.f32 %v3174, %v838
      %v3179 = vadd.f32 %v3175, %v838
      %v3180 = vadd.f32 %v3176, %v838
      %v3181 = vadd.f32 %v3177, %v838
      %v3182 = vsel %vm1483, %v3178, -inf
      %3183 = vmax.xlane.f32.xlu0 %v3182
      %v3184 = vpop.xlane.xlu0 %3183
      %v3185 = vsel %vm1483, %v3179, -inf
      %3186 = vmax.xlane.f32.xlu0 %v3185
      %v3187 = vpop.xlane.xlu0 %3186
      %v3188 = vsel %vm1483, %v3180, -inf
      %3189 = vmax.xlane.f32.xlu0 %v3188
      %v3190 = vpop.xlane.xlu0 %3189
      %v3191 = vsel %vm1483, %v3181, -inf
      %3192 = vmax.xlane.f32.xlu0 %v3191
      %v3193 = vpop.xlane.xlu0 %3192
      %v3194 = vsub.f32 %v3178, %v3184
      %v3195 = vsub.f32 %v3179, %v3187
      %v3196 = vsub.f32 %v3180, %v3190
      %v3197 = vsub.f32 %v3181, %v3193
      %v3198 = vmul.f32 %v3194, 1.442695
      %v3199 = vpow.pop %v3198
      %v3200 = vmul.f32 %v3195, 1.442695
      %v3201 = vpow.pop %v3200
      %v3202 = vmul.f32 %v3196, 1.442695
      %v3203 = vpow.pop %v3202
      %v3204 = vmul.f32 %v3197, 1.442695
      %v3205 = vpow.pop %v3204
      %v3206 = vsel %vm1483, %v3199, 0.0
      %3207 = vadd.xlane.f32.xlu0 %v3206
      %v3208 = vpop.xlane.xlu0 %3207
      %v3209 = vsel %vm1483, %v3201, 0.0
      %3210 = vadd.xlane.f32.xlu0 %v3209
      %v3211 = vpop.xlane.xlu0 %3210
      %v3212 = vsel %vm1483, %v3203, 0.0
      %3213 = vadd.xlane.f32.xlu0 %v3212
      %v3214 = vpop.xlane.xlu0 %3213
      %v3215 = vsel %vm1483, %v3205, 0.0
      %3216 = vadd.xlane.f32.xlu0 %v3215
      %v3217 = vpop.xlane.xlu0 %3216
      %v3218 = vrcp.pop %v3208
      %v3219 = vrcp.pop %v3211
      %v3220 = vrcp.pop %v3214
      %v3221 = vrcp.pop %v3217
      %v3222 = vmul.f32 %v3199, %v3218
      %v3223 = vmul.f32 %v3201, %v3219
      %v3224 = vmul.f32 %v3203, %v3220
      %v3225 = vmul.f32 %v3205, %v3221
      %v3226 = vpack.c.bf16 %v3222, %v3222
      %v3227 = vpack.c.bf16 %v3223, %v3223
      %v3228 = vpack.c.bf16 %v3224, %v3224
      %v3229 = vpack.c.bf16 %v3225, %v3225
      %v3231 = vsel %vm1483, %v3226, 0
      %v3234 = vsel %vm1727, %v2986, 0
      %3236 = vmatprep.subr.bf16.mxu0 0
      %3237 = vmatpush1.bf16.msra.mxu0 %v3234
      %3238 = vmatprep.subr.bf16.mxu0 0
      %3239 = vmatpush1.bf16.msra.mxu0 0
      %3240 = vmatprep.subr.bf16.mxu0 0
      %3241 = vmatpush1.bf16.msra.mxu0 0
      %3242 = vmatprep.subr.bf16.mxu0 0
      %3243 = vmatpush1.bf16.msra.mxu0 0
      %3244 = vmatprep.subr.bf16.mxu0 0
      %3245 = vmatpush1.bf16.msra.mxu0 0
      %3246 = vmatprep.subr.bf16.mxu0 0
      %3247 = vmatpush1.bf16.msra.mxu0 0
      %3248 = vmatprep.subr.bf16.mxu0 0
      %3249 = vmatpush1.bf16.msra.mxu0 0
      %3250 = vmatprep.subr.bf16.mxu0 0
      %3251 = vmatpush1.bf16.msra.mxu0 0
      %3252 = vmatprep.subr.bf16.mxu0 0
      %3253 = vmatpush1.bf16.msra.mxu0 0
      %3254 = vmatprep.subr.bf16.mxu0 0
      %3255 = vmatpush1.bf16.msra.mxu0 0
      %3256 = vmatprep.subr.bf16.mxu0 0
      %3257 = vmatpush1.bf16.msra.mxu0 0
      %3258 = vmatprep.subr.bf16.mxu0 0
      %3259 = vmatpush1.bf16.msra.mxu0 0
      %3260 = vmatprep.subr.bf16.mxu0 0
      %3261 = vmatpush1.bf16.msra.mxu0 0
      %3262 = vmatprep.subr.bf16.mxu0 0
      %3263 = vmatpush1.bf16.msra.mxu0 0
      %3264 = vmatprep.subr.bf16.mxu0 0
      %3265 = vmatpush1.bf16.msra.mxu0 0
      %3266 = vmatprep.subr.bf16.mxu0 0
      %3267 = vmatpush1.bf16.msra.mxu0 0
      %3268 = vmatprep.mubr.bf16.mxu0 0
      %3269 = vmatmul.mubr.bf16.gmra.mrb[0].mxu0 %v3231
      %v3270 = vpop.f32.mrb[0].mxu0
      %v3271 = vadd.f32 0.0, %v3270
      %v3272 = vpop.f32.mrb[0].mxu0
      %v3273 = vpop.f32.mrb[0].mxu0
      %v3274 = vpop.f32.mrb[0].mxu0
      %3275 = vdwg.mxu0
      %v3277 = vsel %vm1483, %v3227, 0
      %v3280 = vsel %vm1727, %v2987, 0
      %3282 = vmatprep.subr.bf16.mxu0 0
      %3283 = vmatpush1.bf16.msra.mxu0 %v3280
      %3284 = vmatprep.subr.bf16.mxu0 0
      %3285 = vmatpush1.bf16.msra.mxu0 0
      %3286 = vmatprep.subr.bf16.mxu0 0
      %3287 = vmatpush1.bf16.msra.mxu0 0
      %3288 = vmatprep.subr.bf16.mxu0 0
      %3289 = vmatpush1.bf16.msra.mxu0 0
      %3290 = vmatprep.subr.bf16.mxu0 0
      %3291 = vmatpush1.bf16.msra.mxu0 0
      %3292 = vmatprep.subr.bf16.mxu0 0
      %3293 = vmatpush1.bf16.msra.mxu0 0
      %3294 = vmatprep.subr.bf16.mxu0 0
      %3295 = vmatpush1.bf16.msra.mxu0 0
      %3296 = vmatprep.subr.bf16.mxu0 0
      %3297 = vmatpush1.bf16.msra.mxu0 0
      %3298 = vmatprep.subr.bf16.mxu0 0
      %3299 = vmatpush1.bf16.msra.mxu0 0
      %3300 = vmatprep.subr.bf16.mxu0 0
      %3301 = vmatpush1.bf16.msra.mxu0 0
      %3302 = vmatprep.subr.bf16.mxu0 0
      %3303 = vmatpush1.bf16.msra.mxu0 0
      %3304 = vmatprep.subr.bf16.mxu0 0
      %3305 = vmatpush1.bf16.msra.mxu0 0
      %3306 = vmatprep.subr.bf16.mxu0 0
      %3307 = vmatpush1.bf16.msra.mxu0 0
      %3308 = vmatprep.subr.bf16.mxu0 0
      %3309 = vmatpush1.bf16.msra.mxu0 0
      %3310 = vmatprep.subr.bf16.mxu0 0
      %3311 = vmatpush1.bf16.msra.mxu0 0
      %3312 = vmatprep.subr.bf16.mxu0 0
      %3313 = vmatpush1.bf16.msra.mxu0 0
      %3314 = vmatprep.mubr.bf16.mxu0 0
      %3315 = vmatmul.mubr.bf16.gmra.mrb[0].mxu0 %v3277
      %v3316 = vpop.f32.mrb[0].mxu0
      %v3317 = vadd.f32 0.0, %v3316
      %v3318 = vpop.f32.mrb[0].mxu0
      %v3319 = vpop.f32.mrb[0].mxu0
      %v3320 = vpop.f32.mrb[0].mxu0
      %3321 = vdwg.mxu0
      %v3323 = vsel %vm1483, %v3228, 0
      %v3326 = vsel %vm1727, %v2988, 0
      %3328 = vmatprep.subr.bf16.mxu0 0
      %3329 = vmatpush1.bf16.msra.mxu0 %v3326
      %3330 = vmatprep.subr.bf16.mxu0 0
      %3331 = vmatpush1.bf16.msra.mxu0 0
      %3332 = vmatprep.subr.bf16.mxu0 0
      %3333 = vmatpush1.bf16.msra.mxu0 0
      %3334 = vmatprep.subr.bf16.mxu0 0
      %3335 = vmatpush1.bf16.msra.mxu0 0
      %3336 = vmatprep.subr.bf16.mxu0 0
      %3337 = vmatpush1.bf16.msra.mxu0 0
      %3338 = vmatprep.subr.bf16.mxu0 0
      %3339 = vmatpush1.bf16.msra.mxu0 0
      %3340 = vmatprep.subr.bf16.mxu0 0
      %3341 = vmatpush1.bf16.msra.mxu0 0
      %3342 = vmatprep.subr.bf16.mxu0 0
      %3343 = vmatpush1.bf16.msra.mxu0 0
      %3344 = vmatprep.subr.bf16.mxu0 0
      %3345 = vmatpush1.bf16.msra.mxu0 0
      %3346 = vmatprep.subr.bf16.mxu0 0
      %3347 = vmatpush1.bf16.msra.mxu0 0
      %3348 = vmatprep.subr.bf16.mxu0 0
      %3349 = vmatpush1.bf16.msra.mxu0 0
      %3350 = vmatprep.subr.bf16.mxu0 0
      %3351 = vmatpush1.bf16.msra.mxu0 0
      %3352 = vmatprep.subr.bf16.mxu0 0
      %3353 = vmatpush1.bf16.msra.mxu0 0
      %3354 = vmatprep.subr.bf16.mxu0 0
      %3355 = vmatpush1.bf16.msra.mxu0 0
      %3356 = vmatprep.subr.bf16.mxu0 0
      %3357 = vmatpush1.bf16.msra.mxu0 0
      %3358 = vmatprep.subr.bf16.mxu0 0
      %3359 = vmatpush1.bf16.msra.mxu0 0
      %3360 = vmatprep.mubr.bf16.mxu0 0
      %3361 = vmatmul.mubr.bf16.gmra.mrb[0].mxu0 %v3323
      %v3362 = vpop.f32.mrb[0].mxu0
      %v3363 = vadd.f32 0.0, %v3362
      %v3364 = vpop.f32.mrb[0].mxu0
      %v3365 = vpop.f32.mrb[0].mxu0
      %v3366 = vpop.f32.mrb[0].mxu0
      %3367 = vdwg.mxu0
      %v3369 = vsel %vm1483, %v3229, 0
      %v3372 = vsel %vm1727, %v2989, 0
      %3374 = vmatprep.subr.bf16.mxu0 0
      %3375 = vmatpush1.bf16.msra.mxu0 %v3372
      %3376 = vmatprep.subr.bf16.mxu0 0
      %3377 = vmatpush1.bf16.msra.mxu0 0
      %3378 = vmatprep.subr.bf16.mxu0 0
      %3379 = vmatpush1.bf16.msra.mxu0 0
      %3380 = vmatprep.subr.bf16.mxu0 0
      %3381 = vmatpush1.bf16.msra.mxu0 0
      %3382 = vmatprep.subr.bf16.mxu0 0
      %3383 = vmatpush1.bf16.msra.mxu0 0
      %3384 = vmatprep.subr.bf16.mxu0 0
      %3385 = vmatpush1.bf16.msra.mxu0 0
      %3386 = vmatprep.subr.bf16.mxu0 0
      %3387 = vmatpush1.bf16.msra.mxu0 0
      %3388 = vmatprep.subr.bf16.mxu0 0
      %3389 = vmatpush1.bf16.msra.mxu0 0
      %3390 = vmatprep.subr.bf16.mxu0 0
      %3391 = vmatpush1.bf16.msra.mxu0 0
      %3392 = vmatprep.subr.bf16.mxu0 0
      %3393 = vmatpush1.bf16.msra.mxu0 0
      %3394 = vmatprep.subr.bf16.mxu0 0
      %3395 = vmatpush1.bf16.msra.mxu0 0
      %3396 = vmatprep.subr.bf16.mxu0 0
      %3397 = vmatpush1.bf16.msra.mxu0 0
      %3398 = vmatprep.subr.bf16.mxu0 0
      %3399 = vmatpush1.bf16.msra.mxu0 0
      %3400 = vmatprep.subr.bf16.mxu0 0
      %3401 = vmatpush1.bf16.msra.mxu0 0
      %3402 = vmatprep.subr.bf16.mxu0 0
      %3403 = vmatpush1.bf16.msra.mxu0 0
      %3404 = vmatprep.subr.bf16.mxu0 0
      %3405 = vmatpush1.bf16.msra.mxu0 0
      %3406 = vmatprep.mubr.bf16.mxu0 0
      %3407 = vmatmul.mubr.bf16.gmra.mrb[0].mxu0 %v3369
      %v3408 = vpop.f32.mrb[0].mxu0
      %v3409 = vadd.f32 0.0, %v3408
      %v3410 = vpop.f32.mrb[0].mxu0
      %v3411 = vpop.f32.mrb[0].mxu0
      %v3412 = vpop.f32.mrb[0].mxu0
      %3413 = vdwg.mxu0
      %v3414 = vcombine.low %v3271, %v3363
      %v3415 = vcombine.high %v3271, %v3363
      %v3417 = vunpack.c.l.s4 1983009808
      %v3418 = vunpack.c.0.s8 %v3417
      %v3419 = vlaneseq
      %v3420 = vshrl.u32 %v3419, 7
      %v3421 = vsub.s32 %v3418, %v3420
      %v3422 = vrot.slane %v3414, %v3421
      %v3424 = vunpack.c.l.s4 1983009808
      %v3425 = vunpack.c.0.s8 %v3424
      %v3426 = vlaneseq
      %v3427 = vshrl.u32 %v3426, 7
      %v3428 = vsub.s32 %v3425, %v3427
      %v3429 = vrot.slane %v3415, %v3428
      %v3430 = vcombine.low %v3317, %v3409
      %v3431 = vcombine.high %v3317, %v3409
      %v3433 = vunpack.c.l.s4 1983009808
      %v3434 = vunpack.c.0.s8 %v3433
      %v3435 = vlaneseq
      %v3436 = vshrl.u32 %v3435, 7
      %v3437 = vsub.s32 %v3434, %v3436
      %v3438 = vrot.slane %v3430, %v3437
      %v3440 = vunpack.c.l.s4 1983009808
      %v3441 = vunpack.c.0.s8 %v3440
      %v3442 = vlaneseq
      %v3443 = vshrl.u32 %v3442, 7
      %v3444 = vsub.s32 %v3441, %v3443
      %v3445 = vrot.slane %v3431, %v3444
      %v3446 = vcombine.low %v3422, %v3438
      %v3447 = vcombine.high %v3422, %v3438
      %v3449 = vunpack.c.l.s4 1934713408
      %v3450 = vunpack.c.0.s8 %v3449
      %v3451 = vlaneseq
      %v3452 = vshrl.u32 %v3451, 7
      %v3453 = vsub.s32 %v3450, %v3452
      %v3454 = vrot.slane %v3446, %v3453
      %v3456 = vunpack.c.l.s4 1934713408
      %v3457 = vunpack.c.0.s8 %v3456
      %v3458 = vlaneseq
      %v3459 = vshrl.u32 %v3458, 7
      %v3460 = vsub.s32 %v3457, %v3459
      %v3461 = vrot.slane %v3447, %v3460
      %v3462 = vcombine.low %v3429, %v3445
      %v3463 = vcombine.high %v3429, %v3445
      %v3465 = vunpack.c.l.s4 1934713408
      %v3466 = vunpack.c.0.s8 %v3465
      %v3467 = vlaneseq
      %v3468 = vshrl.u32 %v3467, 7
      %v3469 = vsub.s32 %v3466, %v3468
      %v3470 = vrot.slane %v3462, %v3469
      %v3472 = vunpack.c.l.s4 1934713408
      %v3473 = vunpack.c.0.s8 %v3472
      %v3474 = vlaneseq
      %v3475 = vshrl.u32 %v3474, 7
      %v3476 = vsub.s32 %v3473, %v3475
      %v3477 = vrot.slane %v3463, %v3476
      %v3478 = vcombine.high %v3454, 0.0
      %v3479 = vcombine.high %v3461, 0.0
      %v3480 = vcombine.high %v3470, 0.0
      %v3481 = vcombine.high %v3477, 0.0
      %v3482 = vcombine.low %v3454, %v3461
      %v3484 = vunpack.c.l.s4 1983009808
      %v3485 = vunpack.c.0.s8 %v3484
      %v3486 = vlaneseq
      %v3487 = vshrl.u32 %v3486, 7
      %v3488 = vsub.s32 %v3485, %v3487
      %v3489 = vrot.slane %v3482, %v3488
      %v3490 = vcombine.low %v3478, %v3479
      %v3492 = vunpack.c.l.s4 1983009808
      %v3493 = vunpack.c.0.s8 %v3492
      %v3494 = vlaneseq
      %v3495 = vshrl.u32 %v3494, 7
      %v3496 = vsub.s32 %v3493, %v3495
      %v3497 = vrot.slane %v3490, %v3496
      %v3498 = vcombine.low %v3470, %v3477
      %v3500 = vunpack.c.l.s4 1983009808
      %v3501 = vunpack.c.0.s8 %v3500
      %v3502 = vlaneseq
      %v3503 = vshrl.u32 %v3502, 7
      %v3504 = vsub.s32 %v3501, %v3503
      %v3505 = vrot.slane %v3498, %v3504
      %v3506 = vcombine.low %v3480, %v3481
      %v3508 = vunpack.c.l.s4 1983009808
      %v3509 = vunpack.c.0.s8 %v3508
      %v3510 = vlaneseq
      %v3511 = vshrl.u32 %v3510, 7
      %v3512 = vsub.s32 %v3509, %v3511
      %v3513 = vrot.slane %v3506, %v3512
      %v3514 = vcombine.low %v3489, %v3497
      %v3515 = vcombine.high %v3489, %v3497
      %v3517 = vunpack.c.l.s4 1934713408
      %v3518 = vunpack.c.0.s8 %v3517
      %v3519 = vlaneseq
      %v3520 = vshrl.u32 %v3519, 7
      %v3521 = vsub.s32 %v3518, %v3520
      %v3522 = vrot.slane %v3514, %v3521
      %v3524 = vunpack.c.l.s4 1934713408
      %v3525 = vunpack.c.0.s8 %v3524
      %v3526 = vlaneseq
      %v3527 = vshrl.u32 %v3526, 7
      %v3528 = vsub.s32 %v3525, %v3527
      %v3529 = vrot.slane %v3515, %v3528
      %v3530 = vcombine.low %v3505, %v3513
      %v3531 = vcombine.high %v3505, %v3513
      %v3533 = vunpack.c.l.s4 1934713408
      %v3534 = vunpack.c.0.s8 %v3533
      %v3535 = vlaneseq
      %v3536 = vshrl.u32 %v3535, 7
      %v3537 = vsub.s32 %v3534, %v3536
      %v3538 = vrot.slane %v3530, %v3537
      %v3540 = vunpack.c.l.s4 1934713408
      %v3541 = vunpack.c.0.s8 %v3540
      %v3542 = vlaneseq
      %v3543 = vshrl.u32 %v3542, 7
      %v3544 = vsub.s32 %v3541, %v3543
      %v3545 = vrot.slane %v3531, %v3544
      %v3546 = vcombine.low %v3522, %v3538
      %v3547 = vcombine.high %v3522, %v3538
      %v3548 = vcombine.low %v3529, %v3545
      %v3549 = vcombine.high %v3529, %v3545
      %3551 = vrot.lane.b32.xlu0 %v3547, 8
      %v3552 = vpop.permute.xlu0 %3551
      %3555 = vrot.lane.b32.xlu0 %v3548, 16
      %v3556 = vpop.permute.xlu0 %3555
      %3559 = vrot.lane.b32.xlu0 %v3549, 24
      %v3560 = vpop.permute.xlu0 %3559
      %v3562 = vsel %vm1483, %v3546, %v3552
      %v3563 = vsel %vm787, %v3562, %v3556
      %v3564 = vsel %vm2059, %v3563, %v3560
      %v3565 = vpack.c.bf16 %v3564, %v3564
      %s3566 = scalar_lea.vmem %s11, 16
      %v3567 = vld [vmem:[%s3566] sm:$0xf]
      %v3568 = vld [vmem:[%s3566 + $0x4] sm:$0xf]
      %v3569 = vld [vmem:[%s3566 + $0x8] sm:$0xf]
      %v3570 = vld [vmem:[%s3566 + $0xc] sm:$0xf]
      %s3571 = scalar_lea.vmem %s12, 1
      %v3572 = vld [vmem:[%s3571] sm:$0x1]
      %v3574 = vlaneseq
      %v3575 = vshrl.u32 %v3574, 7
      %v3576 = vsub.s32 0, %v3575
      %v3577 = vrot.slane %v3572, %v3576
      %v3583 = vunpack.c.l.b16 %v3567
      %v3584 = vunpack.c.l.b16 %v3568
      %v3585 = vunpack.c.l.b16 %v3569
      %v3586 = vunpack.c.l.b16 %v3570
      %v3587 = vpack.c.b16 %v3584, %v3583
      %v3588 = vpack.c.b16 %v3586, %v3585
      %v3592 = vsel %vm863, %v3565, 0
      %3594 = vmatprep.subr.bf16.mxu0 0
      %3595 = vmatpush1.bf16.msra.mxu0 %v3587
      %3596 = vmatprep.subr.bf16.mxu0 0
      %3597 = vmatpush1.bf16.msra.mxu0 %v3588
      %3598 = vmatprep.subr.bf16.mxu0 0
      %3599 = vmatpush1.bf16.msra.mxu0 0
      %3600 = vmatprep.subr.bf16.mxu0 0
      %3601 = vmatpush1.bf16.msra.mxu0 0
      %3602 = vmatprep.subr.bf16.mxu0 0
      %3603 = vmatpush1.bf16.msra.mxu0 0
      %3604 = vmatprep.subr.bf16.mxu0 0
      %3605 = vmatpush1.bf16.msra.mxu0 0
      %3606 = vmatprep.subr.bf16.mxu0 0
      %3607 = vmatpush1.bf16.msra.mxu0 0
      %3608 = vmatprep.subr.bf16.mxu0 0
      %3609 = vmatpush1.bf16.msra.mxu0 0
      %3610 = vmatprep.subr.bf16.mxu0 0
      %3611 = vmatpush1.bf16.msra.mxu0 0
      %3612 = vmatprep.subr.bf16.mxu0 0
      %3613 = vmatpush1.bf16.msra.mxu0 0
      %3614 = vmatprep.subr.bf16.mxu0 0
      %3615 = vmatpush1.bf16.msra.mxu0 0
      %3616 = vmatprep.subr.bf16.mxu0 0
      %3617 = vmatpush1.bf16.msra.mxu0 0
      %3618 = vmatprep.subr.bf16.mxu0 0
      %3619 = vmatpush1.bf16.msra.mxu0 0
      %3620 = vmatprep.subr.bf16.mxu0 0
      %3621 = vmatpush1.bf16.msra.mxu0 0
      %3622 = vmatprep.subr.bf16.mxu0 0
      %3623 = vmatpush1.bf16.msra.mxu0 0
      %3624 = vmatprep.subr.bf16.mxu0 0
      %3625 = vmatpush1.bf16.msra.mxu0 0
      %3626 = vmatprep.mubr.bf16.mxu0 0
      %3627 = vmatmul.mubr.bf16.gmra.mrb[0].mxu0 %v3592
      %v3628 = vpop.f32.mrb[0].mxu0
      %v3629 = vadd.f32 %v3577, %v3628
      %v3630 = vpop.f32.mrb[0].mxu0
      %v3631 = vpop.f32.mrb[0].mxu0
      %v3632 = vpop.f32.mrb[0].mxu0
      %3633 = vdwg.mxu0
      %v3634 = vadd.f32 %v2340, %v3629
      %s3635 = scalar_lea.vmem %s17, 1
      %v3636 = vld [vmem:[%s3635] sm:$0x1]
      %s3637 = scalar_lea.vmem %s18, 1
      %v3638 = vld [vmem:[%s3637] sm:$0x1]
      %v3639 = vsel %vm863, %v3634, 0.0
      %3640 = vadd.xlane.f32.xlu0 %v3639
      %v3641 = vpop.xlane.xlu0 %3640
      %v3642 = vmul.f32 %v3641, %v2134
      %v3643 = vsub.f32 %v3634, %v3642
      %v3644 = vmul.f32 %v3643, %v3643
      %v3645 = vsel %vm863, %v3644, 0.0
      %3646 = vadd.xlane.f32.xlu0 %v3645
      %v3647 = vpop.xlane.xlu0 %3646
      %v3648 = vmul.f32 %v3647, %v2134
      %v3649 = vadd.f32 %v3648, 1e-05
      %v3650 = vrsqrt.pop %v3649
      %v3651 = vmul.f32 %v3643, %v3650
      %v3653 = vlaneseq
      %v3654 = vshrl.u32 %v3653, 7
      %v3655 = vsub.s32 0, %v3654
      %v3656 = vrot.slane %v3636, %v3655
      %v3658 = vmul.f32 %v3651, %v3656
      %v3660 = vlaneseq
      %v3661 = vshrl.u32 %v3660, 7
      %v3662 = vsub.s32 0, %v3661
      %v3663 = vrot.slane %v3638, %v3662
      %v3665 = vadd.f32 %v3658, %v3663
      %v3666 = vpack.c.bf16 %v3665, %v3665
      %s3667 = scalar_lea.vmem %s13, 16
      %v3668 = vld [vmem:[%s3667] sm:$0xf]
      %v3669 = vld [vmem:[%s3667 + $0x4] sm:$0xf]
      %v3670 = vld [vmem:[%s3667 + $0x8] sm:$0xf]
      %v3671 = vld [vmem:[%s3667 + $0xc] sm:$0xf]
      %s3672 = scalar_lea.vmem %s14, 1
      %v3673 = vld [vmem:[%s3672] sm:$0x1]
      %v3675 = vlaneseq
      %v3676 = vshrl.u32 %v3675, 7
      %v3677 = vsub.s32 0, %v3676
      %v3678 = vrot.slane %v3673, %v3677
      %v3684 = vunpack.c.l.b16 %v3668
      %v3685 = vunpack.c.l.b16 %v3669
      %v3686 = vunpack.c.l.b16 %v3670
      %v3687 = vunpack.c.l.b16 %v3671
      %v3688 = vpack.c.b16 %v3685, %v3684
      %v3689 = vpack.c.b16 %v3687, %v3686
      %v3693 = vsel %vm863, %v3666, 0
      %3695 = vmatprep.subr.bf16.mxu0 0
      %3696 = vmatpush1.bf16.msra.mxu0 %v3688
      %3697 = vmatprep.subr.bf16.mxu0 0
      %3698 = vmatpush1.bf16.msra.mxu0 %v3689
      %3699 = vmatprep.subr.bf16.mxu0 0
      %3700 = vmatpush1.bf16.msra.mxu0 0
      %3701 = vmatprep.subr.bf16.mxu0 0
      %3702 = vmatpush1.bf16.msra.mxu0 0
      %3703 = vmatprep.subr.bf16.mxu0 0
      %3704 = vmatpush1.bf16.msra.mxu0 0
      %3705 = vmatprep.subr.bf16.mxu0 0
      %3706 = vmatpush1.bf16.msra.mxu0 0
      %3707 = vmatprep.subr.bf16.mxu0 0
      %3708 = vmatpush1.bf16.msra.mxu0 0
      %3709 = vmatprep.subr.bf16.mxu0 0
      %3710 = vmatpush1.bf16.msra.mxu0 0
      %3711 = vmatprep.subr.bf16.mxu0 0
      %3712 = vmatpush1.bf16.msra.mxu0 0
      %3713 = vmatprep.subr.bf16.mxu0 0
      %3714 = vmatpush1.bf16.msra.mxu0 0
      %3715 = vmatprep.subr.bf16.mxu0 0
      %3716 = vmatpush1.bf16.msra.mxu0 0
      %3717 = vmatprep.subr.bf16.mxu0 0
      %3718 = vmatpush1.bf16.msra.mxu0 0
      %3719 = vmatprep.subr.bf16.mxu0 0
      %3720 = vmatpush1.bf16.msra.mxu0 0
      %3721 = vmatprep.subr.bf16.mxu0 0
      %3722 = vmatpush1.bf16.msra.mxu0 0
      %3723 = vmatprep.subr.bf16.mxu0 0
      %3724 = vmatpush1.bf16.msra.mxu0 0
      %3725 = vmatprep.subr.bf16.mxu0 0
      %3726 = vmatpush1.bf16.msra.mxu0 0
      %3727 = vmatprep.mubr.bf16.mxu0 0
      %3728 = vmatmul.mubr.bf16.gmra.mrb[0].mxu0 %v3693
      %v3729 = vpop.f32.mrb[0].mxu0
      %v3730 = vadd.f32 %v3678, %v3729
      %v3731 = vpop.f32.mrb[0].mxu0
      %v3732 = vpop.f32.mrb[0].mxu0
      %v3733 = vpop.f32.mrb[0].mxu0
      %3734 = vdwg.mxu0
      %v3735 = vmax.f32 %v3730, 0.0
      %v3736 = vpack.c.bf16 %v3735, %v3735
      %s3737 = scalar_lea.vmem %s15, 32
      %v3738 = vld [vmem:[%s3737] sm:$0xf]
      %v3739 = vld [vmem:[%s3737 + $0x4] sm:$0xf]
      %v3740 = vld [vmem:[%s3737 + $0x8] sm:$0xf]
      %v3741 = vld [vmem:[%s3737 + $0xc] sm:$0xf]
      %v3742 = vld [vmem:[%s3737 + $0x10] sm:$0xf]
      %v3743 = vld [vmem:[%s3737 + $0x14] sm:$0xf]
      %v3744 = vld [vmem:[%s3737 + $0x18] sm:$0xf]
      %v3745 = vld [vmem:[%s3737 + $0x1c] sm:$0xf]
      %s3746 = scalar_lea.vmem %s16, 1
      %v3747 = vld [vmem:[%s3746] sm:$0x1]
      %v3749 = vlaneseq
      %v3750 = vshrl.u32 %v3749, 7
      %v3751 = vsub.s32 0, %v3750
      %v3752 = vrot.slane %v3747, %v3751
      %v3762 = vunpack.c.l.b16 %v3738
      %v3763 = vunpack.c.l.b16 %v3739
      %v3764 = vunpack.c.l.b16 %v3740
      %v3765 = vunpack.c.l.b16 %v3741
      %v3766 = vunpack.c.l.b16 %v3742
      %v3767 = vunpack.c.l.b16 %v3743
      %v3768 = vunpack.c.l.b16 %v3744
      %v3769 = vunpack.c.l.b16 %v3745
      %v3770 = vpack.c.b16 %v3763, %v3762
      %v3771 = vpack.c.b16 %v3765, %v3764
      %v3772 = vpack.c.b16 %v3767, %v3766
      %v3773 = vpack.c.b16 %v3769, %v3768
      %v3779 = vsel %vm2267, %v3736, 0
      %3781 = vmatprep.subr.bf16.mxu0 0
      %3782 = vmatpush1.bf16.msra.mxu0 %v3770
      %3783 = vmatprep.subr.bf16.mxu0 0
      %3784 = vmatpush1.bf16.msra.mxu0 %v3771
      %3785 = vmatprep.subr.bf16.mxu0 0
      %3786 = vmatpush1.bf16.msra.mxu0 %v3772
      %3787 = vmatprep.subr.bf16.mxu0 0
      %3788 = vmatpush1.bf16.msra.mxu0 %v3773
      %3789 = vmatprep.subr.bf16.mxu0 0
      %3790 = vmatpush1.bf16.msra.mxu0 0
      %3791 = vmatprep.subr.bf16.mxu0 0
      %3792 = vmatpush1.bf16.msra.mxu0 0
      %3793 = vmatprep.subr.bf16.mxu0 0
      %3794 = vmatpush1.bf16.msra.mxu0 0
      %3795 = vmatprep.subr.bf16.mxu0 0
      %3796 = vmatpush1.bf16.msra.mxu0 0
      %3797 = vmatprep.subr.bf16.mxu0 0
      %3798 = vmatpush1.bf16.msra.mxu0 0
      %3799 = vmatprep.subr.bf16.mxu0 0
      %3800 = vmatpush1.bf16.msra.mxu0 0
      %3801 = vmatprep.subr.bf16.mxu0 0
      %3802 = vmatpush1.bf16.msra.mxu0 0
      %3803 = vmatprep.subr.bf16.mxu0 0
      %3804 = vmatpush1.bf16.msra.mxu0 0
      %3805 = vmatprep.subr.bf16.mxu0 0
      %3806 = vmatpush1.bf16.msra.mxu0 0
      %3807 = vmatprep.subr.bf16.mxu0 0
      %3808 = vmatpush1.bf16.msra.mxu0 0
      %3809 = vmatprep.subr.bf16.mxu0 0
      %3810 = vmatpush1.bf16.msra.mxu0 0
      %3811 = vmatprep.subr.bf16.mxu0 0
      %3812 = vmatpush1.bf16.msra.mxu0 0
      %3813 = vmatprep.mubr.bf16.mxu0 0
      %3814 = vmatmul.mubr.bf16.gmra.mrb[0].mxu0 %v3779
      %v3815 = vpop.f32.mrb[0].mxu0
      %v3816 = vadd.f32 %v3752, %v3815
      %v3817 = vpop.f32.mrb[0].mxu0
      %v3818 = vpop.f32.mrb[0].mxu0
      %v3819 = vpop.f32.mrb[0].mxu0
      %3820 = vdwg.mxu0
      %v3821 = vadd.f32 %v3665, %v3816
      %s3822 = scalar_lea.vmem %s19, 1
      %v3823 = vld [vmem:[%s3822] sm:$0x1]
      %s3824 = scalar_lea.vmem %s20, 1
      %v3825 = vld [vmem:[%s3824] sm:$0x1]
      %v3826 = vsel %vm863, %v3821, 0.0
      %3827 = vadd.xlane.f32.xlu0 %v3826
      %v3828 = vpop.xlane.xlu0 %3827
      %v3829 = vmul.f32 %v3828, %v2134
      %v3830 = vsub.f32 %v3821, %v3829
      %v3831 = vmul.f32 %v3830, %v3830
      %v3832 = vsel %vm863, %v3831, 0.0
      %3833 = vadd.xlane.f32.xlu0 %v3832
      %v3834 = vpop.xlane.xlu0 %3833
      %v3835 = vmul.f32 %v3834, %v2134
      %v3836 = vadd.f32 %v3835, 1e-05
      %v3837 = vrsqrt.pop %v3836
      %v3838 = vmul.f32 %v3830, %v3837
      %v3840 = vlaneseq
      %v3841 = vshrl.u32 %v3840, 7
      %v3842 = vsub.s32 0, %v3841
      %v3843 = vrot.slane %v3823, %v3842
      %v3845 = vmul.f32 %v3838, %v3843
      %v3847 = vlaneseq
      %v3848 = vshrl.u32 %v3847, 7
      %v3849 = vsub.s32 0, %v3848
      %v3850 = vrot.slane %v3825, %v3849
      %v3852 = vadd.f32 %v3845, %v3850
      %v3853 = vpack.c.bf16 %v3852, %v3852
      %v3854 = vld [vmem:[%s21] sm:$0xff]
      %v3855 = vld [vmem:[%s21 + $0x8] sm:$0xff]
      %v3856 = vld [vmem:[%s21 + $0x10] sm:$0xf]
      %v3857 = vld [vmem:[%s21 + $0x14] sm:$0xff]
      %v3858 = vld [vmem:[%s21 + $0x1c] sm:$0xff]
      %v3859 = vld [vmem:[%s21 + $0x24] sm:$0xf]
      %v3860 = vld [vmem:[%s21 + $0x28] sm:$0xff]
      %v3861 = vld [vmem:[%s21 + $0x30] sm:$0xff]
      %v3862 = vld [vmem:[%s21 + $0x38] sm:$0xf]
      %v3863 = vld [vmem:[%s21 + $0x3c] sm:$0xff]
      %v3864 = vld [vmem:[%s21 + $0x44] sm:$0xff]
      %v3865 = vld [vmem:[%s21 + $0x4c] sm:$0xf]
      %v3866 = vld [vmem:[%s22] sm:$0x1f]
      %v3868 = vlaneseq
      %v3869 = vshrl.u32 %v3868, 7
      %v3870 = vsub.s32 0, %v3869
      %v3871 = vrot.slane %v3866, %v3870
      %v3872 = vlaneseq
      %v3873 = vshrl.u32 %v3872, 7
      %v3874 = vsub.s32 1, %v3873
      %v3875 = vrot.slane %v3866, %v3874
      %v3876 = vlaneseq
      %v3877 = vshrl.u32 %v3876, 7
      %v3878 = vsub.s32 2, %v3877
      %v3879 = vrot.slane %v3866, %v3878
      %v3880 = vlaneseq
      %v3881 = vshrl.u32 %v3880, 7
      %v3882 = vsub.s32 3, %v3881
      %v3883 = vrot.slane %v3866, %v3882
      %v3884 = vlaneseq
      %v3885 = vshrl.u32 %v3884, 7
      %v3886 = vsub.s32 4, %v3885
      %v3887 = vrot.slane %v3866, %v3886
      %v3905 = vunpack.c.l.b16 %v3854
      %v3906 = vunpack.c.h.b16 %v3854
      %v3907 = vunpack.c.l.b16 %v3855
      %v3908 = vunpack.c.h.b16 %v3855
      %v3909 = vunpack.c.l.b16 %v3856
      %v3910 = vunpack.c.l.b16 %v3857
      %v3911 = vunpack.c.h.b16 %v3857
      %v3912 = vunpack.c.l.b16 %v3858
      %v3913 = vunpack.c.h.b16 %v3858
      %v3914 = vunpack.c.l.b16 %v3859
      %v3915 = vunpack.c.l.b16 %v3860
      %v3916 = vunpack.c.h.b16 %v3860
      %v3917 = vunpack.c.l.b16 %v3861
      %v3918 = vunpack.c.h.b16 %v3861
      %v3919 = vunpack.c.l.b16 %v3862
      %v3920 = vunpack.c.l.b16 %v3863
      %v3921 = vunpack.c.h.b16 %v3863
      %v3922 = vunpack.c.l.b16 %v3864
      %v3923 = vunpack.c.h.b16 %v3864
      %v3924 = vunpack.c.l.b16 %v3865
      %v3925 = vpack.c.b16 %v3910, %v3905
      %v3926 = vpack.c.b16 %v3911, %v3906
      %v3927 = vpack.c.b16 %v3912, %v3907
      %v3928 = vpack.c.b16 %v3913, %v3908
      %v3929 = vpack.c.b16 %v3914, %v3909
      %v3930 = vpack.c.b16 %v3920, %v3915
      %v3931 = vpack.c.b16 %v3921, %v3916
      %v3932 = vpack.c.b16 %v3922, %v3917
      %v3933 = vpack.c.b16 %v3923, %v3918
      %v3934 = vpack.c.b16 %v3924, %v3919
      %v3946 = vsel %vm863, %v3853, 0
      %3948 = vmatprep.subr.bf16.mxu0 %v3926
      %3949 = vmatpush1.bf16.msra.mxu0 %v3925
      %3950 = vmatprep.subr.bf16.mxu0 %v3931
      %3951 = vmatpush1.bf16.msra.mxu0 %v3930
      %3952 = vmatprep.subr.bf16.mxu0 0
      %3953 = vmatpush1.bf16.msra.mxu0 0
      %3954 = vmatprep.subr.bf16.mxu0 0
      %3955 = vmatpush1.bf16.msra.mxu0 0
      %3956 = vmatprep.subr.bf16.mxu0 0
      %3957 = vmatpush1.bf16.msra.mxu0 0
      %3958 = vmatprep.subr.bf16.mxu0 0
      %3959 = vmatpush1.bf16.msra.mxu0 0
      %3960 = vmatprep.subr.bf16.mxu0 0
      %3961 = vmatpush1.bf16.msra.mxu0 0
      %3962 = vmatprep.subr.bf16.mxu0 0
      %3963 = vmatpush1.bf16.msra.mxu0 0
      %3964 = vmatprep.subr.bf16.mxu0 0
      %3965 = vmatpush1.bf16.msra.mxu0 0
      %3966 = vmatprep.subr.bf16.mxu0 0
      %3967 = vmatpush1.bf16.msra.mxu0 0
      %3968 = vmatprep.subr.bf16.mxu0 0
      %3969 = vmatpush1.bf16.msra.mxu0 0
      %3970 = vmatprep.subr.bf16.mxu0 0
      %3971 = vmatpush1.bf16.msra.mxu0 0
      %3972 = vmatprep.subr.bf16.mxu0 0
      %3973 = vmatpush1.bf16.msra.mxu0 0
      %3974 = vmatprep.subr.bf16.mxu0 0
      %3975 = vmatpush1.bf16.msra.mxu0 0
      %3976 = vmatprep.subr.bf16.mxu0 0
      %3977 = vmatpush1.bf16.msra.mxu0 0
      %3978 = vmatprep.subr.bf16.mxu0 0
      %3979 = vmatpush1.bf16.msra.mxu0 0
      %3980 = vmatprep.mubr.bf16.mxu0 0
      %3981 = vmatmul.mubr.bf16.gmra.mrb[0].mxu0 %v3946
      %v3982 = vpop.f32.mrb[0].mxu0
      %v3983 = vadd.f32 %v3871, %v3982
      %v3984 = vpop.f32.mrb[0].mxu0
      %v3985 = vadd.f32 %v3875, %v3984
      %v3986 = vpop.f32.mrb[0].mxu0
      %v3987 = vpop.f32.mrb[0].mxu0
      %3988 = vdwg.mxu0
      %3989 = vmatprep.subr.bf16.mxu0 %v3928
      %3990 = vmatpush1.bf16.msra.mxu0 %v3927
      %3991 = vmatprep.subr.bf16.mxu0 %v3933
      %3992 = vmatpush1.bf16.msra.mxu0 %v3932
      %3993 = vmatprep.subr.bf16.mxu0 0
      %3994 = vmatpush1.bf16.msra.mxu0 0
      %3995 = vmatprep.subr.bf16.mxu0 0
      %3996 = vmatpush1.bf16.msra.mxu0 0
      %3997 = vmatprep.subr.bf16.mxu0 0
      %3998 = vmatpush1.bf16.msra.mxu0 0
      %3999 = vmatprep.subr.bf16.mxu0 0
      %4000 = vmatpush1.bf16.msra.mxu0 0
      %4001 = vmatprep.subr.bf16.mxu0 0
      %4002 = vmatpush1.bf16.msra.mxu0 0
      %4003 = vmatprep.subr.bf16.mxu0 0
      %4004 = vmatpush1.bf16.msra.mxu0 0
      %4005 = vmatprep.subr.bf16.mxu0 0
      %4006 = vmatpush1.bf16.msra.mxu0 0
      %4007 = vmatprep.subr.bf16.mxu0 0
      %4008 = vmatpush1.bf16.msra.mxu0 0
      %4009 = vmatprep.subr.bf16.mxu0 0
      %4010 = vmatpush1.bf16.msra.mxu0 0
      %4011 = vmatprep.subr.bf16.mxu0 0
      %4012 = vmatpush1.bf16.msra.mxu0 0
      %4013 = vmatprep.subr.bf16.mxu0 0
      %4014 = vmatpush1.bf16.msra.mxu0 0
      %4015 = vmatprep.subr.bf16.mxu0 0
      %4016 = vmatpush1.bf16.msra.mxu0 0
      %4017 = vmatprep.subr.bf16.mxu0 0
      %4018 = vmatpush1.bf16.msra.mxu0 0
      %4019 = vmatprep.subr.bf16.mxu0 0
      %4020 = vmatpush1.bf16.msra.mxu0 0
      %4021 = vmatprep.mubr.bf16.mxu0 0
      %4022 = vmatmul.mubr.bf16.gmra.mrb[0].mxu0 %v3946
      %v4023 = vpop.f32.mrb[0].mxu0
      %v4024 = vadd.f32 %v3879, %v4023
      %v4025 = vpop.f32.mrb[0].mxu0
      %v4026 = vadd.f32 %v3883, %v4025
      %v4027 = vpop.f32.mrb[0].mxu0
      %v4028 = vpop.f32.mrb[0].mxu0
      %4029 = vdwg.mxu0
      %4030 = vmatprep.subr.bf16.mxu0 0
      %4031 = vmatpush1.bf16.msra.mxu0 %v3929
      %4032 = vmatprep.subr.bf16.mxu0 0
      %4033 = vmatpush1.bf16.msra.mxu0 %v3934
      %4034 = vmatprep.subr.bf16.mxu0 0
      %4035 = vmatpush1.bf16.msra.mxu0 0
      %4036 = vmatprep.subr.bf16.mxu0 0
      %4037 = vmatpush1.bf16.msra.mxu0 0
      %4038 = vmatprep.subr.bf16.mxu0 0
      %4039 = vmatpush1.bf16.msra.mxu0 0
      %4040 = vmatprep.subr.bf16.mxu0 0
      %4041 = vmatpush1.bf16.msra.mxu0 0
      %4042 = vmatprep.subr.bf16.mxu0 0
      %4043 = vmatpush1.bf16.msra.mxu0 0
      %4044 = vmatprep.subr.bf16.mxu0 0
      %4045 = vmatpush1.bf16.msra.mxu0 0
      %4046 = vmatprep.subr.bf16.mxu0 0
      %4047 = vmatpush1.bf16.msra.mxu0 0
      %4048 = vmatprep.subr.bf16.mxu0 0
      %4049 = vmatpush1.bf16.msra.mxu0 0
      %4050 = vmatprep.subr.bf16.mxu0 0
      %4051 = vmatpush1.bf16.msra.mxu0 0
      %4052 = vmatprep.subr.bf16.mxu0 0
      %4053 = vmatpush1.bf16.msra.mxu0 0
      %4054 = vmatprep.subr.bf16.mxu0 0
      %4055 = vmatpush1.bf16.msra.mxu0 0
      %4056 = vmatprep.subr.bf16.mxu0 0
      %4057 = vmatpush1.bf16.msra.mxu0 0
      %4058 = vmatprep.subr.bf16.mxu0 0
      %4059 = vmatpush1.bf16.msra.mxu0 0
      %4060 = vmatprep.subr.bf16.mxu0 0
      %4061 = vmatpush1.bf16.msra.mxu0 0
      %4062 = vmatprep.mubr.bf16.mxu0 0
      %4063 = vmatmul.mubr.bf16.gmra.mrb[0].mxu0 %v3946
      %v4064 = vpop.f32.mrb[0].mxu0
      %v4065 = vadd.f32 %v3887, %v4064
      %v4066 = vpop.f32.mrb[0].mxu0
      %v4067 = vpop.f32.mrb[0].mxu0
      %v4068 = vpop.f32.mrb[0].mxu0
      %4069 = vdwg.mxu0
      %4070 = vst [vmem:[%s724] sm:$0xff] %v3983
      %4071 = vst [vmem:[%s724 + $0x8] sm:$0xff] %v3985
      %4072 = vst [vmem:[%s724 + $0x10] sm:$0xff] %v4024
      %4073 = vst [vmem:[%s724 + $0x18] sm:$0xff] %v4026
      %4074 = vst [vmem:[%s724 + $0x20] sm:$0xff] %v4065
      %p4075 = scmp.lt.s32.totalorder %s34, 1
      %s4076 = scalar_select %p4075, %s34, 1
      %s4077 = smul.addr %s4076, 5
      %s4078 = smul.addr %s4077, 8
      %s4079 = scalar_lea.vmem %s23, %s4078
      // Predicated region
      $region113: #{world_model_forward.1} parent=111 // pred_check
        %p4080 = pneg %p545
      $region114: #{world_model_forward.1} parent=111 // pred_check_branch
        %4082 = sbr.rel (%p4080) target = $region116
      $region115: #{world_model_forward.1} parent=111 // pred_region
        _
      $region116: #{world_model_forward.1} parent=111 // pred_fallthru
        _
    $region112: #{world_model_forward.1} parent=5 // pred_fallthru
      _
    %p4083 = scmp.le.s32.totalorder 2, %s29
    // Predicated region
    $region117: #{world_model_forward.1} parent=5 // pred_check
      %p4084 = pneg %p4083
    $region118: #{world_model_forward.1} parent=5 // pred_check_branch
      %4086 = sbr.rel (%p4084) target = $region120
    $region119: #{world_model_forward.1} parent=5 // pred_region
      %s4087 = ssub.s32 %s29, 2
      // Predicated region
      $region121: #{world_model_forward.1} parent=119 // pred_check
        %p4088 = pneg %p551
      $region122: #{world_model_forward.1} parent=119 // pred_check_branch
        %4090 = sbr.rel (%p4088) target = $region124
      $region123: #{world_model_forward.1} parent=119 // pred_region
        %p4091 = scmp.lt.s32.totalorder %s35, 1
        %s4092 = scalar_select %p4091, %s35, 1
        %s4093 = smul.addr %s4092, 5
        %s4094 = smul.addr %s4093, 8
        %s4095 = scalar_lea.vmem %s23, %s4094
      $region124: #{world_model_forward.1} parent=119 // pred_fallthru
        _
    $region120: #{world_model_forward.1} parent=5 // pred_fallthru
      _
  $region6: #{world_model_forward.1} parent=0 // loop_footer
    %s33 = sadd.s32 1, %s29
  $region7: #{world_model_forward.1} parent=0 // loop_footer_branch
    %28 = sbr.rel target = $region3
  $region8: #{world_model_forward.1} parent=0 // loop_exit
    _

</llo_original>
